<compile_context>
chip_gen: v7x
topology: tpu7x:2x2x1
jax: 0.10.0
libtpu: 0.0.40
codegen_flags: <defaults>
</compile_context>

<pallas_src>
import functools
import math

import jax
import jax.numpy as jnp
import numpy as np
from jax.experimental import pallas as pl
from jax.experimental.pallas import tpu as pltpu


# ----------------------------------------------------------------------------
# In-kernel helper: training-mode BatchNorm (biased batch stats, eps=1e-5)
# + ReLU, all in f32.  Input `acc` is (Cout, M); stats reduce over M (lanes).
# Uses independent sum / sum-of-squares reductions; var clamped at 0 to guard
# against f32 cancellation.
# ----------------------------------------------------------------------------
def _bn_relu_f32(acc, gamma, beta):
    m = acc.shape[1]
    inv_m = 1.0 / float(m)
    mean = jnp.sum(acc, axis=1, keepdims=True) * inv_m
    ex2 = jnp.sum(acc * acc, axis=1, keepdims=True) * inv_m
    var = jnp.maximum(ex2 - mean * mean, 0.0)
    inv_std = jax.lax.rsqrt(var + 1e-5)
    return jnp.maximum((acc - mean) * (gamma * inv_std) + beta, 0.0)


# ----------------------------------------------------------------------------
# Fused kernel factory: all scales of MSDNFirstLayer in one kernel.
#
# Inputs (per stage, 4 refs each):
#   stage 0 : patches0 (9*Cin, M0) bf16, W0 (C0, 9*Cin) bf16,
#             gamma0 (C0, 1) f32, beta0 (C0, 1) f32
#   stage i : idx_i (1, 9*M_out_i) int32 tap source indices (-1 = zero pad),
#             W_i (Cout_i, 9*Cprev) bf16 (tap-major, channel-minor columns),
#             gamma_i (Cout_i, 1) f32, beta_i (Cout_i, 1) f32
# Outputs : out_i (Cout_i, M_i) f32  (lane-dense transposed layout).
# Scratch : per internal stage, (9*Cprev, M_out_i) f32 restack buffer.
# ----------------------------------------------------------------------------
def _make_msdn_kernel(n_scales):
    n_in = 4 * n_scales
    n_out = n_scales

    def kernel(*refs):
        in_refs = refs[:n_in]
        out_refs = refs[n_in:n_in + n_out]
        stk_refs = refs[n_in + n_out:]

        # ---- stage 0: single K = 9*Cin GEMM on the MXU ----
        p0_ref, w0_ref, g0_ref, b0_ref = in_refs[:4]
        acc = jnp.dot(w0_ref[...], p0_ref[...],
                      preferred_element_type=jnp.float32)          # (C0, M0) f32
        act = _bn_relu_f32(acc, g0_ref[...], b0_ref[...])
        out_refs[0][...] = act.astype(out_refs[0].dtype)

        # ---- stages 1..n-1: stride-2 3x3 conv on the in-VMEM activation ----
        for i in range(1, n_scales):
            idx_ref, w_ref, g_ref, b_ref = in_refs[4 * i:4 * i + 4]
            stk_ref = stk_refs[i - 1]

            act_bf = act.astype(jnp.bfloat16)                      # (Cprev, M_prev)
            m_prev = act_bf.shape[1]
            _, k9 = w_ref.shape
            cprev = k9 // 9
            nine_m_out = idx_ref.shape[1]
            m_out = nine_m_out // 9

            # (1) one-hot gather matrix rebuilt in-kernel (VPU): no sel DMA.
            row_iota = jax.lax.broadcasted_iota(
                jnp.int32, (m_prev, nine_m_out), 0)
            s_cat = jnp.where(row_iota == idx_ref[...], 1.0, 0.0
                              ).astype(jnp.bfloat16)               # (M_prev, 9*M_out)

            # (2) all 9 taps gathered with ONE GEMM (exact 0/1 selection).
            gathered = jnp.dot(act_bf, s_cat,
                               preferred_element_type=jnp.float32)  # (Cprev, 9*M_out)

            # (3) restack taps along sublanes via VMEM scratch (cheap sub-tile
            #     stores; avoids unaligned in-kernel concat/transpose).
            for t in range(9):
                stk_ref[t * cprev:(t + 1) * cprev, :] = (
                    gathered[:, t * m_out:(t + 1) * m_out])

            # (4) single K = 9*Cprev conv GEMM, then fused BN + ReLU.
            acc = jnp.dot(w_ref[...], stk_ref[...].astype(jnp.bfloat16),
                          preferred_element_type=jnp.float32)       # (Cout, M_out)
            act = _bn_relu_f32(acc, g_ref[...], b_ref[...])
            out_refs[i][...] = act.astype(out_refs[i].dtype)

    return kernel


# ----------------------------------------------------------------------------
# Host-side: flat source index per (tap, output position) for a 3x3 / pad-1
# conv with the given stride.  -1 marks zero-padded taps (matches no row of
# the in-kernel iota, so the gather column is exactly zero).
# ----------------------------------------------------------------------------
@functools.lru_cache(maxsize=None)
def _build_tap_indices(n, h_in, w_in, stride):
    h_out = (h_in + 2 - 3) // stride + 1
    w_out = (w_in + 2 - 3) // stride + 1
    m_out = n * h_out * w_out
    idx = np.full((9, m_out), -1, np.int32)
    for kh in range(3):
        for kw in range(3):
            t = kh * 3 + kw
            for b in range(n):
                for oh in range(h_out):
                    hh = oh * stride + kh - 1
                    if hh < 0 or hh >= h_in:
                        continue
                    for ow in range(w_out):
                        ww = ow * stride + kw - 1
                        if ww < 0 or ww >= w_in:
                            continue
                        idx[t, b * h_out * w_out + oh * w_out + ow] = (
                            b * h_in * w_in + hh * w_in + ww)
    return idx.reshape(1, 9 * m_out)


# ----------------------------------------------------------------------------
# MSDNFirstLayer (cifar branch) forward: NCHW in, list of NCHW out.
# ----------------------------------------------------------------------------
def msdn_first_layer_forward(params, x_nchw):
    n, cin, h, w = x_nchw.shape
    n_scales = len(params)
    strides = [1] + [2] * (n_scales - 1)

    # spatial sizes: sp[i] = input spatial of stage i, sp[i+1] = its output
    sp = [(h, w)]
    for i in range(n_scales):
        hi, wi = sp[-1]
        s = strides[i]
        sp.append(((hi + 2 - 3) // s + 1, (wi + 2 - 3) // s + 1))

    # ---- stage-0 im2col (pure XLA layout glue on the external input) ----
    xb = x_nchw.astype(jnp.bfloat16)
    xp = jnp.pad(xb, ((0, 0), (0, 0), (1, 1), (1, 1)))
    ho0, wo0 = sp[1]
    s0 = strides[0]
    m0 = n * ho0 * wo0
    cols = []
    for kh in range(3):
        for kw in range(3):
            sl = xp[:, :,
                    kh:kh + (ho0 - 1) * s0 + 1:s0,
                    kw:kw + (wo0 - 1) * s0 + 1:s0]                 # (N, Cin, Ho, Wo)
            cols.append(jnp.transpose(sl, (1, 0, 2, 3)).reshape(cin, m0))
    patches0 = jnp.stack(cols, axis=0).reshape(9 * cin, m0)        # (9*Cin, M0)

    c0 = params[0]["weight"].shape[0]
    w0mat = jnp.transpose(params[0]["weight"], (0, 2, 3, 1)).reshape(
        c0, 9 * cin).astype(jnp.bfloat16)                          # (C0, 9*Cin)

    inputs = [
        patches0,
        w0mat,
        params[0]["gamma"].reshape(c0, 1).astype(jnp.float32),
        params[0]["beta"].reshape(c0, 1).astype(jnp.float32),
    ]
    out_shapes = [jax.ShapeDtypeStruct((c0, m0), jnp.float32)]
    scratch_shapes = []

    flops = 2 * c0 * (9 * cin) * m0
    c_prev, m_prev = c0, m0
    for i in range(1, n_scales):
        wi = params[i]["weight"]
        ci = wi.shape[0]
        hin, win = sp[i]
        ho, wo = sp[i + 1]
        m_out = n * ho * wo
        idx = _build_tap_indices(n, hin, win, strides[i])          # (1, 9*M_out)
        inputs += [
            jnp.asarray(idx, jnp.int32),
            jnp.transpose(wi, (0, 2, 3, 1)).reshape(ci, 9 * c_prev).astype(jnp.bfloat16),
            params[i]["gamma"].reshape(ci, 1).astype(jnp.float32),
            params[i]["beta"].reshape(ci, 1).astype(jnp.float32),
        ]
        out_shapes.append(jax.ShapeDtypeStruct((ci, m_out), jnp.float32))
        scratch_shapes.append(pltpu.VMEM((9 * c_prev, m_out), jnp.float32))
        flops += 2 * c_prev * m_prev * (9 * m_out)                 # gather GEMM
        flops += 2 * ci * (9 * c_prev) * m_out                     # conv GEMM
        c_prev, m_prev = ci, m_out

    bytes_accessed = (
        sum(int(np.prod(a.shape)) * jnp.dtype(a.dtype).itemsize for a in inputs)
        + sum(int(np.prod(s.shape)) * jnp.dtype(s.dtype).itemsize for s in out_shapes))

    outs_t = pl.pallas_call(
        _make_msdn_kernel(n_scales),
        out_shape=tuple(out_shapes),
        in_specs=[pl.BlockSpec(memory_space=pltpu.MemorySpace.VMEM)
                  for _ in inputs],
        out_specs=tuple(pl.BlockSpec(memory_space=pltpu.MemorySpace.VMEM)
                        for _ in range(n_scales)),
        scratch_shapes=tuple(scratch_shapes),
        compiler_params=pltpu.CompilerParams(vmem_limit_bytes=32 * 1024 * 1024),
        cost_estimate=pl.CostEstimate(flops=int(flops), transcendentals=0,
                                      bytes_accessed=int(bytes_accessed)),
    )(*inputs)

    # (Cout, N*Ho*Wo) -> NCHW outputs
    res = []
    for i in range(n_scales):
        ci = out_shapes[i].shape[0]
        ho, wo = sp[i + 1]
        res.append(jnp.transpose(outs_t[i].reshape(ci, n, ho, wo), (1, 0, 2, 3)))
    return res


# ----------------------------------------------------------------------------
# Parameter init (PyTorch-like shapes) and a pure-JAX reference for checking.
# ----------------------------------------------------------------------------
def init_msdn_first_layer_params(key, n_in, n_out, gr_factor, n_scales):
    params = []
    cin = n_in
    for i in range(n_scales):
        cout = n_out * gr_factor[i]
        key, kw, kg, kb = jax.random.split(key, 4)
        fan_in = cin * 3 * 3
        bound = 1.0 / math.sqrt(fan_in)
        weight = jax.random.uniform(kw, (cout, cin, 3, 3), jnp.float32, -bound, bound)
        gamma = jax.random.uniform(kg, (cout,), jnp.float32, 0.5, 1.5)
        beta = jax.random.uniform(kb, (cout,), jnp.float32, -0.5, 0.5)
        params.append({"weight": weight, "gamma": gamma, "beta": beta})
        cin = cout
    return params


def reference_forward(params, x_nchw):
    """Pure-JAX reference mirroring the kernel's bf16-operand / f32-accum math."""
    outs = []
    cur = x_nchw
    for i, p in enumerate(params):
        stride = 1 if i == 0 else 2
        xb = cur.astype(jnp.bfloat16).astype(jnp.float32)
        wb = p["weight"].astype(jnp.bfloat16).astype(jnp.float32)
        y = jax.lax.conv_general_dilated(
            xb, wb, (stride, stride), ((1, 1), (1, 1)),
            dimension_numbers=("NCHW", "OIHW", "NCHW"),
            precision=jax.lax.Precision.HIGHEST)
        mean = jnp.mean(y, axis=(0, 2, 3), keepdims=True)
        var = jnp.mean((y - mean) ** 2, axis=(0, 2, 3), keepdims=True)
        yn = (y - mean) * jax.lax.rsqrt(var + 1e-5)
        out = jnp.maximum(yn * p["gamma"].reshape(1, -1, 1, 1)
                          + p["beta"].reshape(1, -1, 1, 1), 0.0)
        outs.append(out)
        cur = out
    return outs


if __name__ == "__main__":
    # Synthetic "args": data='cifar10', nScales=3, grFactor=[1, 2, 4]
    N, NIN, H, W = 2, 4, 16, 16
    NOUT = 4
    GR_FACTOR = [1, 2, 4]
    NSCALES = 3

    key = jax.random.PRNGKey(0)
    key, kx = jax.random.split(key)
    x = jax.random.normal(kx, (N, NIN, H, W), jnp.float32)
    params = init_msdn_first_layer_params(key, NIN, NOUT, GR_FACTOR, NSCALES)

    fwd = jax.jit(msdn_first_layer_forward)       # bakes index rows as constants
    outs = fwd(params, x)
    outs = [jax.block_until_ready(o) for o in outs]
    refs = reference_forward(params, x)

    expected_shapes = [(2, 4, 16, 16), (2, 8, 8, 8), (2, 16, 4, 4)]
    for o, r, es in zip(outs, refs, expected_shapes):
        assert o.shape == es, (o.shape, es)
        assert bool(jnp.all(jnp.isfinite(o)))
        assert bool(jnp.all(o >= 0.0))  # ReLU
        max_err = float(jnp.max(jnp.abs(o - r)))
        assert max_err < 1e-2, max_err

    print("KERNEL_OK")
</pallas_src>

<mosaic_0001>
module attributes {stable_mosaic.version = 11 : i64} {
  func.func @kernel(%arg0: memref<36x512xbf16, #tpu.memory_space<vmem>>, %arg1: memref<4x36xbf16, #tpu.memory_space<vmem>>, %arg2: memref<4x1xf32, #tpu.memory_space<vmem>>, %arg3: memref<4x1xf32, #tpu.memory_space<vmem>>, %arg4: memref<1x1152xi32, #tpu.memory_space<vmem>>, %arg5: memref<8x36xbf16, #tpu.memory_space<vmem>>, %arg6: memref<8x1xf32, #tpu.memory_space<vmem>>, %arg7: memref<8x1xf32, #tpu.memory_space<vmem>>, %arg8: memref<1x288xi32, #tpu.memory_space<vmem>>, %arg9: memref<16x72xbf16, #tpu.memory_space<vmem>>, %arg10: memref<16x1xf32, #tpu.memory_space<vmem>>, %arg11: memref<16x1xf32, #tpu.memory_space<vmem>>, %arg12: memref<4x512xf32, #tpu.memory_space<vmem>>, %arg13: memref<8x128xf32, #tpu.memory_space<vmem>>, %arg14: memref<16x32xf32, #tpu.memory_space<vmem>>, %arg15: memref<36x128xf32, #tpu.memory_space<vmem>>, %arg16: memref<72x32xf32, #tpu.memory_space<vmem>>) attributes {dimension_semantics = [], scalar_prefetch = 0 : i64, scratch_operands = 2 : i64, tpu.core_type = #tpu.core_type<tc>} {
    %c0 = arith.constant 0 : index
    %c0_0 = arith.constant 0 : index
    %0 = vector.load %arg1[%c0, %c0_0] : memref<4x36xbf16, #tpu.memory_space<vmem>>, vector<4x36xbf16>
    %c0_1 = arith.constant 0 : index
    %c0_2 = arith.constant 0 : index
    %1 = vector.load %arg0[%c0_1, %c0_2] : memref<36x512xbf16, #tpu.memory_space<vmem>>, vector<36x512xbf16>
    %cst = arith.constant dense<0.000000e+00> : vector<4x512xf32>
    %2 = tpu.matmul %0, %1, %cst {dimension_numbers = #tpu.dot_dimension_numbers<[1], [0], [0], [1], [0, 0, 1, 1], [], []>} : vector<4x36xbf16>, vector<36x512xbf16>, vector<4x512xf32> -> vector<4x512xf32>
    %c0_3 = arith.constant 0 : index
    %c0_4 = arith.constant 0 : index
    %3 = vector.load %arg2[%c0_3, %c0_4] : memref<4x1xf32, #tpu.memory_space<vmem>>, vector<4x1xf32>
    %c0_5 = arith.constant 0 : index
    %c0_6 = arith.constant 0 : index
    %4 = vector.load %arg3[%c0_5, %c0_6] : memref<4x1xf32, #tpu.memory_space<vmem>>, vector<4x1xf32>
    %cst_7 = arith.constant dense<0.000000e+00> : vector<4xf32>
    %5 = vector.multi_reduction <add>, %2, %cst_7 [1] : vector<4x512xf32> to vector<4xf32>
    %6 = vector.shape_cast %5 : vector<4xf32> to vector<4x1xf32>
    %cst_8 = arith.constant 0.001953125 : f32
    %7 = vector.broadcast %cst_8 : f32 to vector<4x1xf32>
    %8 = arith.mulf %6, %7 : vector<4x1xf32>
    %9 = arith.mulf %2, %2 : vector<4x512xf32>
    %cst_9 = arith.constant dense<0.000000e+00> : vector<4xf32>
    %10 = vector.multi_reduction <add>, %9, %cst_9 [1] : vector<4x512xf32> to vector<4xf32>
    %11 = vector.shape_cast %10 : vector<4xf32> to vector<4x1xf32>
    %cst_10 = arith.constant 0.001953125 : f32
    %12 = vector.broadcast %cst_10 : f32 to vector<4x1xf32>
    %13 = arith.mulf %11, %12 : vector<4x1xf32>
    %14 = arith.mulf %8, %8 : vector<4x1xf32>
    %15 = arith.subf %13, %14 : vector<4x1xf32>
    %cst_11 = arith.constant 0.000000e+00 : f32
    %16 = vector.broadcast %cst_11 : f32 to vector<4x1xf32>
    %17 = arith.maximumf %15, %16 : vector<4x1xf32>
    %cst_12 = arith.constant 9.99999974E-6 : f32
    %18 = vector.broadcast %cst_12 : f32 to vector<4x1xf32>
    %19 = arith.addf %17, %18 : vector<4x1xf32>
    %20 = math.rsqrt %19 : vector<4x1xf32>
    %21 = vector.broadcast %8 : vector<4x1xf32> to vector<4x512xf32>
    %22 = arith.subf %2, %21 : vector<4x512xf32>
    %23 = arith.mulf %3, %20 : vector<4x1xf32>
    %24 = vector.broadcast %23 : vector<4x1xf32> to vector<4x512xf32>
    %25 = arith.mulf %22, %24 : vector<4x512xf32>
    %26 = vector.broadcast %4 : vector<4x1xf32> to vector<4x512xf32>
    %27 = arith.addf %25, %26 : vector<4x512xf32>
    %cst_13 = arith.constant 0.000000e+00 : f32
    %28 = vector.broadcast %cst_13 : f32 to vector<4x512xf32>
    %29 = arith.maximumf %27, %28 : vector<4x512xf32>
    %c0_14 = arith.constant 0 : index
    %c0_15 = arith.constant 0 : index
    %30 = vector.load %arg12[%c0_14, %c0_15] : memref<4x512xf32, #tpu.memory_space<vmem>>, vector<4x512xf32>
    tpu.vector_store %arg12[%c0_14, %c0_15], %29 {strides = array<i32>} : memref<4x512xf32, #tpu.memory_space<vmem>>, vector<4x512xf32>,
    %31 = arith.truncf %29 : vector<4x512xf32> to vector<4x512xbf16>
    %32 = tpu.iota {dimensions = array<i32: 0>} : vector<512x1152xi32>
    %c0_16 = arith.constant 0 : index
    %c0_17 = arith.constant 0 : index
    %33 = vector.load %arg4[%c0_16, %c0_17] : memref<1x1152xi32, #tpu.memory_space<vmem>>, vector<1x1152xi32>
    %34 = vector.broadcast %33 : vector<1x1152xi32> to vector<512x1152xi32>
    %35 = arith.cmpi eq, %32, %34 : vector<512x1152xi32>
    %cst_18 = arith.constant 1.000000e+00 : f32
    %cst_19 = arith.constant 0.000000e+00 : f32
    %36 = vector.broadcast %cst_18 : f32 to vector<512x1152xf32>
    %37 = vector.broadcast %cst_19 : f32 to vector<512x1152xf32>
    %38 = arith.select %35, %36, %37 : vector<512x1152xi1>, vector<512x1152xf32>
    %39 = arith.truncf %38 : vector<512x1152xf32> to vector<512x1152xbf16>
    %cst_20 = arith.constant dense<0.000000e+00> : vector<4x1152xf32>
    %40 = tpu.matmul %31, %39, %cst_20 {dimension_numbers = #tpu.dot_dimension_numbers<[1], [0], [0], [1], [0, 0, 1, 1], [], []>} : vector<4x512xbf16>, vector<512x1152xbf16>, vector<4x1152xf32> -> vector<4x1152xf32>
    %41 = vector.extract_strided_slice %40 {offsets = [0, 0], sizes = [4, 128], strides = [1, 1]} : vector<4x1152xf32> to vector<4x128xf32>
    %c0_21 = arith.constant 0 : index
    %c0_22 = arith.constant 0 : index
    %42 = vector.load %arg15[%c0_21, %c0_22] : memref<36x128xf32, #tpu.memory_space<vmem>>, vector<4x128xf32>
    tpu.vector_store %arg15[%c0_21, %c0_22], %41 {strides = array<i32>} : memref<36x128xf32, #tpu.memory_space<vmem>>, vector<4x128xf32>,
    %43 = vector.extract_strided_slice %40 {offsets = [0, 128], sizes = [4, 128], strides = [1, 1]} : vector<4x1152xf32> to vector<4x128xf32>
    %c4 = arith.constant 4 : index
    %c0_23 = arith.constant 0 : index
    %44 = vector.load %arg15[%c4, %c0_23] : memref<36x128xf32, #tpu.memory_space<vmem>>, vector<4x128xf32>
    tpu.vector_store %arg15[%c4, %c0_23], %43 {strides = array<i32>} : memref<36x128xf32, #tpu.memory_space<vmem>>, vector<4x128xf32>,
    %45 = vector.extract_strided_slice %40 {offsets = [0, 256], sizes = [4, 128], strides = [1, 1]} : vector<4x1152xf32> to vector<4x128xf32>
    %c8 = arith.constant 8 : index
    %c0_24 = arith.constant 0 : index
    %46 = vector.load %arg15[%c8, %c0_24] : memref<36x128xf32, #tpu.memory_space<vmem>>, vector<4x128xf32>
    tpu.vector_store %arg15[%c8, %c0_24], %45 {strides = array<i32>} : memref<36x128xf32, #tpu.memory_space<vmem>>, vector<4x128xf32>,
    %47 = vector.extract_strided_slice %40 {offsets = [0, 384], sizes = [4, 128], strides = [1, 1]} : vector<4x1152xf32> to vector<4x128xf32>
    %c12 = arith.constant 12 : index
    %c0_25 = arith.constant 0 : index
    %48 = vector.load %arg15[%c12, %c0_25] : memref<36x128xf32, #tpu.memory_space<vmem>>, vector<4x128xf32>
    tpu.vector_store %arg15[%c12, %c0_25], %47 {strides = array<i32>} : memref<36x128xf32, #tpu.memory_space<vmem>>, vector<4x128xf32>,
    %49 = vector.extract_strided_slice %40 {offsets = [0, 512], sizes = [4, 128], strides = [1, 1]} : vector<4x1152xf32> to vector<4x128xf32>
    %c16 = arith.constant 16 : index
    %c0_26 = arith.constant 0 : index
    %50 = vector.load %arg15[%c16, %c0_26] : memref<36x128xf32, #tpu.memory_space<vmem>>, vector<4x128xf32>
    tpu.vector_store %arg15[%c16, %c0_26], %49 {strides = array<i32>} : memref<36x128xf32, #tpu.memory_space<vmem>>, vector<4x128xf32>,
    %51 = vector.extract_strided_slice %40 {offsets = [0, 640], sizes = [4, 128], strides = [1, 1]} : vector<4x1152xf32> to vector<4x128xf32>
    %c20 = arith.constant 20 : index
    %c0_27 = arith.constant 0 : index
    %52 = vector.load %arg15[%c20, %c0_27] : memref<36x128xf32, #tpu.memory_space<vmem>>, vector<4x128xf32>
    tpu.vector_store %arg15[%c20, %c0_27], %51 {strides = array<i32>} : memref<36x128xf32, #tpu.memory_space<vmem>>, vector<4x128xf32>,
    %53 = vector.extract_strided_slice %40 {offsets = [0, 768], sizes = [4, 128], strides = [1, 1]} : vector<4x1152xf32> to vector<4x128xf32>
    %c24 = arith.constant 24 : index
    %c0_28 = arith.constant 0 : index
    %54 = vector.load %arg15[%c24, %c0_28] : memref<36x128xf32, #tpu.memory_space<vmem>>, vector<4x128xf32>
    tpu.vector_store %arg15[%c24, %c0_28], %53 {strides = array<i32>} : memref<36x128xf32, #tpu.memory_space<vmem>>, vector<4x128xf32>,
    %55 = vector.extract_strided_slice %40 {offsets = [0, 896], sizes = [4, 128], strides = [1, 1]} : vector<4x1152xf32> to vector<4x128xf32>
    %c28 = arith.constant 28 : index
    %c0_29 = arith.constant 0 : index
    %56 = vector.load %arg15[%c28, %c0_29] : memref<36x128xf32, #tpu.memory_space<vmem>>, vector<4x128xf32>
    tpu.vector_store %arg15[%c28, %c0_29], %55 {strides = array<i32>} : memref<36x128xf32, #tpu.memory_space<vmem>>, vector<4x128xf32>,
    %57 = vector.extract_strided_slice %40 {offsets = [0, 1024], sizes = [4, 128], strides = [1, 1]} : vector<4x1152xf32> to vector<4x128xf32>
    %c32 = arith.constant 32 : index
    %c0_30 = arith.constant 0 : index
    %58 = vector.load %arg15[%c32, %c0_30] : memref<36x128xf32, #tpu.memory_space<vmem>>, vector<4x128xf32>
    tpu.vector_store %arg15[%c32, %c0_30], %57 {strides = array<i32>} : memref<36x128xf32, #tpu.memory_space<vmem>>, vector<4x128xf32>,
    %c0_31 = arith.constant 0 : index
    %c0_32 = arith.constant 0 : index
    %59 = vector.load %arg5[%c0_31, %c0_32] : memref<8x36xbf16, #tpu.memory_space<vmem>>, vector<8x36xbf16>
    %c0_33 = arith.constant 0 : index
    %c0_34 = arith.constant 0 : index
    %60 = vector.load %arg15[%c0_33, %c0_34] : memref<36x128xf32, #tpu.memory_space<vmem>>, vector<36x128xf32>
    %61 = arith.truncf %60 : vector<36x128xf32> to vector<36x128xbf16>
    %cst_35 = arith.constant dense<0.000000e+00> : vector<8x128xf32>
    %62 = tpu.matmul %59, %61, %cst_35 {dimension_numbers = #tpu.dot_dimension_numbers<[1], [0], [0], [1], [0, 0, 1, 1], [], []>} : vector<8x36xbf16>, vector<36x128xbf16>, vector<8x128xf32> -> vector<8x128xf32>
    %c0_36 = arith.constant 0 : index
    %c0_37 = arith.constant 0 : index
    %63 = vector.load %arg6[%c0_36, %c0_37] : memref<8x1xf32, #tpu.memory_space<vmem>>, vector<8x1xf32>
    %c0_38 = arith.constant 0 : index
    %c0_39 = arith.constant 0 : index
    %64 = vector.load %arg7[%c0_38, %c0_39] : memref<8x1xf32, #tpu.memory_space<vmem>>, vector<8x1xf32>
    %cst_40 = arith.constant dense<0.000000e+00> : vector<8xf32>
    %65 = vector.multi_reduction <add>, %62, %cst_40 [1] : vector<8x128xf32> to vector<8xf32>
    %66 = vector.shape_cast %65 : vector<8xf32> to vector<8x1xf32>
    %cst_41 = arith.constant 7.812500e-03 : f32
    %67 = vector.broadcast %cst_41 : f32 to vector<8x1xf32>
    %68 = arith.mulf %66, %67 : vector<8x1xf32>
    %69 = arith.mulf %62, %62 : vector<8x128xf32>
    %cst_42 = arith.constant dense<0.000000e+00> : vector<8xf32>
    %70 = vector.multi_reduction <add>, %69, %cst_42 [1] : vector<8x128xf32> to vector<8xf32>
    %71 = vector.shape_cast %70 : vector<8xf32> to vector<8x1xf32>
    %cst_43 = arith.constant 7.812500e-03 : f32
    %72 = vector.broadcast %cst_43 : f32 to vector<8x1xf32>
    %73 = arith.mulf %71, %72 : vector<8x1xf32>
    %74 = arith.mulf %68, %68 : vector<8x1xf32>
    %75 = arith.subf %73, %74 : vector<8x1xf32>
    %cst_44 = arith.constant 0.000000e+00 : f32
    %76 = vector.broadcast %cst_44 : f32 to vector<8x1xf32>
    %77 = arith.maximumf %75, %76 : vector<8x1xf32>
    %cst_45 = arith.constant 9.99999974E-6 : f32
    %78 = vector.broadcast %cst_45 : f32 to vector<8x1xf32>
    %79 = arith.addf %77, %78 : vector<8x1xf32>
    %80 = math.rsqrt %79 : vector<8x1xf32>
    %81 = vector.broadcast %68 : vector<8x1xf32> to vector<8x128xf32>
    %82 = arith.subf %62, %81 : vector<8x128xf32>
    %83 = arith.mulf %63, %80 : vector<8x1xf32>
    %84 = vector.broadcast %83 : vector<8x1xf32> to vector<8x128xf32>
    %85 = arith.mulf %82, %84 : vector<8x128xf32>
    %86 = vector.broadcast %64 : vector<8x1xf32> to vector<8x128xf32>
    %87 = arith.addf %85, %86 : vector<8x128xf32>
    %cst_46 = arith.constant 0.000000e+00 : f32
    %88 = vector.broadcast %cst_46 : f32 to vector<8x128xf32>
    %89 = arith.maximumf %87, %88 : vector<8x128xf32>
    %c0_47 = arith.constant 0 : index
    %c0_48 = arith.constant 0 : index
    %90 = vector.load %arg13[%c0_47, %c0_48] : memref<8x128xf32, #tpu.memory_space<vmem>>, vector<8x128xf32>
    tpu.vector_store %arg13[%c0_47, %c0_48], %89 {strides = array<i32>} : memref<8x128xf32, #tpu.memory_space<vmem>>, vector<8x128xf32>,
    %91 = arith.truncf %89 : vector<8x128xf32> to vector<8x128xbf16>
    %92 = tpu.iota {dimensions = array<i32: 0>} : vector<128x288xi32>
    %c0_49 = arith.constant 0 : index
    %c0_50 = arith.constant 0 : index
    %93 = vector.load %arg8[%c0_49, %c0_50] : memref<1x288xi32, #tpu.memory_space<vmem>>, vector<1x288xi32>
    %94 = vector.broadcast %93 : vector<1x288xi32> to vector<128x288xi32>
    %95 = arith.cmpi eq, %92, %94 : vector<128x288xi32>
    %cst_51 = arith.constant 1.000000e+00 : f32
    %cst_52 = arith.constant 0.000000e+00 : f32
    %96 = vector.broadcast %cst_51 : f32 to vector<128x288xf32>
    %97 = vector.broadcast %cst_52 : f32 to vector<128x288xf32>
    %98 = arith.select %95, %96, %97 : vector<128x288xi1>, vector<128x288xf32>
    %99 = arith.truncf %98 : vector<128x288xf32> to vector<128x288xbf16>
    %cst_53 = arith.constant dense<0.000000e+00> : vector<8x288xf32>
    %100 = tpu.matmul %91, %99, %cst_53 {dimension_numbers = #tpu.dot_dimension_numbers<[1], [0], [0], [1], [0, 0, 1, 1], [], []>} : vector<8x128xbf16>, vector<128x288xbf16>, vector<8x288xf32> -> vector<8x288xf32>
    %101 = vector.extract_strided_slice %100 {offsets = [0, 0], sizes = [8, 32], strides = [1, 1]} : vector<8x288xf32> to vector<8x32xf32>
    %c0_54 = arith.constant 0 : index
    %c0_55 = arith.constant 0 : index
    %102 = vector.load %arg16[%c0_54, %c0_55] : memref<72x32xf32, #tpu.memory_space<vmem>>, vector<8x32xf32>
    tpu.vector_store %arg16[%c0_54, %c0_55], %101 {strides = array<i32>} : memref<72x32xf32, #tpu.memory_space<vmem>>, vector<8x32xf32>,
    %103 = vector.extract_strided_slice %100 {offsets = [0, 32], sizes = [8, 32], strides = [1, 1]} : vector<8x288xf32> to vector<8x32xf32>
    %c8_56 = arith.constant 8 : index
    %c0_57 = arith.constant 0 : index
    %104 = vector.load %arg16[%c8_56, %c0_57] : memref<72x32xf32, #tpu.memory_space<vmem>>, vector<8x32xf32>
    tpu.vector_store %arg16[%c8_56, %c0_57], %103 {strides = array<i32>} : memref<72x32xf32, #tpu.memory_space<vmem>>, vector<8x32xf32>,
    %105 = vector.extract_strided_slice %100 {offsets = [0, 64], sizes = [8, 32], strides = [1, 1]} : vector<8x288xf32> to vector<8x32xf32>
    %c16_58 = arith.constant 16 : index
    %c0_59 = arith.constant 0 : index
    %106 = vector.load %arg16[%c16_58, %c0_59] : memref<72x32xf32, #tpu.memory_space<vmem>>, vector<8x32xf32>
    tpu.vector_store %arg16[%c16_58, %c0_59], %105 {strides = array<i32>} : memref<72x32xf32, #tpu.memory_space<vmem>>, vector<8x32xf32>,
    %107 = vector.extract_strided_slice %100 {offsets = [0, 96], sizes = [8, 32], strides = [1, 1]} : vector<8x288xf32> to vector<8x32xf32>
    %c24_60 = arith.constant 24 : index
    %c0_61 = arith.constant 0 : index
    %108 = vector.load %arg16[%c24_60, %c0_61] : memref<72x32xf32, #tpu.memory_space<vmem>>, vector<8x32xf32>
    tpu.vector_store %arg16[%c24_60, %c0_61], %107 {strides = array<i32>} : memref<72x32xf32, #tpu.memory_space<vmem>>, vector<8x32xf32>,
    %109 = vector.extract_strided_slice %100 {offsets = [0, 128], sizes = [8, 32], strides = [1, 1]} : vector<8x288xf32> to vector<8x32xf32>
    %c32_62 = arith.constant 32 : index
    %c0_63 = arith.constant 0 : index
    %110 = vector.load %arg16[%c32_62, %c0_63] : memref<72x32xf32, #tpu.memory_space<vmem>>, vector<8x32xf32>
    tpu.vector_store %arg16[%c32_62, %c0_63], %109 {strides = array<i32>} : memref<72x32xf32, #tpu.memory_space<vmem>>, vector<8x32xf32>,
    %111 = vector.extract_strided_slice %100 {offsets = [0, 160], sizes = [8, 32], strides = [1, 1]} : vector<8x288xf32> to vector<8x32xf32>
    %c40 = arith.constant 40 : index
    %c0_64 = arith.constant 0 : index
    %112 = vector.load %arg16[%c40, %c0_64] : memref<72x32xf32, #tpu.memory_space<vmem>>, vector<8x32xf32>
    tpu.vector_store %arg16[%c40, %c0_64], %111 {strides = array<i32>} : memref<72x32xf32, #tpu.memory_space<vmem>>, vector<8x32xf32>,
    %113 = vector.extract_strided_slice %100 {offsets = [0, 192], sizes = [8, 32], strides = [1, 1]} : vector<8x288xf32> to vector<8x32xf32>
    %c48 = arith.constant 48 : index
    %c0_65 = arith.constant 0 : index
    %114 = vector.load %arg16[%c48, %c0_65] : memref<72x32xf32, #tpu.memory_space<vmem>>, vector<8x32xf32>
    tpu.vector_store %arg16[%c48, %c0_65], %113 {strides = array<i32>} : memref<72x32xf32, #tpu.memory_space<vmem>>, vector<8x32xf32>,
    %115 = vector.extract_strided_slice %100 {offsets = [0, 224], sizes = [8, 32], strides = [1, 1]} : vector<8x288xf32> to vector<8x32xf32>
    %c56 = arith.constant 56 : index
    %c0_66 = arith.constant 0 : index
    %116 = vector.load %arg16[%c56, %c0_66] : memref<72x32xf32, #tpu.memory_space<vmem>>, vector<8x32xf32>
    tpu.vector_store %arg16[%c56, %c0_66], %115 {strides = array<i32>} : memref<72x32xf32, #tpu.memory_space<vmem>>, vector<8x32xf32>,
    %117 = vector.extract_strided_slice %100 {offsets = [0, 256], sizes = [8, 32], strides = [1, 1]} : vector<8x288xf32> to vector<8x32xf32>
    %c64 = arith.constant 64 : index
    %c0_67 = arith.constant 0 : index
    %118 = vector.load %arg16[%c64, %c0_67] : memref<72x32xf32, #tpu.memory_space<vmem>>, vector<8x32xf32>
    tpu.vector_store %arg16[%c64, %c0_67], %117 {strides = array<i32>} : memref<72x32xf32, #tpu.memory_space<vmem>>, vector<8x32xf32>,
    %c0_68 = arith.constant 0 : index
    %c0_69 = arith.constant 0 : index
    %119 = vector.load %arg9[%c0_68, %c0_69] : memref<16x72xbf16, #tpu.memory_space<vmem>>, vector<16x72xbf16>
    %c0_70 = arith.constant 0 : index
    %c0_71 = arith.constant 0 : index
    %120 = vector.load %arg16[%c0_70, %c0_71] : memref<72x32xf32, #tpu.memory_space<vmem>>, vector<72x32xf32>
    %121 = arith.truncf %120 : vector<72x32xf32> to vector<72x32xbf16>
    %cst_72 = arith.constant dense<0.000000e+00> : vector<16x32xf32>
    %122 = tpu.matmul %119, %121, %cst_72 {dimension_numbers = #tpu.dot_dimension_numbers<[1], [0], [0], [1], [0, 0, 1, 1], [], []>} : vector<16x72xbf16>, vector<72x32xbf16>, vector<16x32xf32> -> vector<16x32xf32>
    %c0_73 = arith.constant 0 : index
    %c0_74 = arith.constant 0 : index
    %123 = vector.load %arg10[%c0_73, %c0_74] : memref<16x1xf32, #tpu.memory_space<vmem>>, vector<16x1xf32>
    %c0_75 = arith.constant 0 : index
    %c0_76 = arith.constant 0 : index
    %124 = vector.load %arg11[%c0_75, %c0_76] : memref<16x1xf32, #tpu.memory_space<vmem>>, vector<16x1xf32>
    %cst_77 = arith.constant dense<0.000000e+00> : vector<16xf32>
    %125 = vector.multi_reduction <add>, %122, %cst_77 [1] : vector<16x32xf32> to vector<16xf32>
    %126 = vector.shape_cast %125 : vector<16xf32> to vector<16x1xf32>
    %cst_78 = arith.constant 3.125000e-02 : f32
    %127 = vector.broadcast %cst_78 : f32 to vector<16x1xf32>
    %128 = arith.mulf %126, %127 : vector<16x1xf32>
    %129 = arith.mulf %122, %122 : vector<16x32xf32>
    %cst_79 = arith.constant dense<0.000000e+00> : vector<16xf32>
    %130 = vector.multi_reduction <add>, %129, %cst_79 [1] : vector<16x32xf32> to vector<16xf32>
    %131 = vector.shape_cast %130 : vector<16xf32> to vector<16x1xf32>
    %cst_80 = arith.constant 3.125000e-02 : f32
    %132 = vector.broadcast %cst_80 : f32 to vector<16x1xf32>
    %133 = arith.mulf %131, %132 : vector<16x1xf32>
    %134 = arith.mulf %128, %128 : vector<16x1xf32>
    %135 = arith.subf %133, %134 : vector<16x1xf32>
    %cst_81 = arith.constant 0.000000e+00 : f32
    %136 = vector.broadcast %cst_81 : f32 to vector<16x1xf32>
    %137 = arith.maximumf %135, %136 : vector<16x1xf32>
    %cst_82 = arith.constant 9.99999974E-6 : f32
    %138 = vector.broadcast %cst_82 : f32 to vector<16x1xf32>
    %139 = arith.addf %137, %138 : vector<16x1xf32>
    %140 = math.rsqrt %139 : vector<16x1xf32>
    %141 = vector.broadcast %128 : vector<16x1xf32> to vector<16x32xf32>
    %142 = arith.subf %122, %141 : vector<16x32xf32>
    %143 = arith.mulf %123, %140 : vector<16x1xf32>
    %144 = vector.broadcast %143 : vector<16x1xf32> to vector<16x32xf32>
    %145 = arith.mulf %142, %144 : vector<16x32xf32>
    %146 = vector.broadcast %124 : vector<16x1xf32> to vector<16x32xf32>
    %147 = arith.addf %145, %146 : vector<16x32xf32>
    %cst_83 = arith.constant 0.000000e+00 : f32
    %148 = vector.broadcast %cst_83 : f32 to vector<16x32xf32>
    %149 = arith.maximumf %147, %148 : vector<16x32xf32>
    %c0_84 = arith.constant 0 : index
    %c0_85 = arith.constant 0 : index
    %150 = vector.load %arg14[%c0_84, %c0_85] : memref<16x32xf32, #tpu.memory_space<vmem>>, vector<16x32xf32>
    tpu.vector_store %arg14[%c0_84, %c0_85], %149 {strides = array<i32>} : memref<16x32xf32, #tpu.memory_space<vmem>>, vector<16x32xf32>,
    return
  }
}

</mosaic_0001>

<llo_original>
// kernel: msdn_first_layer_forward.1
$region0: #{msdn_first_layer_forward.1}
  #allocation0 [shape = 'u32[]', space=smem, size = 0x4, offset = 0x4, fixed_abs, tag = 'smem constant byte address 0x4 - core index']
  #allocation1 [shape = 'u32[144,128]{1,0:T(1,128)}', space=vmem, size = 0x12000, scoped, tag = 'internal scratch']
  #allocation2 [shape = 'f32[36,128]{1,0:T(8,128)}', space=vmem, size = 0x5000, scoped, tag = 'scratch operand']
  #allocation3 [shape = 'f32[72,32]{1,0:T(8,128)}', space=vmem, size = 0x9000, scoped, tag = 'scratch operand']
  %s0 = inlined_call_operand.vmem [shape: bf16[36,512], index: 0, kind: input, shape index: {}]
  %s1 = inlined_call_operand.vmem [shape: bf16[4,36], index: 1, kind: input, shape index: {}]
  %s2 = inlined_call_operand.vmem [shape: f32[4,1], index: 2, kind: input, shape index: {}]
  %s3 = inlined_call_operand.vmem [shape: f32[4,1], index: 3, kind: input, shape index: {}]
  %s4 = inlined_call_operand.vmem [shape: s32[1,1152], index: 4, kind: input, shape index: {}]
  %s5 = inlined_call_operand.vmem [shape: bf16[8,36], index: 5, kind: input, shape index: {}]
  %s6 = inlined_call_operand.vmem [shape: f32[8,1], index: 6, kind: input, shape index: {}]
  %s7 = inlined_call_operand.vmem [shape: f32[8,1], index: 7, kind: input, shape index: {}]
  %s8 = inlined_call_operand.vmem [shape: s32[1,288], index: 8, kind: input, shape index: {}]
  %s9 = inlined_call_operand.vmem [shape: bf16[16,72], index: 9, kind: input, shape index: {}]
  %s10 = inlined_call_operand.vmem [shape: f32[16,1], index: 10, kind: input, shape index: {}]
  %s11 = inlined_call_operand.vmem [shape: f32[16,1], index: 11, kind: input, shape index: {}]
  %s12 = inlined_call_operand.vmem [shape: f32[4,512], index: 12, kind: output, shape index: {0}]
  %s13 = inlined_call_operand.vmem [shape: f32[8,128], index: 13, kind: output, shape index: {1}]
  %s14 = inlined_call_operand.vmem [shape: f32[16,32], index: 14, kind: output, shape index: {2}]
  %15 = xla_tuple %s12, %s13, %s14
  %s16 = sld [smem:[#allocation0]]
  $region74: #{msdn_first_layer_forward.1} parent=0
    _
  %s18 = ssub.s32 1, %s16
  %s19 = scalar_select 0, %s18, %s16
  // Predicated region
  $region2: #{msdn_first_layer_forward.1} parent=0 // pred_check
    _
  $region3: #{msdn_first_layer_forward.1} parent=0 // pred_check_branch
    %21 = sbr.rel (0) target = $region5
  $region4: #{msdn_first_layer_forward.1} parent=0 // pred_region
    _
  $region5: #{msdn_first_layer_forward.1} parent=0 // pred_fallthru
    _
  // Predicated region
  $region6: #{msdn_first_layer_forward.1} parent=0 // pred_check
    _
  $region7: #{msdn_first_layer_forward.1} parent=0 // pred_check_branch
    %23 = sbr.rel (0) target = $region9
  $region8: #{msdn_first_layer_forward.1} parent=0 // pred_region
    _
  $region9: #{msdn_first_layer_forward.1} parent=0 // pred_fallthru
    _
  // Predicated region
  $region10: #{msdn_first_layer_forward.1} parent=0 // pred_check
    _
  $region11: #{msdn_first_layer_forward.1} parent=0 // pred_check_branch
    %25 = sbr.rel (0) target = $region13
  $region12: #{msdn_first_layer_forward.1} parent=0 // pred_region
    _
  $region13: #{msdn_first_layer_forward.1} parent=0 // pred_fallthru
    _
  // Predicated region
  $region14: #{msdn_first_layer_forward.1} parent=0 // pred_check
    _
  $region15: #{msdn_first_layer_forward.1} parent=0 // pred_check_branch
    %27 = sbr.rel (0) target = $region17
  $region16: #{msdn_first_layer_forward.1} parent=0 // pred_region
    _
  $region17: #{msdn_first_layer_forward.1} parent=0 // pred_fallthru
    _
  // Predicated region
  $region18: #{msdn_first_layer_forward.1} parent=0 // pred_check
    _
  $region19: #{msdn_first_layer_forward.1} parent=0 // pred_check_branch
    %29 = sbr.rel (0) target = $region21
  $region20: #{msdn_first_layer_forward.1} parent=0 // pred_region
    _
  $region21: #{msdn_first_layer_forward.1} parent=0 // pred_fallthru
    _
  // Predicated region
  $region22: #{msdn_first_layer_forward.1} parent=0 // pred_check
    _
  $region23: #{msdn_first_layer_forward.1} parent=0 // pred_check_branch
    %31 = sbr.rel (0) target = $region25
  $region24: #{msdn_first_layer_forward.1} parent=0 // pred_region
    _
  $region25: #{msdn_first_layer_forward.1} parent=0 // pred_fallthru
    _
  // Predicated region
  $region26: #{msdn_first_layer_forward.1} parent=0 // pred_check
    _
  $region27: #{msdn_first_layer_forward.1} parent=0 // pred_check_branch
    %33 = sbr.rel (0) target = $region29
  $region28: #{msdn_first_layer_forward.1} parent=0 // pred_region
    _
  $region29: #{msdn_first_layer_forward.1} parent=0 // pred_fallthru
    _
  // Predicated region
  $region30: #{msdn_first_layer_forward.1} parent=0 // pred_check
    _
  $region31: #{msdn_first_layer_forward.1} parent=0 // pred_check_branch
    %35 = sbr.rel (0) target = $region33
  $region32: #{msdn_first_layer_forward.1} parent=0 // pred_region
    _
  $region33: #{msdn_first_layer_forward.1} parent=0 // pred_fallthru
    _
  // Predicated region
  $region34: #{msdn_first_layer_forward.1} parent=0 // pred_check
    _
  $region35: #{msdn_first_layer_forward.1} parent=0 // pred_check_branch
    %37 = sbr.rel (0) target = $region37
  $region36: #{msdn_first_layer_forward.1} parent=0 // pred_region
    _
  $region37: #{msdn_first_layer_forward.1} parent=0 // pred_fallthru
    _
  // Predicated region
  $region38: #{msdn_first_layer_forward.1} parent=0 // pred_check
    _
  $region39: #{msdn_first_layer_forward.1} parent=0 // pred_check_branch
    %39 = sbr.rel (0) target = $region41
  $region40: #{msdn_first_layer_forward.1} parent=0 // pred_region
    _
  $region41: #{msdn_first_layer_forward.1} parent=0 // pred_fallthru
    _
  // Predicated region
  $region42: #{msdn_first_layer_forward.1} parent=0 // pred_check
    _
  $region43: #{msdn_first_layer_forward.1} parent=0 // pred_check_branch
    %41 = sbr.rel (0) target = $region45
  $region44: #{msdn_first_layer_forward.1} parent=0 // pred_region
    _
  $region45: #{msdn_first_layer_forward.1} parent=0 // pred_fallthru
    _
  // Predicated region
  $region46: #{msdn_first_layer_forward.1} parent=0 // pred_check
    _
  $region47: #{msdn_first_layer_forward.1} parent=0 // pred_check_branch
    %43 = sbr.rel (0) target = $region49
  $region48: #{msdn_first_layer_forward.1} parent=0 // pred_region
    _
  $region49: #{msdn_first_layer_forward.1} parent=0 // pred_fallthru
    _
  %v45 = vld [vmem:[%s1] sm:$0x3]
  %v46 = vld [vmem:[%s0] sm:$0xff]
  %v47 = vld [vmem:[%s0 + $0x8] sm:$0xff]
  %v48 = vld [vmem:[%s0 + $0x10] sm:$0xff]
  %v49 = vld [vmem:[%s0 + $0x18] sm:$0xff]
  %v50 = vld [vmem:[%s0 + $0x20] sm:$0xff]
  %v51 = vld [vmem:[%s0 + $0x28] sm:$0xff]
  %v52 = vld [vmem:[%s0 + $0x30] sm:$0xff]
  %v53 = vld [vmem:[%s0 + $0x38] sm:$0xff]
  %v54 = vld [vmem:[%s0 + $0x40] sm:$0x33]
  %v55 = vld [vmem:[%s0 + $0x48] sm:$0x33]
  %v66 = vunpack.c.l.b16 %v46
  %v67 = vunpack.c.h.b16 %v46
  %v68 = vunpack.c.l.b16 %v47
  %v69 = vunpack.c.h.b16 %v47
  %v70 = vunpack.c.l.b16 %v48
  %v71 = vunpack.c.h.b16 %v48
  %v72 = vunpack.c.l.b16 %v49
  %v73 = vunpack.c.h.b16 %v49
  %v74 = vunpack.c.l.b16 %v50
  %v75 = vunpack.c.h.b16 %v50
  %v76 = vunpack.c.l.b16 %v51
  %v77 = vunpack.c.h.b16 %v51
  %v78 = vunpack.c.l.b16 %v52
  %v79 = vunpack.c.h.b16 %v52
  %v80 = vunpack.c.l.b16 %v53
  %v81 = vunpack.c.h.b16 %v53
  %v82 = vunpack.c.l.b16 %v54
  %v83 = vunpack.c.h.b16 %v54
  %v84 = vunpack.c.l.b16 %v55
  %v85 = vunpack.c.h.b16 %v55
  %v86 = vpack.c.b16 %v70, %v66
  %v87 = vpack.c.b16 %v71, %v67
  %v88 = vpack.c.b16 %v72, %v68
  %v89 = vpack.c.b16 %v73, %v69
  %v90 = vpack.c.b16 %v78, %v74
  %v91 = vpack.c.b16 %v79, %v75
  %v92 = vpack.c.b16 %v80, %v76
  %v93 = vpack.c.b16 %v81, %v77
  %v94 = vpack.c.b16 %v82, %v82
  %v95 = vpack.c.b16 %v83, %v83
  %v96 = vpack.c.b16 %v84, %v84
  %v97 = vpack.c.b16 %v85, %v85
  %vm106 = vcmask 293888
  %v108 = vsel %vm106, %v45, 0
  %vm110 = vcmask 1041408
  %v112 = vsel %vm110, %v94, 0
  %v115 = vsel %vm110, %v95, 0
  %v118 = vsel %vm110, %v96, 0
  %v121 = vsel %vm110, %v97, 0
  %123 = vmatprep.subr.bf16.mxu0 %v87
  %124 = vmatpush1.bf16.msra.mxu0 %v86
  %125 = vmatprep.subr.bf16.mxu0 %v91
  %126 = vmatpush1.bf16.msra.mxu0 %v90
  %127 = vmatprep.subr.bf16.mxu0 %v115
  %128 = vmatpush1.bf16.msra.mxu0 %v112
  %129 = vmatprep.subr.bf16.mxu0 0
  %130 = vmatpush1.bf16.msra.mxu0 0
  %131 = vmatprep.subr.bf16.mxu0 0
  %132 = vmatpush1.bf16.msra.mxu0 0
  %133 = vmatprep.subr.bf16.mxu0 0
  %134 = vmatpush1.bf16.msra.mxu0 0
  %135 = vmatprep.subr.bf16.mxu0 0
  %136 = vmatpush1.bf16.msra.mxu0 0
  %137 = vmatprep.subr.bf16.mxu0 0
  %138 = vmatpush1.bf16.msra.mxu0 0
  %139 = vmatprep.subr.bf16.mxu0 0
  %140 = vmatpush1.bf16.msra.mxu0 0
  %141 = vmatprep.subr.bf16.mxu0 0
  %142 = vmatpush1.bf16.msra.mxu0 0
  %143 = vmatprep.subr.bf16.mxu0 0
  %144 = vmatpush1.bf16.msra.mxu0 0
  %145 = vmatprep.subr.bf16.mxu0 0
  %146 = vmatpush1.bf16.msra.mxu0 0
  %147 = vmatprep.subr.bf16.mxu0 0
  %148 = vmatpush1.bf16.msra.mxu0 0
  %149 = vmatprep.subr.bf16.mxu0 0
  %150 = vmatpush1.bf16.msra.mxu0 0
  %151 = vmatprep.subr.bf16.mxu0 0
  %152 = vmatpush1.bf16.msra.mxu0 0
  %153 = vmatprep.subr.bf16.mxu0 0
  %154 = vmatpush1.bf16.msra.mxu0 0
  %155 = vmatprep.mubr.bf16.mxu0 0
  %156 = vmatmul.mubr.bf16.gmra.mrb[0].mxu0 %v108
  %v157 = vpop.f32.mrb[0].mxu0
  %v158 = vadd.f32 0.0, %v157
  %v159 = vpop.f32.mrb[0].mxu0
  %v160 = vadd.f32 0.0, %v159
  %v161 = vpop.f32.mrb[0].mxu0
  %v162 = vpop.f32.mrb[0].mxu0
  %163 = vdwg.mxu0
  %164 = vmatprep.subr.bf16.mxu0 %v89
  %165 = vmatpush1.bf16.msra.mxu0 %v88
  %166 = vmatprep.subr.bf16.mxu0 %v93
  %167 = vmatpush1.bf16.msra.mxu0 %v92
  %168 = vmatprep.subr.bf16.mxu0 %v121
  %169 = vmatpush1.bf16.msra.mxu0 %v118
  %170 = vmatprep.subr.bf16.mxu0 0
  %171 = vmatpush1.bf16.msra.mxu0 0
  %172 = vmatprep.subr.bf16.mxu0 0
  %173 = vmatpush1.bf16.msra.mxu0 0
  %174 = vmatprep.subr.bf16.mxu0 0
  %175 = vmatpush1.bf16.msra.mxu0 0
  %176 = vmatprep.subr.bf16.mxu0 0
  %177 = vmatpush1.bf16.msra.mxu0 0
  %178 = vmatprep.subr.bf16.mxu0 0
  %179 = vmatpush1.bf16.msra.mxu0 0
  %180 = vmatprep.subr.bf16.mxu0 0
  %181 = vmatpush1.bf16.msra.mxu0 0
  %182 = vmatprep.subr.bf16.mxu0 0
  %183 = vmatpush1.bf16.msra.mxu0 0
  %184 = vmatprep.subr.bf16.mxu0 0
  %185 = vmatpush1.bf16.msra.mxu0 0
  %186 = vmatprep.subr.bf16.mxu0 0
  %187 = vmatpush1.bf16.msra.mxu0 0
  %188 = vmatprep.subr.bf16.mxu0 0
  %189 = vmatpush1.bf16.msra.mxu0 0
  %190 = vmatprep.subr.bf16.mxu0 0
  %191 = vmatpush1.bf16.msra.mxu0 0
  %192 = vmatprep.subr.bf16.mxu0 0
  %193 = vmatpush1.bf16.msra.mxu0 0
  %194 = vmatprep.subr.bf16.mxu0 0
  %195 = vmatpush1.bf16.msra.mxu0 0
  %196 = vmatprep.mubr.bf16.mxu0 0
  %197 = vmatmul.mubr.bf16.gmra.mrb[0].mxu0 %v108
  %v198 = vpop.f32.mrb[0].mxu0
  %v199 = vadd.f32 0.0, %v198
  %v200 = vpop.f32.mrb[0].mxu0
  %v201 = vadd.f32 0.0, %v200
  %v202 = vpop.f32.mrb[0].mxu0
  %v203 = vpop.f32.mrb[0].mxu0
  %204 = vdwg.mxu0
  %v205 = vld [vmem:[%s2] sm:$0xf]
  %v206 = vld [vmem:[%s3] sm:$0xf]
  %vm207 = vcmask 1043456
  %v208 = vsel %vm207, %v158, 0.0
  %v209 = vsel %vm207, %v160, 0.0
  %v210 = vadd.f32 %v208, %v209
  %v211 = vsel %vm207, %v199, 0.0
  %v212 = vadd.f32 %v210, %v211
  %v213 = vsel %vm207, %v201, 0.0
  %v214 = vadd.f32 %v212, %v213
  %215 = vadd.xlane.f32.xlu0 %v214
  %v216 = vpop.xlane.xlu0 %215
  %v217 = vmul.f32 %v216, 0.001953125
  %v218 = vmul.f32 %v158, %v158
  %v219 = vmul.f32 %v160, %v160
  %v220 = vmul.f32 %v199, %v199
  %v221 = vmul.f32 %v201, %v201
  %v222 = vsel %vm207, %v218, 0.0
  %v223 = vsel %vm207, %v219, 0.0
  %v224 = vadd.f32 %v222, %v223
  %v225 = vsel %vm207, %v220, 0.0
  %v226 = vadd.f32 %v224, %v225
  %v227 = vsel %vm207, %v221, 0.0
  %v228 = vadd.f32 %v226, %v227
  %229 = vadd.xlane.f32.xlu0 %v228
  %v230 = vpop.xlane.xlu0 %229
  %v231 = vmul.f32 %v230, 0.001953125
  %v232 = vmul.f32 %v217, %v217
  %v233 = vsub.f32 %v231, %v232
  %v234 = vmax.f32 %v233, 0.0
  %v235 = vadd.f32 %v234, 1e-05
  %v236 = vrsqrt.pop %v235
  %v237 = vsub.f32 %v158, %v217
  %v238 = vsub.f32 %v160, %v217
  %v239 = vsub.f32 %v199, %v217
  %v240 = vsub.f32 %v201, %v217
  %v241 = vmul.f32 %v205, %v236
  %243 = vset.pattern.permute.xlu0 0
  %244 = vperm.xlu0 %243, %v241
  %v245 = vpop.permute.xlu0 %244
  %v247 = vmul.f32 %v237, %v245
  %v248 = vmul.f32 %v238, %v245
  %v249 = vmul.f32 %v239, %v245
  %v250 = vmul.f32 %v240, %v245
  %252 = vset.pattern.permute.xlu0 0
  %253 = vperm.xlu0 %252, %v206
  %v254 = vpop.permute.xlu0 %253
  %v256 = vadd.f32 %v247, %v254
  %v257 = vadd.f32 %v248, %v254
  %v258 = vadd.f32 %v249, %v254
  %v259 = vadd.f32 %v250, %v254
  %v260 = vmax.f32 %v256, 0.0
  %v261 = vmax.f32 %v257, 0.0
  %v262 = vmax.f32 %v258, 0.0
  %v263 = vmax.f32 %v259, 0.0
  %v268 = vcombine.low %v260, %v261
  %v269 = vcombine.low %v262, %v263
  %272 = vst [vmem:[%s12] sm:$0xff] %v268
  %273 = vst [vmem:[%s12 + $0x8] sm:$0xff] %v269
  %v274 = vpack.c.bf16 %v260, %v260
  %v275 = vpack.c.bf16 %v261, %v261
  %v276 = vpack.c.bf16 %v262, %v262
  %v277 = vpack.c.bf16 %v263, %v263
  %v278 = vlaneseq
  %v279 = vshrl.u32 %v278, 7
  %v280 = vadd.s32 %v279, 8
  %v281 = vadd.s32 %v279, 16
  %v282 = vadd.s32 %v279, 24
  %v283 = vadd.s32 %v279, 32
  %v284 = vadd.s32 %v279, 40
  %v285 = vadd.s32 %v279, 48
  %v286 = vadd.s32 %v279, 56
  %v287 = vadd.s32 %v279, 64
  %v288 = vadd.s32 %v279, 72
  %v289 = vadd.s32 %v279, 80
  %v290 = vadd.s32 %v279, 88
  %v291 = vadd.s32 %v279, 96
  %v292 = vadd.s32 %v279, 104
  %v293 = vadd.s32 %v279, 112
  %v294 = vadd.s32 %v279, 120
  %v295 = vadd.s32 %v279, 128
  %v296 = vadd.s32 %v279, 136
  %v297 = vadd.s32 %v279, 144
  %v298 = vadd.s32 %v279, 152
  %v299 = vadd.s32 %v279, 160
  %v300 = vadd.s32 %v279, 168
  %v301 = vadd.s32 %v279, 176
  %v302 = vadd.s32 %v279, 184
  %v303 = vadd.s32 %v279, 192
  %v304 = vadd.s32 %v279, 200
  %v305 = vadd.s32 %v279, 208
  %v306 = vadd.s32 %v279, 216
  %v307 = vadd.s32 %v279, 224
  %v308 = vadd.s32 %v279, 232
  %v309 = vadd.s32 %v279, 240
  %v310 = vadd.s32 %v279, 248
  %v311 = vadd.s32 %v279, 256
  %v312 = vadd.s32 %v279, 264
  %v313 = vadd.s32 %v279, 272
  %v314 = vadd.s32 %v279, 280
  %v315 = vadd.s32 %v279, 288
  %v316 = vadd.s32 %v279, 296
  %v317 = vadd.s32 %v279, 304
  %v318 = vadd.s32 %v279, 312
  %v319 = vadd.s32 %v279, 320
  %v320 = vadd.s32 %v279, 328
  %v321 = vadd.s32 %v279, 336
  %v322 = vadd.s32 %v279, 344
  %v323 = vadd.s32 %v279, 352
  %v324 = vadd.s32 %v279, 360
  %v325 = vadd.s32 %v279, 368
  %v326 = vadd.s32 %v279, 376
  %v327 = vadd.s32 %v279, 384
  %v328 = vadd.s32 %v279, 392
  %v329 = vadd.s32 %v279, 400
  %v330 = vadd.s32 %v279, 408
  %v331 = vadd.s32 %v279, 416
  %v332 = vadd.s32 %v279, 424
  %v333 = vadd.s32 %v279, 432
  %v334 = vadd.s32 %v279, 440
  %v335 = vadd.s32 %v279, 448
  %v336 = vadd.s32 %v279, 456
  %v337 = vadd.s32 %v279, 464
  %v338 = vadd.s32 %v279, 472
  %v339 = vadd.s32 %v279, 480
  %v340 = vadd.s32 %v279, 488
  %v341 = vadd.s32 %v279, 496
  %v342 = vadd.s32 %v279, 504
  %v343 = vld [vmem:[%s4] sm:$0xff]
  %v344 = vld [vmem:[%s4 + $0x8] sm:$0x1]
  %v345 = vlaneseq
  %v346 = vshrl.u32 %v345, 7
  %v347 = vsub.s32 0, %v346
  %v348 = vrot.slane %v343, %v347
  %v349 = vlaneseq
  %v350 = vshrl.u32 %v349, 7
  %v351 = vsub.s32 1, %v350
  %v352 = vrot.slane %v343, %v351
  %v353 = vlaneseq
  %v354 = vshrl.u32 %v353, 7
  %v355 = vsub.s32 2, %v354
  %v356 = vrot.slane %v343, %v355
  %v357 = vlaneseq
  %v358 = vshrl.u32 %v357, 7
  %v359 = vsub.s32 3, %v358
  %v360 = vrot.slane %v343, %v359
  %v361 = vlaneseq
  %v362 = vshrl.u32 %v361, 7
  %v363 = vsub.s32 4, %v362
  %v364 = vrot.slane %v343, %v363
  %v365 = vlaneseq
  %v366 = vshrl.u32 %v365, 7
  %v367 = vsub.s32 5, %v366
  %v368 = vrot.slane %v343, %v367
  %v369 = vlaneseq
  %v370 = vshrl.u32 %v369, 7
  %v371 = vsub.s32 6, %v370
  %v372 = vrot.slane %v343, %v371
  %v373 = vlaneseq
  %v374 = vshrl.u32 %v373, 7
  %v375 = vsub.s32 7, %v374
  %v376 = vrot.slane %v343, %v375
  %v377 = vlaneseq
  %v378 = vshrl.u32 %v377, 7
  %v379 = vsub.s32 0, %v378
  %v380 = vrot.slane %v344, %v379
  %vm381 = vcmp.eq.s32.totalorder %v279, %v348
  %vm382 = vcmp.eq.s32.totalorder %v279, %v352
  %vm383 = vcmp.eq.s32.totalorder %v279, %v356
  %vm384 = vcmp.eq.s32.totalorder %v279, %v360
  %vm385 = vcmp.eq.s32.totalorder %v279, %v364
  %vm386 = vcmp.eq.s32.totalorder %v279, %v368
  %vm387 = vcmp.eq.s32.totalorder %v279, %v372
  %vm388 = vcmp.eq.s32.totalorder %v279, %v376
  %vm389 = vcmp.eq.s32.totalorder %v279, %v380
  %vm390 = vcmp.eq.s32.totalorder %v280, %v348
  %vm391 = vcmp.eq.s32.totalorder %v280, %v352
  %vm392 = vcmp.eq.s32.totalorder %v280, %v356
  %vm393 = vcmp.eq.s32.totalorder %v280, %v360
  %vm394 = vcmp.eq.s32.totalorder %v280, %v364
  %vm395 = vcmp.eq.s32.totalorder %v280, %v368
  %vm396 = vcmp.eq.s32.totalorder %v280, %v372
  %vm397 = vcmp.eq.s32.totalorder %v280, %v376
  %vm398 = vcmp.eq.s32.totalorder %v280, %v380
  %vm399 = vcmp.eq.s32.totalorder %v281, %v348
  %vm400 = vcmp.eq.s32.totalorder %v281, %v352
  %vm401 = vcmp.eq.s32.totalorder %v281, %v356
  %vm402 = vcmp.eq.s32.totalorder %v281, %v360
  %vm403 = vcmp.eq.s32.totalorder %v281, %v364
  %vm404 = vcmp.eq.s32.totalorder %v281, %v368
  %vm405 = vcmp.eq.s32.totalorder %v281, %v372
  %vm406 = vcmp.eq.s32.totalorder %v281, %v376
  %vm407 = vcmp.eq.s32.totalorder %v281, %v380
  %vm408 = vcmp.eq.s32.totalorder %v282, %v348
  %vm409 = vcmp.eq.s32.totalorder %v282, %v352
  %vm410 = vcmp.eq.s32.totalorder %v282, %v356
  %vm411 = vcmp.eq.s32.totalorder %v282, %v360
  %vm412 = vcmp.eq.s32.totalorder %v282, %v364
  %vm413 = vcmp.eq.s32.totalorder %v282, %v368
  %vm414 = vcmp.eq.s32.totalorder %v282, %v372
  %vm415 = vcmp.eq.s32.totalorder %v282, %v376
  %vm416 = vcmp.eq.s32.totalorder %v282, %v380
  %vm417 = vcmp.eq.s32.totalorder %v283, %v348
  %vm418 = vcmp.eq.s32.totalorder %v283, %v352
  %vm419 = vcmp.eq.s32.totalorder %v283, %v356
  %vm420 = vcmp.eq.s32.totalorder %v283, %v360
  %vm421 = vcmp.eq.s32.totalorder %v283, %v364
  %vm422 = vcmp.eq.s32.totalorder %v283, %v368
  %vm423 = vcmp.eq.s32.totalorder %v283, %v372
  %vm424 = vcmp.eq.s32.totalorder %v283, %v376
  %vm425 = vcmp.eq.s32.totalorder %v283, %v380
  %vm426 = vcmp.eq.s32.totalorder %v284, %v348
  %vm427 = vcmp.eq.s32.totalorder %v284, %v352
  %vm428 = vcmp.eq.s32.totalorder %v284, %v356
  %vm429 = vcmp.eq.s32.totalorder %v284, %v360
  %vm430 = vcmp.eq.s32.totalorder %v284, %v364
  %vm431 = vcmp.eq.s32.totalorder %v284, %v368
  %vm432 = vcmp.eq.s32.totalorder %v284, %v372
  %vm433 = vcmp.eq.s32.totalorder %v284, %v376
  %vm434 = vcmp.eq.s32.totalorder %v284, %v380
  %vm435 = vcmp.eq.s32.totalorder %v285, %v348
  %vm436 = vcmp.eq.s32.totalorder %v285, %v352
  %vm437 = vcmp.eq.s32.totalorder %v285, %v356
  %vm438 = vcmp.eq.s32.totalorder %v285, %v360
  %vm439 = vcmp.eq.s32.totalorder %v285, %v364
  %vm440 = vcmp.eq.s32.totalorder %v285, %v368
  %vm441 = vcmp.eq.s32.totalorder %v285, %v372
  %vm442 = vcmp.eq.s32.totalorder %v285, %v376
  %vm443 = vcmp.eq.s32.totalorder %v285, %v380
  %vm444 = vcmp.eq.s32.totalorder %v286, %v348
  %vm445 = vcmp.eq.s32.totalorder %v286, %v352
  %vm446 = vcmp.eq.s32.totalorder %v286, %v356
  %vm447 = vcmp.eq.s32.totalorder %v286, %v360
  %vm448 = vcmp.eq.s32.totalorder %v286, %v364
  %vm449 = vcmp.eq.s32.totalorder %v286, %v368
  %vm450 = vcmp.eq.s32.totalorder %v286, %v372
  %vm451 = vcmp.eq.s32.totalorder %v286, %v376
  %vm452 = vcmp.eq.s32.totalorder %v286, %v380
  %vm453 = vcmp.eq.s32.totalorder %v287, %v348
  %vm454 = vcmp.eq.s32.totalorder %v287, %v352
  %vm455 = vcmp.eq.s32.totalorder %v287, %v356
  %vm456 = vcmp.eq.s32.totalorder %v287, %v360
  %vm457 = vcmp.eq.s32.totalorder %v287, %v364
  %vm458 = vcmp.eq.s32.totalorder %v287, %v368
  %vm459 = vcmp.eq.s32.totalorder %v287, %v372
  %vm460 = vcmp.eq.s32.totalorder %v287, %v376
  %vm461 = vcmp.eq.s32.totalorder %v287, %v380
  %vm462 = vcmp.eq.s32.totalorder %v288, %v348
  %vm463 = vcmp.eq.s32.totalorder %v288, %v352
  %vm464 = vcmp.eq.s32.totalorder %v288, %v356
  %vm465 = vcmp.eq.s32.totalorder %v288, %v360
  %vm466 = vcmp.eq.s32.totalorder %v288, %v364
  %vm467 = vcmp.eq.s32.totalorder %v288, %v368
  %vm468 = vcmp.eq.s32.totalorder %v288, %v372
  %vm469 = vcmp.eq.s32.totalorder %v288, %v376
  %vm470 = vcmp.eq.s32.totalorder %v288, %v380
  %vm471 = vcmp.eq.s32.totalorder %v289, %v348
  %vm472 = vcmp.eq.s32.totalorder %v289, %v352
  %vm473 = vcmp.eq.s32.totalorder %v289, %v356
  %vm474 = vcmp.eq.s32.totalorder %v289, %v360
  %vm475 = vcmp.eq.s32.totalorder %v289, %v364
  %vm476 = vcmp.eq.s32.totalorder %v289, %v368
  %vm477 = vcmp.eq.s32.totalorder %v289, %v372
  %vm478 = vcmp.eq.s32.totalorder %v289, %v376
  %vm479 = vcmp.eq.s32.totalorder %v289, %v380
  %vm480 = vcmp.eq.s32.totalorder %v290, %v348
  %vm481 = vcmp.eq.s32.totalorder %v290, %v352
  %vm482 = vcmp.eq.s32.totalorder %v290, %v356
  %vm483 = vcmp.eq.s32.totalorder %v290, %v360
  %vm484 = vcmp.eq.s32.totalorder %v290, %v364
  %vm485 = vcmp.eq.s32.totalorder %v290, %v368
  %vm486 = vcmp.eq.s32.totalorder %v290, %v372
  %vm487 = vcmp.eq.s32.totalorder %v290, %v376
  %vm488 = vcmp.eq.s32.totalorder %v290, %v380
  %vm489 = vcmp.eq.s32.totalorder %v291, %v348
  %vm490 = vcmp.eq.s32.totalorder %v291, %v352
  %vm491 = vcmp.eq.s32.totalorder %v291, %v356
  %vm492 = vcmp.eq.s32.totalorder %v291, %v360
  %vm493 = vcmp.eq.s32.totalorder %v291, %v364
  %vm494 = vcmp.eq.s32.totalorder %v291, %v368
  %vm495 = vcmp.eq.s32.totalorder %v291, %v372
  %vm496 = vcmp.eq.s32.totalorder %v291, %v376
  %vm497 = vcmp.eq.s32.totalorder %v291, %v380
  %vm498 = vcmp.eq.s32.totalorder %v292, %v348
  %vm499 = vcmp.eq.s32.totalorder %v292, %v352
  %vm500 = vcmp.eq.s32.totalorder %v292, %v356
  %vm501 = vcmp.eq.s32.totalorder %v292, %v360
  %vm502 = vcmp.eq.s32.totalorder %v292, %v364
  %vm503 = vcmp.eq.s32.totalorder %v292, %v368
  %vm504 = vcmp.eq.s32.totalorder %v292, %v372
  %vm505 = vcmp.eq.s32.totalorder %v292, %v376
  %vm506 = vcmp.eq.s32.totalorder %v292, %v380
  %vm507 = vcmp.eq.s32.totalorder %v293, %v348
  %vm508 = vcmp.eq.s32.totalorder %v293, %v352
  %vm509 = vcmp.eq.s32.totalorder %v293, %v356
  %vm510 = vcmp.eq.s32.totalorder %v293, %v360
  %vm511 = vcmp.eq.s32.totalorder %v293, %v364
  %vm512 = vcmp.eq.s32.totalorder %v293, %v368
  %vm513 = vcmp.eq.s32.totalorder %v293, %v372
  %vm514 = vcmp.eq.s32.totalorder %v293, %v376
  %vm515 = vcmp.eq.s32.totalorder %v293, %v380
  %vm516 = vcmp.eq.s32.totalorder %v294, %v348
  %vm517 = vcmp.eq.s32.totalorder %v294, %v352
  %vm518 = vcmp.eq.s32.totalorder %v294, %v356
  %vm519 = vcmp.eq.s32.totalorder %v294, %v360
  %vm520 = vcmp.eq.s32.totalorder %v294, %v364
  %vm521 = vcmp.eq.s32.totalorder %v294, %v368
  %vm522 = vcmp.eq.s32.totalorder %v294, %v372
  %vm523 = vcmp.eq.s32.totalorder %v294, %v376
  %vm524 = vcmp.eq.s32.totalorder %v294, %v380
  %vm525 = vcmp.eq.s32.totalorder %v295, %v348
  %vm526 = vcmp.eq.s32.totalorder %v295, %v352
  %vm527 = vcmp.eq.s32.totalorder %v295, %v356
  %vm528 = vcmp.eq.s32.totalorder %v295, %v360
  %vm529 = vcmp.eq.s32.totalorder %v295, %v364
  %vm530 = vcmp.eq.s32.totalorder %v295, %v368
  %vm531 = vcmp.eq.s32.totalorder %v295, %v372
  %vm532 = vcmp.eq.s32.totalorder %v295, %v376
  %vm533 = vcmp.eq.s32.totalorder %v295, %v380
  %vm534 = vcmp.eq.s32.totalorder %v296, %v348
  %vm535 = vcmp.eq.s32.totalorder %v296, %v352
  %vm536 = vcmp.eq.s32.totalorder %v296, %v356
  %vm537 = vcmp.eq.s32.totalorder %v296, %v360
  %vm538 = vcmp.eq.s32.totalorder %v296, %v364
  %vm539 = vcmp.eq.s32.totalorder %v296, %v368
  %vm540 = vcmp.eq.s32.totalorder %v296, %v372
  %vm541 = vcmp.eq.s32.totalorder %v296, %v376
  %vm542 = vcmp.eq.s32.totalorder %v296, %v380
  %vm543 = vcmp.eq.s32.totalorder %v297, %v348
  %vm544 = vcmp.eq.s32.totalorder %v297, %v352
  %vm545 = vcmp.eq.s32.totalorder %v297, %v356
  %vm546 = vcmp.eq.s32.totalorder %v297, %v360
  %vm547 = vcmp.eq.s32.totalorder %v297, %v364
  %vm548 = vcmp.eq.s32.totalorder %v297, %v368
  %vm549 = vcmp.eq.s32.totalorder %v297, %v372
  %vm550 = vcmp.eq.s32.totalorder %v297, %v376
  %vm551 = vcmp.eq.s32.totalorder %v297, %v380
  %vm552 = vcmp.eq.s32.totalorder %v298, %v348
  %vm553 = vcmp.eq.s32.totalorder %v298, %v352
  %vm554 = vcmp.eq.s32.totalorder %v298, %v356
  %vm555 = vcmp.eq.s32.totalorder %v298, %v360
  %vm556 = vcmp.eq.s32.totalorder %v298, %v364
  %vm557 = vcmp.eq.s32.totalorder %v298, %v368
  %vm558 = vcmp.eq.s32.totalorder %v298, %v372
  %vm559 = vcmp.eq.s32.totalorder %v298, %v376
  %vm560 = vcmp.eq.s32.totalorder %v298, %v380
  %vm561 = vcmp.eq.s32.totalorder %v299, %v348
  %vm562 = vcmp.eq.s32.totalorder %v299, %v352
  %vm563 = vcmp.eq.s32.totalorder %v299, %v356
  %vm564 = vcmp.eq.s32.totalorder %v299, %v360
  %vm565 = vcmp.eq.s32.totalorder %v299, %v364
  %vm566 = vcmp.eq.s32.totalorder %v299, %v368
  %vm567 = vcmp.eq.s32.totalorder %v299, %v372
  %vm568 = vcmp.eq.s32.totalorder %v299, %v376
  %vm569 = vcmp.eq.s32.totalorder %v299, %v380
  %vm570 = vcmp.eq.s32.totalorder %v300, %v348
  %vm571 = vcmp.eq.s32.totalorder %v300, %v352
  %vm572 = vcmp.eq.s32.totalorder %v300, %v356
  %vm573 = vcmp.eq.s32.totalorder %v300, %v360
  %vm574 = vcmp.eq.s32.totalorder %v300, %v364
  %vm575 = vcmp.eq.s32.totalorder %v300, %v368
  %vm576 = vcmp.eq.s32.totalorder %v300, %v372
  %vm577 = vcmp.eq.s32.totalorder %v300, %v376
  %vm578 = vcmp.eq.s32.totalorder %v300, %v380
  %vm579 = vcmp.eq.s32.totalorder %v301, %v348
  %vm580 = vcmp.eq.s32.totalorder %v301, %v352
  %vm581 = vcmp.eq.s32.totalorder %v301, %v356
  %vm582 = vcmp.eq.s32.totalorder %v301, %v360
  %vm583 = vcmp.eq.s32.totalorder %v301, %v364
  %vm584 = vcmp.eq.s32.totalorder %v301, %v368
  %vm585 = vcmp.eq.s32.totalorder %v301, %v372
  %vm586 = vcmp.eq.s32.totalorder %v301, %v376
  %vm587 = vcmp.eq.s32.totalorder %v301, %v380
  %vm588 = vcmp.eq.s32.totalorder %v302, %v348
  %vm589 = vcmp.eq.s32.totalorder %v302, %v352
  %vm590 = vcmp.eq.s32.totalorder %v302, %v356
  %vm591 = vcmp.eq.s32.totalorder %v302, %v360
  %vm592 = vcmp.eq.s32.totalorder %v302, %v364
  %vm593 = vcmp.eq.s32.totalorder %v302, %v368
  %vm594 = vcmp.eq.s32.totalorder %v302, %v372
  %vm595 = vcmp.eq.s32.totalorder %v302, %v376
  %vm596 = vcmp.eq.s32.totalorder %v302, %v380
  %vm597 = vcmp.eq.s32.totalorder %v303, %v348
  %vm598 = vcmp.eq.s32.totalorder %v303, %v352
  %vm599 = vcmp.eq.s32.totalorder %v303, %v356
  %vm600 = vcmp.eq.s32.totalorder %v303, %v360
  %vm601 = vcmp.eq.s32.totalorder %v303, %v364
  %vm602 = vcmp.eq.s32.totalorder %v303, %v368
  %vm603 = vcmp.eq.s32.totalorder %v303, %v372
  %vm604 = vcmp.eq.s32.totalorder %v303, %v376
  %vm605 = vcmp.eq.s32.totalorder %v303, %v380
  %vm606 = vcmp.eq.s32.totalorder %v304, %v348
  %vm607 = vcmp.eq.s32.totalorder %v304, %v352
  %vm608 = vcmp.eq.s32.totalorder %v304, %v356
  %vm609 = vcmp.eq.s32.totalorder %v304, %v360
  %vm610 = vcmp.eq.s32.totalorder %v304, %v364
  %vm611 = vcmp.eq.s32.totalorder %v304, %v368
  %vm612 = vcmp.eq.s32.totalorder %v304, %v372
  %vm613 = vcmp.eq.s32.totalorder %v304, %v376
  %vm614 = vcmp.eq.s32.totalorder %v304, %v380
  %vm615 = vcmp.eq.s32.totalorder %v305, %v348
  %vm616 = vcmp.eq.s32.totalorder %v305, %v352
  %vm617 = vcmp.eq.s32.totalorder %v305, %v356
  %vm618 = vcmp.eq.s32.totalorder %v305, %v360
  %vm619 = vcmp.eq.s32.totalorder %v305, %v364
  %vm620 = vcmp.eq.s32.totalorder %v305, %v368
  %vm621 = vcmp.eq.s32.totalorder %v305, %v372
  %vm622 = vcmp.eq.s32.totalorder %v305, %v376
  %vm623 = vcmp.eq.s32.totalorder %v305, %v380
  %vm624 = vcmp.eq.s32.totalorder %v306, %v348
  %vm625 = vcmp.eq.s32.totalorder %v306, %v352
  %vm626 = vcmp.eq.s32.totalorder %v306, %v356
  %vm627 = vcmp.eq.s32.totalorder %v306, %v360
  %vm628 = vcmp.eq.s32.totalorder %v306, %v364
  %vm629 = vcmp.eq.s32.totalorder %v306, %v368
  %vm630 = vcmp.eq.s32.totalorder %v306, %v372
  %vm631 = vcmp.eq.s32.totalorder %v306, %v376
  %vm632 = vcmp.eq.s32.totalorder %v306, %v380
  %vm633 = vcmp.eq.s32.totalorder %v307, %v348
  %vm634 = vcmp.eq.s32.totalorder %v307, %v352
  %vm635 = vcmp.eq.s32.totalorder %v307, %v356
  %vm636 = vcmp.eq.s32.totalorder %v307, %v360
  %vm637 = vcmp.eq.s32.totalorder %v307, %v364
  %vm638 = vcmp.eq.s32.totalorder %v307, %v368
  %vm639 = vcmp.eq.s32.totalorder %v307, %v372
  %vm640 = vcmp.eq.s32.totalorder %v307, %v376
  %vm641 = vcmp.eq.s32.totalorder %v307, %v380
  %vm642 = vcmp.eq.s32.totalorder %v308, %v348
  %vm643 = vcmp.eq.s32.totalorder %v308, %v352
  %vm644 = vcmp.eq.s32.totalorder %v308, %v356
  %vm645 = vcmp.eq.s32.totalorder %v308, %v360
  %vm646 = vcmp.eq.s32.totalorder %v308, %v364
  %vm647 = vcmp.eq.s32.totalorder %v308, %v368
  %vm648 = vcmp.eq.s32.totalorder %v308, %v372
  %vm649 = vcmp.eq.s32.totalorder %v308, %v376
  %vm650 = vcmp.eq.s32.totalorder %v308, %v380
  %vm651 = vcmp.eq.s32.totalorder %v309, %v348
  %vm652 = vcmp.eq.s32.totalorder %v309, %v352
  %vm653 = vcmp.eq.s32.totalorder %v309, %v356
  %vm654 = vcmp.eq.s32.totalorder %v309, %v360
  %vm655 = vcmp.eq.s32.totalorder %v309, %v364
  %vm656 = vcmp.eq.s32.totalorder %v309, %v368
  %vm657 = vcmp.eq.s32.totalorder %v309, %v372
  %vm658 = vcmp.eq.s32.totalorder %v309, %v376
  %vm659 = vcmp.eq.s32.totalorder %v309, %v380
  %vm660 = vcmp.eq.s32.totalorder %v310, %v348
  %vm661 = vcmp.eq.s32.totalorder %v310, %v352
  %vm662 = vcmp.eq.s32.totalorder %v310, %v356
  %vm663 = vcmp.eq.s32.totalorder %v310, %v360
  %vm664 = vcmp.eq.s32.totalorder %v310, %v364
  %vm665 = vcmp.eq.s32.totalorder %v310, %v368
  %vm666 = vcmp.eq.s32.totalorder %v310, %v372
  %vm667 = vcmp.eq.s32.totalorder %v310, %v376
  %vm668 = vcmp.eq.s32.totalorder %v310, %v380
  %vm669 = vcmp.eq.s32.totalorder %v311, %v348
  %vm670 = vcmp.eq.s32.totalorder %v311, %v352
  %vm671 = vcmp.eq.s32.totalorder %v311, %v356
  %vm672 = vcmp.eq.s32.totalorder %v311, %v360
  %vm673 = vcmp.eq.s32.totalorder %v311, %v364
  %vm674 = vcmp.eq.s32.totalorder %v311, %v368
  %vm675 = vcmp.eq.s32.totalorder %v311, %v372
  %vm676 = vcmp.eq.s32.totalorder %v311, %v376
  %vm677 = vcmp.eq.s32.totalorder %v311, %v380
  %vm678 = vcmp.eq.s32.totalorder %v312, %v348
  %vm679 = vcmp.eq.s32.totalorder %v312, %v352
  %vm680 = vcmp.eq.s32.totalorder %v312, %v356
  %vm681 = vcmp.eq.s32.totalorder %v312, %v360
  %vm682 = vcmp.eq.s32.totalorder %v312, %v364
  %vm683 = vcmp.eq.s32.totalorder %v312, %v368
  %vm684 = vcmp.eq.s32.totalorder %v312, %v372
  %vm685 = vcmp.eq.s32.totalorder %v312, %v376
  %vm686 = vcmp.eq.s32.totalorder %v312, %v380
  %vm687 = vcmp.eq.s32.totalorder %v313, %v348
  %vm688 = vcmp.eq.s32.totalorder %v313, %v352
  %vm689 = vcmp.eq.s32.totalorder %v313, %v356
  %vm690 = vcmp.eq.s32.totalorder %v313, %v360
  %vm691 = vcmp.eq.s32.totalorder %v313, %v364
  %vm692 = vcmp.eq.s32.totalorder %v313, %v368
  %vm693 = vcmp.eq.s32.totalorder %v313, %v372
  %vm694 = vcmp.eq.s32.totalorder %v313, %v376
  %vm695 = vcmp.eq.s32.totalorder %v313, %v380
  %vm696 = vcmp.eq.s32.totalorder %v314, %v348
  %vm697 = vcmp.eq.s32.totalorder %v314, %v352
  %vm698 = vcmp.eq.s32.totalorder %v314, %v356
  %vm699 = vcmp.eq.s32.totalorder %v314, %v360
  %vm700 = vcmp.eq.s32.totalorder %v314, %v364
  %vm701 = vcmp.eq.s32.totalorder %v314, %v368
  %vm702 = vcmp.eq.s32.totalorder %v314, %v372
  %vm703 = vcmp.eq.s32.totalorder %v314, %v376
  %vm704 = vcmp.eq.s32.totalorder %v314, %v380
  %vm705 = vcmp.eq.s32.totalorder %v315, %v348
  %vm706 = vcmp.eq.s32.totalorder %v315, %v352
  %vm707 = vcmp.eq.s32.totalorder %v315, %v356
  %vm708 = vcmp.eq.s32.totalorder %v315, %v360
  %vm709 = vcmp.eq.s32.totalorder %v315, %v364
  %vm710 = vcmp.eq.s32.totalorder %v315, %v368
  %vm711 = vcmp.eq.s32.totalorder %v315, %v372
  %vm712 = vcmp.eq.s32.totalorder %v315, %v376
  %vm713 = vcmp.eq.s32.totalorder %v315, %v380
  %vm714 = vcmp.eq.s32.totalorder %v316, %v348
  %vm715 = vcmp.eq.s32.totalorder %v316, %v352
  %vm716 = vcmp.eq.s32.totalorder %v316, %v356
  %vm717 = vcmp.eq.s32.totalorder %v316, %v360
  %vm718 = vcmp.eq.s32.totalorder %v316, %v364
  %vm719 = vcmp.eq.s32.totalorder %v316, %v368
  %vm720 = vcmp.eq.s32.totalorder %v316, %v372
  %vm721 = vcmp.eq.s32.totalorder %v316, %v376
  %vm722 = vcmp.eq.s32.totalorder %v316, %v380
  %vm723 = vcmp.eq.s32.totalorder %v317, %v348
  %vm724 = vcmp.eq.s32.totalorder %v317, %v352
  %vm725 = vcmp.eq.s32.totalorder %v317, %v356
  %vm726 = vcmp.eq.s32.totalorder %v317, %v360
  %vm727 = vcmp.eq.s32.totalorder %v317, %v364
  %vm728 = vcmp.eq.s32.totalorder %v317, %v368
  %vm729 = vcmp.eq.s32.totalorder %v317, %v372
  %vm730 = vcmp.eq.s32.totalorder %v317, %v376
  %vm731 = vcmp.eq.s32.totalorder %v317, %v380
  %vm732 = vcmp.eq.s32.totalorder %v318, %v348
  %vm733 = vcmp.eq.s32.totalorder %v318, %v352
  %vm734 = vcmp.eq.s32.totalorder %v318, %v356
  %vm735 = vcmp.eq.s32.totalorder %v318, %v360
  %vm736 = vcmp.eq.s32.totalorder %v318, %v364
  %vm737 = vcmp.eq.s32.totalorder %v318, %v368
  %vm738 = vcmp.eq.s32.totalorder %v318, %v372
  %vm739 = vcmp.eq.s32.totalorder %v318, %v376
  %vm740 = vcmp.eq.s32.totalorder %v318, %v380
  %vm741 = vcmp.eq.s32.totalorder %v319, %v348
  %vm742 = vcmp.eq.s32.totalorder %v319, %v352
  %vm743 = vcmp.eq.s32.totalorder %v319, %v356
  %vm744 = vcmp.eq.s32.totalorder %v319, %v360
  %vm745 = vcmp.eq.s32.totalorder %v319, %v364
  %vm746 = vcmp.eq.s32.totalorder %v319, %v368
  %vm747 = vcmp.eq.s32.totalorder %v319, %v372
  %vm748 = vcmp.eq.s32.totalorder %v319, %v376
  %vm749 = vcmp.eq.s32.totalorder %v319, %v380
  %vm750 = vcmp.eq.s32.totalorder %v320, %v348
  %vm751 = vcmp.eq.s32.totalorder %v320, %v352
  %vm752 = vcmp.eq.s32.totalorder %v320, %v356
  %vm753 = vcmp.eq.s32.totalorder %v320, %v360
  %vm754 = vcmp.eq.s32.totalorder %v320, %v364
  %vm755 = vcmp.eq.s32.totalorder %v320, %v368
  %vm756 = vcmp.eq.s32.totalorder %v320, %v372
  %vm757 = vcmp.eq.s32.totalorder %v320, %v376
  %vm758 = vcmp.eq.s32.totalorder %v320, %v380
  %vm759 = vcmp.eq.s32.totalorder %v321, %v348
  %vm760 = vcmp.eq.s32.totalorder %v321, %v352
  %vm761 = vcmp.eq.s32.totalorder %v321, %v356
  %vm762 = vcmp.eq.s32.totalorder %v321, %v360
  %vm763 = vcmp.eq.s32.totalorder %v321, %v364
  %vm764 = vcmp.eq.s32.totalorder %v321, %v368
  %vm765 = vcmp.eq.s32.totalorder %v321, %v372
  %vm766 = vcmp.eq.s32.totalorder %v321, %v376
  %vm767 = vcmp.eq.s32.totalorder %v321, %v380
  %vm768 = vcmp.eq.s32.totalorder %v322, %v348
  %vm769 = vcmp.eq.s32.totalorder %v322, %v352
  %vm770 = vcmp.eq.s32.totalorder %v322, %v356
  %vm771 = vcmp.eq.s32.totalorder %v322, %v360
  %vm772 = vcmp.eq.s32.totalorder %v322, %v364
  %vm773 = vcmp.eq.s32.totalorder %v322, %v368
  %vm774 = vcmp.eq.s32.totalorder %v322, %v372
  %vm775 = vcmp.eq.s32.totalorder %v322, %v376
  %vm776 = vcmp.eq.s32.totalorder %v322, %v380
  %vm777 = vcmp.eq.s32.totalorder %v323, %v348
  %vm778 = vcmp.eq.s32.totalorder %v323, %v352
  %vm779 = vcmp.eq.s32.totalorder %v323, %v356
  %vm780 = vcmp.eq.s32.totalorder %v323, %v360
  %vm781 = vcmp.eq.s32.totalorder %v323, %v364
  %vm782 = vcmp.eq.s32.totalorder %v323, %v368
  %vm783 = vcmp.eq.s32.totalorder %v323, %v372
  %vm784 = vcmp.eq.s32.totalorder %v323, %v376
  %vm785 = vcmp.eq.s32.totalorder %v323, %v380
  %vm786 = vcmp.eq.s32.totalorder %v324, %v348
  %vm787 = vcmp.eq.s32.totalorder %v324, %v352
  %vm788 = vcmp.eq.s32.totalorder %v324, %v356
  %vm789 = vcmp.eq.s32.totalorder %v324, %v360
  %vm790 = vcmp.eq.s32.totalorder %v324, %v364
  %vm791 = vcmp.eq.s32.totalorder %v324, %v368
  %vm792 = vcmp.eq.s32.totalorder %v324, %v372
  %vm793 = vcmp.eq.s32.totalorder %v324, %v376
  %vm794 = vcmp.eq.s32.totalorder %v324, %v380
  %vm795 = vcmp.eq.s32.totalorder %v325, %v348
  %vm796 = vcmp.eq.s32.totalorder %v325, %v352
  %vm797 = vcmp.eq.s32.totalorder %v325, %v356
  %vm798 = vcmp.eq.s32.totalorder %v325, %v360
  %vm799 = vcmp.eq.s32.totalorder %v325, %v364
  %vm800 = vcmp.eq.s32.totalorder %v325, %v368
  %vm801 = vcmp.eq.s32.totalorder %v325, %v372
  %vm802 = vcmp.eq.s32.totalorder %v325, %v376
  %vm803 = vcmp.eq.s32.totalorder %v325, %v380
  %vm804 = vcmp.eq.s32.totalorder %v326, %v348
  %vm805 = vcmp.eq.s32.totalorder %v326, %v352
  %vm806 = vcmp.eq.s32.totalorder %v326, %v356
  %vm807 = vcmp.eq.s32.totalorder %v326, %v360
  %vm808 = vcmp.eq.s32.totalorder %v326, %v364
  %vm809 = vcmp.eq.s32.totalorder %v326, %v368
  %vm810 = vcmp.eq.s32.totalorder %v326, %v372
  %vm811 = vcmp.eq.s32.totalorder %v326, %v376
  %vm812 = vcmp.eq.s32.totalorder %v326, %v380
  %vm813 = vcmp.eq.s32.totalorder %v327, %v348
  %vm814 = vcmp.eq.s32.totalorder %v327, %v352
  %vm815 = vcmp.eq.s32.totalorder %v327, %v356
  %vm816 = vcmp.eq.s32.totalorder %v327, %v360
  %vm817 = vcmp.eq.s32.totalorder %v327, %v364
  %vm818 = vcmp.eq.s32.totalorder %v327, %v368
  %vm819 = vcmp.eq.s32.totalorder %v327, %v372
  %vm820 = vcmp.eq.s32.totalorder %v327, %v376
  %vm821 = vcmp.eq.s32.totalorder %v327, %v380
  %vm822 = vcmp.eq.s32.totalorder %v328, %v348
  %vm823 = vcmp.eq.s32.totalorder %v328, %v352
  %vm824 = vcmp.eq.s32.totalorder %v328, %v356
  %vm825 = vcmp.eq.s32.totalorder %v328, %v360
  %vm826 = vcmp.eq.s32.totalorder %v328, %v364
  %vm827 = vcmp.eq.s32.totalorder %v328, %v368
  %vm828 = vcmp.eq.s32.totalorder %v328, %v372
  %vm829 = vcmp.eq.s32.totalorder %v328, %v376
  %vm830 = vcmp.eq.s32.totalorder %v328, %v380
  %vm831 = vcmp.eq.s32.totalorder %v329, %v348
  %vm832 = vcmp.eq.s32.totalorder %v329, %v352
  %vm833 = vcmp.eq.s32.totalorder %v329, %v356
  %vm834 = vcmp.eq.s32.totalorder %v329, %v360
  %vm835 = vcmp.eq.s32.totalorder %v329, %v364
  %vm836 = vcmp.eq.s32.totalorder %v329, %v368
  %vm837 = vcmp.eq.s32.totalorder %v329, %v372
  %vm838 = vcmp.eq.s32.totalorder %v329, %v376
  %vm839 = vcmp.eq.s32.totalorder %v329, %v380
  %vm840 = vcmp.eq.s32.totalorder %v330, %v348
  %vm841 = vcmp.eq.s32.totalorder %v330, %v352
  %vm842 = vcmp.eq.s32.totalorder %v330, %v356
  %vm843 = vcmp.eq.s32.totalorder %v330, %v360
  %vm844 = vcmp.eq.s32.totalorder %v330, %v364
  %vm845 = vcmp.eq.s32.totalorder %v330, %v368
  %vm846 = vcmp.eq.s32.totalorder %v330, %v372
  %vm847 = vcmp.eq.s32.totalorder %v330, %v376
  %vm848 = vcmp.eq.s32.totalorder %v330, %v380
  %vm849 = vcmp.eq.s32.totalorder %v331, %v348
  %vm850 = vcmp.eq.s32.totalorder %v331, %v352
  %vm851 = vcmp.eq.s32.totalorder %v331, %v356
  %vm852 = vcmp.eq.s32.totalorder %v331, %v360
  %vm853 = vcmp.eq.s32.totalorder %v331, %v364
  %vm854 = vcmp.eq.s32.totalorder %v331, %v368
  %vm855 = vcmp.eq.s32.totalorder %v331, %v372
  %vm856 = vcmp.eq.s32.totalorder %v331, %v376
  %vm857 = vcmp.eq.s32.totalorder %v331, %v380
  %vm858 = vcmp.eq.s32.totalorder %v332, %v348
  %vm859 = vcmp.eq.s32.totalorder %v332, %v352
  %vm860 = vcmp.eq.s32.totalorder %v332, %v356
  %vm861 = vcmp.eq.s32.totalorder %v332, %v360
  %vm862 = vcmp.eq.s32.totalorder %v332, %v364
  %vm863 = vcmp.eq.s32.totalorder %v332, %v368
  %vm864 = vcmp.eq.s32.totalorder %v332, %v372
  %vm865 = vcmp.eq.s32.totalorder %v332, %v376
  %vm866 = vcmp.eq.s32.totalorder %v332, %v380
  %vm867 = vcmp.eq.s32.totalorder %v333, %v348
  %vm868 = vcmp.eq.s32.totalorder %v333, %v352
  %vm869 = vcmp.eq.s32.totalorder %v333, %v356
  %vm870 = vcmp.eq.s32.totalorder %v333, %v360
  %vm871 = vcmp.eq.s32.totalorder %v333, %v364
  %vm872 = vcmp.eq.s32.totalorder %v333, %v368
  %vm873 = vcmp.eq.s32.totalorder %v333, %v372
  %vm874 = vcmp.eq.s32.totalorder %v333, %v376
  %vm875 = vcmp.eq.s32.totalorder %v333, %v380
  %vm876 = vcmp.eq.s32.totalorder %v334, %v348
  %vm877 = vcmp.eq.s32.totalorder %v334, %v352
  %vm878 = vcmp.eq.s32.totalorder %v334, %v356
  %vm879 = vcmp.eq.s32.totalorder %v334, %v360
  %vm880 = vcmp.eq.s32.totalorder %v334, %v364
  %vm881 = vcmp.eq.s32.totalorder %v334, %v368
  %vm882 = vcmp.eq.s32.totalorder %v334, %v372
  %vm883 = vcmp.eq.s32.totalorder %v334, %v376
  %vm884 = vcmp.eq.s32.totalorder %v334, %v380
  %vm885 = vcmp.eq.s32.totalorder %v335, %v348
  %vm886 = vcmp.eq.s32.totalorder %v335, %v352
  %vm887 = vcmp.eq.s32.totalorder %v335, %v356
  %vm888 = vcmp.eq.s32.totalorder %v335, %v360
  %vm889 = vcmp.eq.s32.totalorder %v335, %v364
  %vm890 = vcmp.eq.s32.totalorder %v335, %v368
  %vm891 = vcmp.eq.s32.totalorder %v335, %v372
  %vm892 = vcmp.eq.s32.totalorder %v335, %v376
  %vm893 = vcmp.eq.s32.totalorder %v335, %v380
  %vm894 = vcmp.eq.s32.totalorder %v336, %v348
  %vm895 = vcmp.eq.s32.totalorder %v336, %v352
  %vm896 = vcmp.eq.s32.totalorder %v336, %v356
  %vm897 = vcmp.eq.s32.totalorder %v336, %v360
  %vm898 = vcmp.eq.s32.totalorder %v336, %v364
  %vm899 = vcmp.eq.s32.totalorder %v336, %v368
  %vm900 = vcmp.eq.s32.totalorder %v336, %v372
  %vm901 = vcmp.eq.s32.totalorder %v336, %v376
  %vm902 = vcmp.eq.s32.totalorder %v336, %v380
  %vm903 = vcmp.eq.s32.totalorder %v337, %v348
  %vm904 = vcmp.eq.s32.totalorder %v337, %v352
  %vm905 = vcmp.eq.s32.totalorder %v337, %v356
  %vm906 = vcmp.eq.s32.totalorder %v337, %v360
  %vm907 = vcmp.eq.s32.totalorder %v337, %v364
  %vm908 = vcmp.eq.s32.totalorder %v337, %v368
  %vm909 = vcmp.eq.s32.totalorder %v337, %v372
  %vm910 = vcmp.eq.s32.totalorder %v337, %v376
  %vm911 = vcmp.eq.s32.totalorder %v337, %v380
  %vm912 = vcmp.eq.s32.totalorder %v338, %v348
  %vm913 = vcmp.eq.s32.totalorder %v338, %v352
  %vm914 = vcmp.eq.s32.totalorder %v338, %v356
  %vm915 = vcmp.eq.s32.totalorder %v338, %v360
  %vm916 = vcmp.eq.s32.totalorder %v338, %v364
  %vm917 = vcmp.eq.s32.totalorder %v338, %v368
  %vm918 = vcmp.eq.s32.totalorder %v338, %v372
  %vm919 = vcmp.eq.s32.totalorder %v338, %v376
  %vm920 = vcmp.eq.s32.totalorder %v338, %v380
  %vm921 = vcmp.eq.s32.totalorder %v339, %v348
  %vm922 = vcmp.eq.s32.totalorder %v339, %v352
  %vm923 = vcmp.eq.s32.totalorder %v339, %v356
  %vm924 = vcmp.eq.s32.totalorder %v339, %v360
  %vm925 = vcmp.eq.s32.totalorder %v339, %v364
  %vm926 = vcmp.eq.s32.totalorder %v339, %v368
  %vm927 = vcmp.eq.s32.totalorder %v339, %v372
  %vm928 = vcmp.eq.s32.totalorder %v339, %v376
  %vm929 = vcmp.eq.s32.totalorder %v339, %v380
  %vm930 = vcmp.eq.s32.totalorder %v340, %v348
  %vm931 = vcmp.eq.s32.totalorder %v340, %v352
  %vm932 = vcmp.eq.s32.totalorder %v340, %v356
  %vm933 = vcmp.eq.s32.totalorder %v340, %v360
  %vm934 = vcmp.eq.s32.totalorder %v340, %v364
  %vm935 = vcmp.eq.s32.totalorder %v340, %v368
  %vm936 = vcmp.eq.s32.totalorder %v340, %v372
  %vm937 = vcmp.eq.s32.totalorder %v340, %v376
  %vm938 = vcmp.eq.s32.totalorder %v340, %v380
  %vm939 = vcmp.eq.s32.totalorder %v341, %v348
  %vm940 = vcmp.eq.s32.totalorder %v341, %v352
  %vm941 = vcmp.eq.s32.totalorder %v341, %v356
  %vm942 = vcmp.eq.s32.totalorder %v341, %v360
  %vm943 = vcmp.eq.s32.totalorder %v341, %v364
  %vm944 = vcmp.eq.s32.totalorder %v341, %v368
  %vm945 = vcmp.eq.s32.totalorder %v341, %v372
  %vm946 = vcmp.eq.s32.totalorder %v341, %v376
  %vm947 = vcmp.eq.s32.totalorder %v341, %v380
  %vm948 = vcmp.eq.s32.totalorder %v342, %v348
  %vm949 = vcmp.eq.s32.totalorder %v342, %v352
  %vm950 = vcmp.eq.s32.totalorder %v342, %v356
  %vm951 = vcmp.eq.s32.totalorder %v342, %v360
  %vm952 = vcmp.eq.s32.totalorder %v342, %v364
  %vm953 = vcmp.eq.s32.totalorder %v342, %v368
  %vm954 = vcmp.eq.s32.totalorder %v342, %v372
  %vm955 = vcmp.eq.s32.totalorder %v342, %v376
  %vm956 = vcmp.eq.s32.totalorder %v342, %v380
  %v957 = vsel %vm381, 1.0, 0.0
  %v958 = vsel %vm382, 1.0, 0.0
  %v959 = vsel %vm383, 1.0, 0.0
  %v960 = vsel %vm384, 1.0, 0.0
  %v961 = vsel %vm385, 1.0, 0.0
  %v962 = vsel %vm386, 1.0, 0.0
  %v963 = vsel %vm387, 1.0, 0.0
  %v964 = vsel %vm388, 1.0, 0.0
  %v965 = vsel %vm389, 1.0, 0.0
  %v966 = vsel %vm390, 1.0, 0.0
  %v967 = vsel %vm391, 1.0, 0.0
  %v968 = vsel %vm392, 1.0, 0.0
  %v969 = vsel %vm393, 1.0, 0.0
  %v970 = vsel %vm394, 1.0, 0.0
  %v971 = vsel %vm395, 1.0, 0.0
  %v972 = vsel %vm396, 1.0, 0.0
  %v973 = vsel %vm397, 1.0, 0.0
  %v974 = vsel %vm398, 1.0, 0.0
  %v975 = vsel %vm399, 1.0, 0.0
  %v976 = vsel %vm400, 1.0, 0.0
  %v977 = vsel %vm401, 1.0, 0.0
  %v978 = vsel %vm402, 1.0, 0.0
  %v979 = vsel %vm403, 1.0, 0.0
  %v980 = vsel %vm404, 1.0, 0.0
  %v981 = vsel %vm405, 1.0, 0.0
  %v982 = vsel %vm406, 1.0, 0.0
  %v983 = vsel %vm407, 1.0, 0.0
  %v984 = vsel %vm408, 1.0, 0.0
  %v985 = vsel %vm409, 1.0, 0.0
  %v986 = vsel %vm410, 1.0, 0.0
  %v987 = vsel %vm411, 1.0, 0.0
  %v988 = vsel %vm412, 1.0, 0.0
  %v989 = vsel %vm413, 1.0, 0.0
  %v990 = vsel %vm414, 1.0, 0.0
  %v991 = vsel %vm415, 1.0, 0.0
  %v992 = vsel %vm416, 1.0, 0.0
  %v993 = vsel %vm417, 1.0, 0.0
  %v994 = vsel %vm418, 1.0, 0.0
  %v995 = vsel %vm419, 1.0, 0.0
  %v996 = vsel %vm420, 1.0, 0.0
  %v997 = vsel %vm421, 1.0, 0.0
  %v998 = vsel %vm422, 1.0, 0.0
  %v999 = vsel %vm423, 1.0, 0.0
  %v1000 = vsel %vm424, 1.0, 0.0
  %v1001 = vsel %vm425, 1.0, 0.0
  %v1002 = vsel %vm426, 1.0, 0.0
  %v1003 = vsel %vm427, 1.0, 0.0
  %v1004 = vsel %vm428, 1.0, 0.0
  %v1005 = vsel %vm429, 1.0, 0.0
  %v1006 = vsel %vm430, 1.0, 0.0
  %v1007 = vsel %vm431, 1.0, 0.0
  %v1008 = vsel %vm432, 1.0, 0.0
  %v1009 = vsel %vm433, 1.0, 0.0
  %v1010 = vsel %vm434, 1.0, 0.0
  %v1011 = vsel %vm435, 1.0, 0.0
  %v1012 = vsel %vm436, 1.0, 0.0
  %v1013 = vsel %vm437, 1.0, 0.0
  %v1014 = vsel %vm438, 1.0, 0.0
  %v1015 = vsel %vm439, 1.0, 0.0
  %v1016 = vsel %vm440, 1.0, 0.0
  %v1017 = vsel %vm441, 1.0, 0.0
  %v1018 = vsel %vm442, 1.0, 0.0
  %v1019 = vsel %vm443, 1.0, 0.0
  %v1020 = vsel %vm444, 1.0, 0.0
  %v1021 = vsel %vm445, 1.0, 0.0
  %v1022 = vsel %vm446, 1.0, 0.0
  %v1023 = vsel %vm447, 1.0, 0.0
  %v1024 = vsel %vm448, 1.0, 0.0
  %v1025 = vsel %vm449, 1.0, 0.0
  %v1026 = vsel %vm450, 1.0, 0.0
  %v1027 = vsel %vm451, 1.0, 0.0
  %v1028 = vsel %vm452, 1.0, 0.0
  %v1029 = vsel %vm453, 1.0, 0.0
  %v1030 = vsel %vm454, 1.0, 0.0
  %v1031 = vsel %vm455, 1.0, 0.0
  %v1032 = vsel %vm456, 1.0, 0.0
  %v1033 = vsel %vm457, 1.0, 0.0
  %v1034 = vsel %vm458, 1.0, 0.0
  %v1035 = vsel %vm459, 1.0, 0.0
  %v1036 = vsel %vm460, 1.0, 0.0
  %v1037 = vsel %vm461, 1.0, 0.0
  %v1038 = vsel %vm462, 1.0, 0.0
  %v1039 = vsel %vm463, 1.0, 0.0
  %v1040 = vsel %vm464, 1.0, 0.0
  %v1041 = vsel %vm465, 1.0, 0.0
  %v1042 = vsel %vm466, 1.0, 0.0
  %v1043 = vsel %vm467, 1.0, 0.0
  %v1044 = vsel %vm468, 1.0, 0.0
  %v1045 = vsel %vm469, 1.0, 0.0
  %v1046 = vsel %vm470, 1.0, 0.0
  %v1047 = vsel %vm471, 1.0, 0.0
  %v1048 = vsel %vm472, 1.0, 0.0
  %v1049 = vsel %vm473, 1.0, 0.0
  %v1050 = vsel %vm474, 1.0, 0.0
  %v1051 = vsel %vm475, 1.0, 0.0
  %v1052 = vsel %vm476, 1.0, 0.0
  %v1053 = vsel %vm477, 1.0, 0.0
  %v1054 = vsel %vm478, 1.0, 0.0
  %v1055 = vsel %vm479, 1.0, 0.0
  %v1056 = vsel %vm480, 1.0, 0.0
  %v1057 = vsel %vm481, 1.0, 0.0
  %v1058 = vsel %vm482, 1.0, 0.0
  %v1059 = vsel %vm483, 1.0, 0.0
  %v1060 = vsel %vm484, 1.0, 0.0
  %v1061 = vsel %vm485, 1.0, 0.0
  %v1062 = vsel %vm486, 1.0, 0.0
  %v1063 = vsel %vm487, 1.0, 0.0
  %v1064 = vsel %vm488, 1.0, 0.0
  %v1065 = vsel %vm489, 1.0, 0.0
  %v1066 = vsel %vm490, 1.0, 0.0
  %v1067 = vsel %vm491, 1.0, 0.0
  %v1068 = vsel %vm492, 1.0, 0.0
  %v1069 = vsel %vm493, 1.0, 0.0
  %v1070 = vsel %vm494, 1.0, 0.0
  %v1071 = vsel %vm495, 1.0, 0.0
  %v1072 = vsel %vm496, 1.0, 0.0
  %v1073 = vsel %vm497, 1.0, 0.0
  %v1074 = vsel %vm498, 1.0, 0.0
  %v1075 = vsel %vm499, 1.0, 0.0
  %v1076 = vsel %vm500, 1.0, 0.0
  %v1077 = vsel %vm501, 1.0, 0.0
  %v1078 = vsel %vm502, 1.0, 0.0
  %v1079 = vsel %vm503, 1.0, 0.0
  %v1080 = vsel %vm504, 1.0, 0.0
  %v1081 = vsel %vm505, 1.0, 0.0
  %v1082 = vsel %vm506, 1.0, 0.0
  %v1083 = vsel %vm507, 1.0, 0.0
  %v1084 = vsel %vm508, 1.0, 0.0
  %v1085 = vsel %vm509, 1.0, 0.0
  %v1086 = vsel %vm510, 1.0, 0.0
  %v1087 = vsel %vm511, 1.0, 0.0
  %v1088 = vsel %vm512, 1.0, 0.0
  %v1089 = vsel %vm513, 1.0, 0.0
  %v1090 = vsel %vm514, 1.0, 0.0
  %v1091 = vsel %vm515, 1.0, 0.0
  %v1092 = vsel %vm516, 1.0, 0.0
  %v1093 = vsel %vm517, 1.0, 0.0
  %v1094 = vsel %vm518, 1.0, 0.0
  %v1095 = vsel %vm519, 1.0, 0.0
  %v1096 = vsel %vm520, 1.0, 0.0
  %v1097 = vsel %vm521, 1.0, 0.0
  %v1098 = vsel %vm522, 1.0, 0.0
  %v1099 = vsel %vm523, 1.0, 0.0
  %v1100 = vsel %vm524, 1.0, 0.0
  %v1101 = vsel %vm525, 1.0, 0.0
  %v1102 = vsel %vm526, 1.0, 0.0
  %v1103 = vsel %vm527, 1.0, 0.0
  %v1104 = vsel %vm528, 1.0, 0.0
  %v1105 = vsel %vm529, 1.0, 0.0
  %v1106 = vsel %vm530, 1.0, 0.0
  %v1107 = vsel %vm531, 1.0, 0.0
  %v1108 = vsel %vm532, 1.0, 0.0
  %v1109 = vsel %vm533, 1.0, 0.0
  %v1110 = vsel %vm534, 1.0, 0.0
  %v1111 = vsel %vm535, 1.0, 0.0
  %v1112 = vsel %vm536, 1.0, 0.0
  %v1113 = vsel %vm537, 1.0, 0.0
  %v1114 = vsel %vm538, 1.0, 0.0
  %v1115 = vsel %vm539, 1.0, 0.0
  %v1116 = vsel %vm540, 1.0, 0.0
  %v1117 = vsel %vm541, 1.0, 0.0
  %v1118 = vsel %vm542, 1.0, 0.0
  %v1119 = vsel %vm543, 1.0, 0.0
  %v1120 = vsel %vm544, 1.0, 0.0
  %v1121 = vsel %vm545, 1.0, 0.0
  %v1122 = vsel %vm546, 1.0, 0.0
  %v1123 = vsel %vm547, 1.0, 0.0
  %v1124 = vsel %vm548, 1.0, 0.0
  %v1125 = vsel %vm549, 1.0, 0.0
  %v1126 = vsel %vm550, 1.0, 0.0
  %v1127 = vsel %vm551, 1.0, 0.0
  %v1128 = vsel %vm552, 1.0, 0.0
  %v1129 = vsel %vm553, 1.0, 0.0
  %v1130 = vsel %vm554, 1.0, 0.0
  %v1131 = vsel %vm555, 1.0, 0.0
  %v1132 = vsel %vm556, 1.0, 0.0
  %v1133 = vsel %vm557, 1.0, 0.0
  %v1134 = vsel %vm558, 1.0, 0.0
  %v1135 = vsel %vm559, 1.0, 0.0
  %v1136 = vsel %vm560, 1.0, 0.0
  %v1137 = vsel %vm561, 1.0, 0.0
  %v1138 = vsel %vm562, 1.0, 0.0
  %v1139 = vsel %vm563, 1.0, 0.0
  %v1140 = vsel %vm564, 1.0, 0.0
  %v1141 = vsel %vm565, 1.0, 0.0
  %v1142 = vsel %vm566, 1.0, 0.0
  %v1143 = vsel %vm567, 1.0, 0.0
  %v1144 = vsel %vm568, 1.0, 0.0
  %v1145 = vsel %vm569, 1.0, 0.0
  %v1146 = vsel %vm570, 1.0, 0.0
  %v1147 = vsel %vm571, 1.0, 0.0
  %v1148 = vsel %vm572, 1.0, 0.0
  %v1149 = vsel %vm573, 1.0, 0.0
  %v1150 = vsel %vm574, 1.0, 0.0
  %v1151 = vsel %vm575, 1.0, 0.0
  %v1152 = vsel %vm576, 1.0, 0.0
  %v1153 = vsel %vm577, 1.0, 0.0
  %v1154 = vsel %vm578, 1.0, 0.0
  %v1155 = vsel %vm579, 1.0, 0.0
  %v1156 = vsel %vm580, 1.0, 0.0
  %v1157 = vsel %vm581, 1.0, 0.0
  %v1158 = vsel %vm582, 1.0, 0.0
  %v1159 = vsel %vm583, 1.0, 0.0
  %v1160 = vsel %vm584, 1.0, 0.0
  %v1161 = vsel %vm585, 1.0, 0.0
  %v1162 = vsel %vm586, 1.0, 0.0
  %v1163 = vsel %vm587, 1.0, 0.0
  %v1164 = vsel %vm588, 1.0, 0.0
  %v1165 = vsel %vm589, 1.0, 0.0
  %v1166 = vsel %vm590, 1.0, 0.0
  %v1167 = vsel %vm591, 1.0, 0.0
  %v1168 = vsel %vm592, 1.0, 0.0
  %v1169 = vsel %vm593, 1.0, 0.0
  %v1170 = vsel %vm594, 1.0, 0.0
  %v1171 = vsel %vm595, 1.0, 0.0
  %v1172 = vsel %vm596, 1.0, 0.0
  %v1173 = vsel %vm597, 1.0, 0.0
  %v1174 = vsel %vm598, 1.0, 0.0
  %v1175 = vsel %vm599, 1.0, 0.0
  %v1176 = vsel %vm600, 1.0, 0.0
  %v1177 = vsel %vm601, 1.0, 0.0
  %v1178 = vsel %vm602, 1.0, 0.0
  %v1179 = vsel %vm603, 1.0, 0.0
  %v1180 = vsel %vm604, 1.0, 0.0
  %v1181 = vsel %vm605, 1.0, 0.0
  %v1182 = vsel %vm606, 1.0, 0.0
  %v1183 = vsel %vm607, 1.0, 0.0
  %v1184 = vsel %vm608, 1.0, 0.0
  %v1185 = vsel %vm609, 1.0, 0.0
  %v1186 = vsel %vm610, 1.0, 0.0
  %v1187 = vsel %vm611, 1.0, 0.0
  %v1188 = vsel %vm612, 1.0, 0.0
  %v1189 = vsel %vm613, 1.0, 0.0
  %v1190 = vsel %vm614, 1.0, 0.0
  %v1191 = vsel %vm615, 1.0, 0.0
  %v1192 = vsel %vm616, 1.0, 0.0
  %v1193 = vsel %vm617, 1.0, 0.0
  %v1194 = vsel %vm618, 1.0, 0.0
  %v1195 = vsel %vm619, 1.0, 0.0
  %v1196 = vsel %vm620, 1.0, 0.0
  %v1197 = vsel %vm621, 1.0, 0.0
  %v1198 = vsel %vm622, 1.0, 0.0
  %v1199 = vsel %vm623, 1.0, 0.0
  %v1200 = vsel %vm624, 1.0, 0.0
  %v1201 = vsel %vm625, 1.0, 0.0
  %v1202 = vsel %vm626, 1.0, 0.0
  %v1203 = vsel %vm627, 1.0, 0.0
  %v1204 = vsel %vm628, 1.0, 0.0
  %v1205 = vsel %vm629, 1.0, 0.0
  %v1206 = vsel %vm630, 1.0, 0.0
  %v1207 = vsel %vm631, 1.0, 0.0
  %v1208 = vsel %vm632, 1.0, 0.0
  %v1209 = vsel %vm633, 1.0, 0.0
  %v1210 = vsel %vm634, 1.0, 0.0
  %v1211 = vsel %vm635, 1.0, 0.0
  %v1212 = vsel %vm636, 1.0, 0.0
  %v1213 = vsel %vm637, 1.0, 0.0
  %v1214 = vsel %vm638, 1.0, 0.0
  %v1215 = vsel %vm639, 1.0, 0.0
  %v1216 = vsel %vm640, 1.0, 0.0
  %v1217 = vsel %vm641, 1.0, 0.0
  %v1218 = vsel %vm642, 1.0, 0.0
  %v1219 = vsel %vm643, 1.0, 0.0
  %v1220 = vsel %vm644, 1.0, 0.0
  %v1221 = vsel %vm645, 1.0, 0.0
  %v1222 = vsel %vm646, 1.0, 0.0
  %v1223 = vsel %vm647, 1.0, 0.0
  %v1224 = vsel %vm648, 1.0, 0.0
  %v1225 = vsel %vm649, 1.0, 0.0
  %v1226 = vsel %vm650, 1.0, 0.0
  %v1227 = vsel %vm651, 1.0, 0.0
  %v1228 = vsel %vm652, 1.0, 0.0
  %v1229 = vsel %vm653, 1.0, 0.0
  %v1230 = vsel %vm654, 1.0, 0.0
  %v1231 = vsel %vm655, 1.0, 0.0
  %v1232 = vsel %vm656, 1.0, 0.0
  %v1233 = vsel %vm657, 1.0, 0.0
  %v1234 = vsel %vm658, 1.0, 0.0
  %v1235 = vsel %vm659, 1.0, 0.0
  %v1236 = vsel %vm660, 1.0, 0.0
  %v1237 = vsel %vm661, 1.0, 0.0
  %v1238 = vsel %vm662, 1.0, 0.0
  %v1239 = vsel %vm663, 1.0, 0.0
  %v1240 = vsel %vm664, 1.0, 0.0
  %v1241 = vsel %vm665, 1.0, 0.0
  %v1242 = vsel %vm666, 1.0, 0.0
  %v1243 = vsel %vm667, 1.0, 0.0
  %v1244 = vsel %vm668, 1.0, 0.0
  %v1245 = vsel %vm669, 1.0, 0.0
  %v1246 = vsel %vm670, 1.0, 0.0
  %v1247 = vsel %vm671, 1.0, 0.0
  %v1248 = vsel %vm672, 1.0, 0.0
  %v1249 = vsel %vm673, 1.0, 0.0
  %v1250 = vsel %vm674, 1.0, 0.0
  %v1251 = vsel %vm675, 1.0, 0.0
  %v1252 = vsel %vm676, 1.0, 0.0
  %v1253 = vsel %vm677, 1.0, 0.0
  %v1254 = vsel %vm678, 1.0, 0.0
  %v1255 = vsel %vm679, 1.0, 0.0
  %v1256 = vsel %vm680, 1.0, 0.0
  %v1257 = vsel %vm681, 1.0, 0.0
  %v1258 = vsel %vm682, 1.0, 0.0
  %v1259 = vsel %vm683, 1.0, 0.0
  %v1260 = vsel %vm684, 1.0, 0.0
  %v1261 = vsel %vm685, 1.0, 0.0
  %v1262 = vsel %vm686, 1.0, 0.0
  %v1263 = vsel %vm687, 1.0, 0.0
  %v1264 = vsel %vm688, 1.0, 0.0
  %v1265 = vsel %vm689, 1.0, 0.0
  %v1266 = vsel %vm690, 1.0, 0.0
  %v1267 = vsel %vm691, 1.0, 0.0
  %v1268 = vsel %vm692, 1.0, 0.0
  %v1269 = vsel %vm693, 1.0, 0.0
  %v1270 = vsel %vm694, 1.0, 0.0
  %v1271 = vsel %vm695, 1.0, 0.0
  %v1272 = vsel %vm696, 1.0, 0.0
  %v1273 = vsel %vm697, 1.0, 0.0
  %v1274 = vsel %vm698, 1.0, 0.0
  %v1275 = vsel %vm699, 1.0, 0.0
  %v1276 = vsel %vm700, 1.0, 0.0
  %v1277 = vsel %vm701, 1.0, 0.0
  %v1278 = vsel %vm702, 1.0, 0.0
  %v1279 = vsel %vm703, 1.0, 0.0
  %v1280 = vsel %vm704, 1.0, 0.0
  %v1281 = vsel %vm705, 1.0, 0.0
  %v1282 = vsel %vm706, 1.0, 0.0
  %v1283 = vsel %vm707, 1.0, 0.0
  %v1284 = vsel %vm708, 1.0, 0.0
  %v1285 = vsel %vm709, 1.0, 0.0
  %v1286 = vsel %vm710, 1.0, 0.0
  %v1287 = vsel %vm711, 1.0, 0.0
  %v1288 = vsel %vm712, 1.0, 0.0
  %v1289 = vsel %vm713, 1.0, 0.0
  %v1290 = vsel %vm714, 1.0, 0.0
  %v1291 = vsel %vm715, 1.0, 0.0
  %v1292 = vsel %vm716, 1.0, 0.0
  %v1293 = vsel %vm717, 1.0, 0.0
  %v1294 = vsel %vm718, 1.0, 0.0
  %v1295 = vsel %vm719, 1.0, 0.0
  %v1296 = vsel %vm720, 1.0, 0.0
  %v1297 = vsel %vm721, 1.0, 0.0
  %v1298 = vsel %vm722, 1.0, 0.0
  %v1299 = vsel %vm723, 1.0, 0.0
  %v1300 = vsel %vm724, 1.0, 0.0
  %v1301 = vsel %vm725, 1.0, 0.0
  %v1302 = vsel %vm726, 1.0, 0.0
  %v1303 = vsel %vm727, 1.0, 0.0
  %v1304 = vsel %vm728, 1.0, 0.0
  %v1305 = vsel %vm729, 1.0, 0.0
  %v1306 = vsel %vm730, 1.0, 0.0
  %v1307 = vsel %vm731, 1.0, 0.0
  %v1308 = vsel %vm732, 1.0, 0.0
  %v1309 = vsel %vm733, 1.0, 0.0
  %v1310 = vsel %vm734, 1.0, 0.0
  %v1311 = vsel %vm735, 1.0, 0.0
  %v1312 = vsel %vm736, 1.0, 0.0
  %v1313 = vsel %vm737, 1.0, 0.0
  %v1314 = vsel %vm738, 1.0, 0.0
  %v1315 = vsel %vm739, 1.0, 0.0
  %v1316 = vsel %vm740, 1.0, 0.0
  %v1317 = vsel %vm741, 1.0, 0.0
  %v1318 = vsel %vm742, 1.0, 0.0
  %v1319 = vsel %vm743, 1.0, 0.0
  %v1320 = vsel %vm744, 1.0, 0.0
  %v1321 = vsel %vm745, 1.0, 0.0
  %v1322 = vsel %vm746, 1.0, 0.0
  %v1323 = vsel %vm747, 1.0, 0.0
  %v1324 = vsel %vm748, 1.0, 0.0
  %v1325 = vsel %vm749, 1.0, 0.0
  %v1326 = vsel %vm750, 1.0, 0.0
  %v1327 = vsel %vm751, 1.0, 0.0
  %v1328 = vsel %vm752, 1.0, 0.0
  %v1329 = vsel %vm753, 1.0, 0.0
  %v1330 = vsel %vm754, 1.0, 0.0
  %v1331 = vsel %vm755, 1.0, 0.0
  %v1332 = vsel %vm756, 1.0, 0.0
  %v1333 = vsel %vm757, 1.0, 0.0
  %v1334 = vsel %vm758, 1.0, 0.0
  %v1335 = vsel %vm759, 1.0, 0.0
  %v1336 = vsel %vm760, 1.0, 0.0
  %v1337 = vsel %vm761, 1.0, 0.0
  %v1338 = vsel %vm762, 1.0, 0.0
  %v1339 = vsel %vm763, 1.0, 0.0
  %v1340 = vsel %vm764, 1.0, 0.0
  %v1341 = vsel %vm765, 1.0, 0.0
  %v1342 = vsel %vm766, 1.0, 0.0
  %v1343 = vsel %vm767, 1.0, 0.0
  %v1344 = vsel %vm768, 1.0, 0.0
  %v1345 = vsel %vm769, 1.0, 0.0
  %v1346 = vsel %vm770, 1.0, 0.0
  %v1347 = vsel %vm771, 1.0, 0.0
  %v1348 = vsel %vm772, 1.0, 0.0
  %v1349 = vsel %vm773, 1.0, 0.0
  %v1350 = vsel %vm774, 1.0, 0.0
  %v1351 = vsel %vm775, 1.0, 0.0
  %v1352 = vsel %vm776, 1.0, 0.0
  %v1353 = vsel %vm777, 1.0, 0.0
  %v1354 = vsel %vm778, 1.0, 0.0
  %v1355 = vsel %vm779, 1.0, 0.0
  %v1356 = vsel %vm780, 1.0, 0.0
  %v1357 = vsel %vm781, 1.0, 0.0
  %v1358 = vsel %vm782, 1.0, 0.0
  %v1359 = vsel %vm783, 1.0, 0.0
  %v1360 = vsel %vm784, 1.0, 0.0
  %v1361 = vsel %vm785, 1.0, 0.0
  %v1362 = vsel %vm786, 1.0, 0.0
  %v1363 = vsel %vm787, 1.0, 0.0
  %v1364 = vsel %vm788, 1.0, 0.0
  %v1365 = vsel %vm789, 1.0, 0.0
  %v1366 = vsel %vm790, 1.0, 0.0
  %v1367 = vsel %vm791, 1.0, 0.0
  %v1368 = vsel %vm792, 1.0, 0.0
  %v1369 = vsel %vm793, 1.0, 0.0
  %v1370 = vsel %vm794, 1.0, 0.0
  %v1371 = vsel %vm795, 1.0, 0.0
  %v1372 = vsel %vm796, 1.0, 0.0
  %v1373 = vsel %vm797, 1.0, 0.0
  %v1374 = vsel %vm798, 1.0, 0.0
  %v1375 = vsel %vm799, 1.0, 0.0
  %v1376 = vsel %vm800, 1.0, 0.0
  %v1377 = vsel %vm801, 1.0, 0.0
  %v1378 = vsel %vm802, 1.0, 0.0
  %v1379 = vsel %vm803, 1.0, 0.0
  %v1380 = vsel %vm804, 1.0, 0.0
  %v1381 = vsel %vm805, 1.0, 0.0
  %v1382 = vsel %vm806, 1.0, 0.0
  %v1383 = vsel %vm807, 1.0, 0.0
  %v1384 = vsel %vm808, 1.0, 0.0
  %v1385 = vsel %vm809, 1.0, 0.0
  %v1386 = vsel %vm810, 1.0, 0.0
  %v1387 = vsel %vm811, 1.0, 0.0
  %v1388 = vsel %vm812, 1.0, 0.0
  %v1389 = vsel %vm813, 1.0, 0.0
  %v1390 = vsel %vm814, 1.0, 0.0
  %v1391 = vsel %vm815, 1.0, 0.0
  %v1392 = vsel %vm816, 1.0, 0.0
  %v1393 = vsel %vm817, 1.0, 0.0
  %v1394 = vsel %vm818, 1.0, 0.0
  %v1395 = vsel %vm819, 1.0, 0.0
  %v1396 = vsel %vm820, 1.0, 0.0
  %v1397 = vsel %vm821, 1.0, 0.0
  %v1398 = vsel %vm822, 1.0, 0.0
  %v1399 = vsel %vm823, 1.0, 0.0
  %v1400 = vsel %vm824, 1.0, 0.0
  %v1401 = vsel %vm825, 1.0, 0.0
  %v1402 = vsel %vm826, 1.0, 0.0
  %v1403 = vsel %vm827, 1.0, 0.0
  %v1404 = vsel %vm828, 1.0, 0.0
  %v1405 = vsel %vm829, 1.0, 0.0
  %v1406 = vsel %vm830, 1.0, 0.0
  %v1407 = vsel %vm831, 1.0, 0.0
  %v1408 = vsel %vm832, 1.0, 0.0
  %v1409 = vsel %vm833, 1.0, 0.0
  %v1410 = vsel %vm834, 1.0, 0.0
  %v1411 = vsel %vm835, 1.0, 0.0
  %v1412 = vsel %vm836, 1.0, 0.0
  %v1413 = vsel %vm837, 1.0, 0.0
  %v1414 = vsel %vm838, 1.0, 0.0
  %v1415 = vsel %vm839, 1.0, 0.0
  %v1416 = vsel %vm840, 1.0, 0.0
  %v1417 = vsel %vm841, 1.0, 0.0
  %v1418 = vsel %vm842, 1.0, 0.0
  %v1419 = vsel %vm843, 1.0, 0.0
  %v1420 = vsel %vm844, 1.0, 0.0
  %v1421 = vsel %vm845, 1.0, 0.0
  %v1422 = vsel %vm846, 1.0, 0.0
  %v1423 = vsel %vm847, 1.0, 0.0
  %v1424 = vsel %vm848, 1.0, 0.0
  %v1425 = vsel %vm849, 1.0, 0.0
  %v1426 = vsel %vm850, 1.0, 0.0
  %v1427 = vsel %vm851, 1.0, 0.0
  %v1428 = vsel %vm852, 1.0, 0.0
  %v1429 = vsel %vm853, 1.0, 0.0
  %v1430 = vsel %vm854, 1.0, 0.0
  %v1431 = vsel %vm855, 1.0, 0.0
  %v1432 = vsel %vm856, 1.0, 0.0
  %v1433 = vsel %vm857, 1.0, 0.0
  %v1434 = vsel %vm858, 1.0, 0.0
  %v1435 = vsel %vm859, 1.0, 0.0
  %v1436 = vsel %vm860, 1.0, 0.0
  %v1437 = vsel %vm861, 1.0, 0.0
  %v1438 = vsel %vm862, 1.0, 0.0
  %v1439 = vsel %vm863, 1.0, 0.0
  %v1440 = vsel %vm864, 1.0, 0.0
  %v1441 = vsel %vm865, 1.0, 0.0
  %v1442 = vsel %vm866, 1.0, 0.0
  %v1443 = vsel %vm867, 1.0, 0.0
  %v1444 = vsel %vm868, 1.0, 0.0
  %v1445 = vsel %vm869, 1.0, 0.0
  %v1446 = vsel %vm870, 1.0, 0.0
  %v1447 = vsel %vm871, 1.0, 0.0
  %v1448 = vsel %vm872, 1.0, 0.0
  %v1449 = vsel %vm873, 1.0, 0.0
  %v1450 = vsel %vm874, 1.0, 0.0
  %v1451 = vsel %vm875, 1.0, 0.0
  %v1452 = vsel %vm876, 1.0, 0.0
  %v1453 = vsel %vm877, 1.0, 0.0
  %v1454 = vsel %vm878, 1.0, 0.0
  %v1455 = vsel %vm879, 1.0, 0.0
  %v1456 = vsel %vm880, 1.0, 0.0
  %v1457 = vsel %vm881, 1.0, 0.0
  %v1458 = vsel %vm882, 1.0, 0.0
  %v1459 = vsel %vm883, 1.0, 0.0
  %v1460 = vsel %vm884, 1.0, 0.0
  %v1461 = vsel %vm885, 1.0, 0.0
  %v1462 = vsel %vm886, 1.0, 0.0
  %v1463 = vsel %vm887, 1.0, 0.0
  %v1464 = vsel %vm888, 1.0, 0.0
  %v1465 = vsel %vm889, 1.0, 0.0
  %v1466 = vsel %vm890, 1.0, 0.0
  %v1467 = vsel %vm891, 1.0, 0.0
  %v1468 = vsel %vm892, 1.0, 0.0
  %v1469 = vsel %vm893, 1.0, 0.0
  %v1470 = vsel %vm894, 1.0, 0.0
  %v1471 = vsel %vm895, 1.0, 0.0
  %v1472 = vsel %vm896, 1.0, 0.0
  %v1473 = vsel %vm897, 1.0, 0.0
  %v1474 = vsel %vm898, 1.0, 0.0
  %v1475 = vsel %vm899, 1.0, 0.0
  %v1476 = vsel %vm900, 1.0, 0.0
  %v1477 = vsel %vm901, 1.0, 0.0
  %v1478 = vsel %vm902, 1.0, 0.0
  %v1479 = vsel %vm903, 1.0, 0.0
  %v1480 = vsel %vm904, 1.0, 0.0
  %v1481 = vsel %vm905, 1.0, 0.0
  %v1482 = vsel %vm906, 1.0, 0.0
  %v1483 = vsel %vm907, 1.0, 0.0
  %v1484 = vsel %vm908, 1.0, 0.0
  %v1485 = vsel %vm909, 1.0, 0.0
  %v1486 = vsel %vm910, 1.0, 0.0
  %v1487 = vsel %vm911, 1.0, 0.0
  %v1488 = vsel %vm912, 1.0, 0.0
  %v1489 = vsel %vm913, 1.0, 0.0
  %v1490 = vsel %vm914, 1.0, 0.0
  %v1491 = vsel %vm915, 1.0, 0.0
  %v1492 = vsel %vm916, 1.0, 0.0
  %v1493 = vsel %vm917, 1.0, 0.0
  %v1494 = vsel %vm918, 1.0, 0.0
  %v1495 = vsel %vm919, 1.0, 0.0
  %v1496 = vsel %vm920, 1.0, 0.0
  %v1497 = vsel %vm921, 1.0, 0.0
  %v1498 = vsel %vm922, 1.0, 0.0
  %v1499 = vsel %vm923, 1.0, 0.0
  %v1500 = vsel %vm924, 1.0, 0.0
  %v1501 = vsel %vm925, 1.0, 0.0
  %v1502 = vsel %vm926, 1.0, 0.0
  %v1503 = vsel %vm927, 1.0, 0.0
  %v1504 = vsel %vm928, 1.0, 0.0
  %v1505 = vsel %vm929, 1.0, 0.0
  %v1506 = vsel %vm930, 1.0, 0.0
  %v1507 = vsel %vm931, 1.0, 0.0
  %v1508 = vsel %vm932, 1.0, 0.0
  %v1509 = vsel %vm933, 1.0, 0.0
  %v1510 = vsel %vm934, 1.0, 0.0
  %v1511 = vsel %vm935, 1.0, 0.0
  %v1512 = vsel %vm936, 1.0, 0.0
  %v1513 = vsel %vm937, 1.0, 0.0
  %v1514 = vsel %vm938, 1.0, 0.0
  %v1515 = vsel %vm939, 1.0, 0.0
  %v1516 = vsel %vm940, 1.0, 0.0
  %v1517 = vsel %vm941, 1.0, 0.0
  %v1518 = vsel %vm942, 1.0, 0.0
  %v1519 = vsel %vm943, 1.0, 0.0
  %v1520 = vsel %vm944, 1.0, 0.0
  %v1521 = vsel %vm945, 1.0, 0.0
  %v1522 = vsel %vm946, 1.0, 0.0
  %v1523 = vsel %vm947, 1.0, 0.0
  %v1524 = vsel %vm948, 1.0, 0.0
  %v1525 = vsel %vm949, 1.0, 0.0
  %v1526 = vsel %vm950, 1.0, 0.0
  %v1527 = vsel %vm951, 1.0, 0.0
  %v1528 = vsel %vm952, 1.0, 0.0
  %v1529 = vsel %vm953, 1.0, 0.0
  %v1530 = vsel %vm954, 1.0, 0.0
  %v1531 = vsel %vm955, 1.0, 0.0
  %v1532 = vsel %vm956, 1.0, 0.0
  %v1533 = vpack.c.bf16 %v966, %v957
  %v1534 = vpack.c.bf16 %v967, %v958
  %v1535 = vpack.c.bf16 %v968, %v959
  %v1536 = vpack.c.bf16 %v969, %v960
  %v1537 = vpack.c.bf16 %v970, %v961
  %v1538 = vpack.c.bf16 %v971, %v962
  %v1539 = vpack.c.bf16 %v972, %v963
  %v1540 = vpack.c.bf16 %v973, %v964
  %v1541 = vpack.c.bf16 %v974, %v965
  %v1542 = vpack.c.bf16 %v984, %v975
  %v1543 = vpack.c.bf16 %v985, %v976
  %v1544 = vpack.c.bf16 %v986, %v977
  %v1545 = vpack.c.bf16 %v987, %v978
  %v1546 = vpack.c.bf16 %v988, %v979
  %v1547 = vpack.c.bf16 %v989, %v980
  %v1548 = vpack.c.bf16 %v990, %v981
  %v1549 = vpack.c.bf16 %v991, %v982
  %v1550 = vpack.c.bf16 %v992, %v983
  %v1551 = vpack.c.bf16 %v1002, %v993
  %v1552 = vpack.c.bf16 %v1003, %v994
  %v1553 = vpack.c.bf16 %v1004, %v995
  %v1554 = vpack.c.bf16 %v1005, %v996
  %v1555 = vpack.c.bf16 %v1006, %v997
  %v1556 = vpack.c.bf16 %v1007, %v998
  %v1557 = vpack.c.bf16 %v1008, %v999
  %v1558 = vpack.c.bf16 %v1009, %v1000
  %v1559 = vpack.c.bf16 %v1010, %v1001
  %v1560 = vpack.c.bf16 %v1020, %v1011
  %v1561 = vpack.c.bf16 %v1021, %v1012
  %v1562 = vpack.c.bf16 %v1022, %v1013
  %v1563 = vpack.c.bf16 %v1023, %v1014
  %v1564 = vpack.c.bf16 %v1024, %v1015
  %v1565 = vpack.c.bf16 %v1025, %v1016
  %v1566 = vpack.c.bf16 %v1026, %v1017
  %v1567 = vpack.c.bf16 %v1027, %v1018
  %v1568 = vpack.c.bf16 %v1028, %v1019
  %v1569 = vpack.c.bf16 %v1038, %v1029
  %v1570 = vpack.c.bf16 %v1039, %v1030
  %v1571 = vpack.c.bf16 %v1040, %v1031
  %v1572 = vpack.c.bf16 %v1041, %v1032
  %v1573 = vpack.c.bf16 %v1042, %v1033
  %v1574 = vpack.c.bf16 %v1043, %v1034
  %v1575 = vpack.c.bf16 %v1044, %v1035
  %v1576 = vpack.c.bf16 %v1045, %v1036
  %v1577 = vpack.c.bf16 %v1046, %v1037
  %v1578 = vpack.c.bf16 %v1056, %v1047
  %v1579 = vpack.c.bf16 %v1057, %v1048
  %v1580 = vpack.c.bf16 %v1058, %v1049
  %v1581 = vpack.c.bf16 %v1059, %v1050
  %v1582 = vpack.c.bf16 %v1060, %v1051
  %v1583 = vpack.c.bf16 %v1061, %v1052
  %v1584 = vpack.c.bf16 %v1062, %v1053
  %v1585 = vpack.c.bf16 %v1063, %v1054
  %v1586 = vpack.c.bf16 %v1064, %v1055
  %v1587 = vpack.c.bf16 %v1074, %v1065
  %v1588 = vpack.c.bf16 %v1075, %v1066
  %v1589 = vpack.c.bf16 %v1076, %v1067
  %v1590 = vpack.c.bf16 %v1077, %v1068
  %v1591 = vpack.c.bf16 %v1078, %v1069
  %v1592 = vpack.c.bf16 %v1079, %v1070
  %v1593 = vpack.c.bf16 %v1080, %v1071
  %v1594 = vpack.c.bf16 %v1081, %v1072
  %v1595 = vpack.c.bf16 %v1082, %v1073
  %v1596 = vpack.c.bf16 %v1092, %v1083
  %v1597 = vpack.c.bf16 %v1093, %v1084
  %v1598 = vpack.c.bf16 %v1094, %v1085
  %v1599 = vpack.c.bf16 %v1095, %v1086
  %v1600 = vpack.c.bf16 %v1096, %v1087
  %v1601 = vpack.c.bf16 %v1097, %v1088
  %v1602 = vpack.c.bf16 %v1098, %v1089
  %v1603 = vpack.c.bf16 %v1099, %v1090
  %v1604 = vpack.c.bf16 %v1100, %v1091
  %v1605 = vpack.c.bf16 %v1110, %v1101
  %v1606 = vpack.c.bf16 %v1111, %v1102
  %v1607 = vpack.c.bf16 %v1112, %v1103
  %v1608 = vpack.c.bf16 %v1113, %v1104
  %v1609 = vpack.c.bf16 %v1114, %v1105
  %v1610 = vpack.c.bf16 %v1115, %v1106
  %v1611 = vpack.c.bf16 %v1116, %v1107
  %v1612 = vpack.c.bf16 %v1117, %v1108
  %v1613 = vpack.c.bf16 %v1118, %v1109
  %v1614 = vpack.c.bf16 %v1128, %v1119
  %v1615 = vpack.c.bf16 %v1129, %v1120
  %v1616 = vpack.c.bf16 %v1130, %v1121
  %v1617 = vpack.c.bf16 %v1131, %v1122
  %v1618 = vpack.c.bf16 %v1132, %v1123
  %v1619 = vpack.c.bf16 %v1133, %v1124
  %v1620 = vpack.c.bf16 %v1134, %v1125
  %v1621 = vpack.c.bf16 %v1135, %v1126
  %v1622 = vpack.c.bf16 %v1136, %v1127
  %v1623 = vpack.c.bf16 %v1146, %v1137
  %v1624 = vpack.c.bf16 %v1147, %v1138
  %v1625 = vpack.c.bf16 %v1148, %v1139
  %v1626 = vpack.c.bf16 %v1149, %v1140
  %v1627 = vpack.c.bf16 %v1150, %v1141
  %v1628 = vpack.c.bf16 %v1151, %v1142
  %v1629 = vpack.c.bf16 %v1152, %v1143
  %v1630 = vpack.c.bf16 %v1153, %v1144
  %v1631 = vpack.c.bf16 %v1154, %v1145
  %v1632 = vpack.c.bf16 %v1164, %v1155
  %v1633 = vpack.c.bf16 %v1165, %v1156
  %v1634 = vpack.c.bf16 %v1166, %v1157
  %v1635 = vpack.c.bf16 %v1167, %v1158
  %v1636 = vpack.c.bf16 %v1168, %v1159
  %v1637 = vpack.c.bf16 %v1169, %v1160
  %v1638 = vpack.c.bf16 %v1170, %v1161
  %v1639 = vpack.c.bf16 %v1171, %v1162
  %v1640 = vpack.c.bf16 %v1172, %v1163
  %v1641 = vpack.c.bf16 %v1182, %v1173
  %v1642 = vpack.c.bf16 %v1183, %v1174
  %v1643 = vpack.c.bf16 %v1184, %v1175
  %v1644 = vpack.c.bf16 %v1185, %v1176
  %v1645 = vpack.c.bf16 %v1186, %v1177
  %v1646 = vpack.c.bf16 %v1187, %v1178
  %v1647 = vpack.c.bf16 %v1188, %v1179
  %v1648 = vpack.c.bf16 %v1189, %v1180
  %v1649 = vpack.c.bf16 %v1190, %v1181
  %v1650 = vpack.c.bf16 %v1200, %v1191
  %v1651 = vpack.c.bf16 %v1201, %v1192
  %v1652 = vpack.c.bf16 %v1202, %v1193
  %v1653 = vpack.c.bf16 %v1203, %v1194
  %v1654 = vpack.c.bf16 %v1204, %v1195
  %v1655 = vpack.c.bf16 %v1205, %v1196
  %v1656 = vpack.c.bf16 %v1206, %v1197
  %v1657 = vpack.c.bf16 %v1207, %v1198
  %v1658 = vpack.c.bf16 %v1208, %v1199
  %v1659 = vpack.c.bf16 %v1218, %v1209
  %v1660 = vpack.c.bf16 %v1219, %v1210
  %v1661 = vpack.c.bf16 %v1220, %v1211
  %v1662 = vpack.c.bf16 %v1221, %v1212
  %v1663 = vpack.c.bf16 %v1222, %v1213
  %v1664 = vpack.c.bf16 %v1223, %v1214
  %v1665 = vpack.c.bf16 %v1224, %v1215
  %v1666 = vpack.c.bf16 %v1225, %v1216
  %v1667 = vpack.c.bf16 %v1226, %v1217
  %v1668 = vpack.c.bf16 %v1236, %v1227
  %v1669 = vpack.c.bf16 %v1237, %v1228
  %v1670 = vpack.c.bf16 %v1238, %v1229
  %v1671 = vpack.c.bf16 %v1239, %v1230
  %v1672 = vpack.c.bf16 %v1240, %v1231
  %v1673 = vpack.c.bf16 %v1241, %v1232
  %v1674 = vpack.c.bf16 %v1242, %v1233
  %v1675 = vpack.c.bf16 %v1243, %v1234
  %v1676 = vpack.c.bf16 %v1244, %v1235
  %v1677 = vpack.c.bf16 %v1254, %v1245
  %v1678 = vpack.c.bf16 %v1255, %v1246
  %v1679 = vpack.c.bf16 %v1256, %v1247
  %v1680 = vpack.c.bf16 %v1257, %v1248
  %v1681 = vpack.c.bf16 %v1258, %v1249
  %v1682 = vpack.c.bf16 %v1259, %v1250
  %v1683 = vpack.c.bf16 %v1260, %v1251
  %v1684 = vpack.c.bf16 %v1261, %v1252
  %v1685 = vpack.c.bf16 %v1262, %v1253
  %v1686 = vpack.c.bf16 %v1272, %v1263
  %v1687 = vpack.c.bf16 %v1273, %v1264
  %v1688 = vpack.c.bf16 %v1274, %v1265
  %v1689 = vpack.c.bf16 %v1275, %v1266
  %v1690 = vpack.c.bf16 %v1276, %v1267
  %v1691 = vpack.c.bf16 %v1277, %v1268
  %v1692 = vpack.c.bf16 %v1278, %v1269
  %v1693 = vpack.c.bf16 %v1279, %v1270
  %v1694 = vpack.c.bf16 %v1280, %v1271
  %v1695 = vpack.c.bf16 %v1290, %v1281
  %v1696 = vpack.c.bf16 %v1291, %v1282
  %v1697 = vpack.c.bf16 %v1292, %v1283
  %v1698 = vpack.c.bf16 %v1293, %v1284
  %v1699 = vpack.c.bf16 %v1294, %v1285
  %v1700 = vpack.c.bf16 %v1295, %v1286
  %v1701 = vpack.c.bf16 %v1296, %v1287
  %v1702 = vpack.c.bf16 %v1297, %v1288
  %v1703 = vpack.c.bf16 %v1298, %v1289
  %v1704 = vpack.c.bf16 %v1308, %v1299
  %v1705 = vpack.c.bf16 %v1309, %v1300
  %v1706 = vpack.c.bf16 %v1310, %v1301
  %v1707 = vpack.c.bf16 %v1311, %v1302
  %v1708 = vpack.c.bf16 %v1312, %v1303
  %v1709 = vpack.c.bf16 %v1313, %v1304
  %v1710 = vpack.c.bf16 %v1314, %v1305
  %v1711 = vpack.c.bf16 %v1315, %v1306
  %v1712 = vpack.c.bf16 %v1316, %v1307
  %v1713 = vpack.c.bf16 %v1326, %v1317
  %v1714 = vpack.c.bf16 %v1327, %v1318
  %v1715 = vpack.c.bf16 %v1328, %v1319
  %v1716 = vpack.c.bf16 %v1329, %v1320
  %v1717 = vpack.c.bf16 %v1330, %v1321
  %v1718 = vpack.c.bf16 %v1331, %v1322
  %v1719 = vpack.c.bf16 %v1332, %v1323
  %v1720 = vpack.c.bf16 %v1333, %v1324
  %v1721 = vpack.c.bf16 %v1334, %v1325
  %v1722 = vpack.c.bf16 %v1344, %v1335
  %v1723 = vpack.c.bf16 %v1345, %v1336
  %v1724 = vpack.c.bf16 %v1346, %v1337
  %v1725 = vpack.c.bf16 %v1347, %v1338
  %v1726 = vpack.c.bf16 %v1348, %v1339
  %v1727 = vpack.c.bf16 %v1349, %v1340
  %v1728 = vpack.c.bf16 %v1350, %v1341
  %v1729 = vpack.c.bf16 %v1351, %v1342
  %v1730 = vpack.c.bf16 %v1352, %v1343
  %v1731 = vpack.c.bf16 %v1362, %v1353
  %v1732 = vpack.c.bf16 %v1363, %v1354
  %v1733 = vpack.c.bf16 %v1364, %v1355
  %v1734 = vpack.c.bf16 %v1365, %v1356
  %v1735 = vpack.c.bf16 %v1366, %v1357
  %v1736 = vpack.c.bf16 %v1367, %v1358
  %v1737 = vpack.c.bf16 %v1368, %v1359
  %v1738 = vpack.c.bf16 %v1369, %v1360
  %v1739 = vpack.c.bf16 %v1370, %v1361
  %v1740 = vpack.c.bf16 %v1380, %v1371
  %v1741 = vpack.c.bf16 %v1381, %v1372
  %v1742 = vpack.c.bf16 %v1382, %v1373
  %v1743 = vpack.c.bf16 %v1383, %v1374
  %v1744 = vpack.c.bf16 %v1384, %v1375
  %v1745 = vpack.c.bf16 %v1385, %v1376
  %v1746 = vpack.c.bf16 %v1386, %v1377
  %v1747 = vpack.c.bf16 %v1387, %v1378
  %v1748 = vpack.c.bf16 %v1388, %v1379
  %v1749 = vpack.c.bf16 %v1398, %v1389
  %v1750 = vpack.c.bf16 %v1399, %v1390
  %v1751 = vpack.c.bf16 %v1400, %v1391
  %v1752 = vpack.c.bf16 %v1401, %v1392
  %v1753 = vpack.c.bf16 %v1402, %v1393
  %v1754 = vpack.c.bf16 %v1403, %v1394
  %v1755 = vpack.c.bf16 %v1404, %v1395
  %v1756 = vpack.c.bf16 %v1405, %v1396
  %v1757 = vpack.c.bf16 %v1406, %v1397
  %v1758 = vpack.c.bf16 %v1416, %v1407
  %v1759 = vpack.c.bf16 %v1417, %v1408
  %v1760 = vpack.c.bf16 %v1418, %v1409
  %v1761 = vpack.c.bf16 %v1419, %v1410
  %v1762 = vpack.c.bf16 %v1420, %v1411
  %v1763 = vpack.c.bf16 %v1421, %v1412
  %v1764 = vpack.c.bf16 %v1422, %v1413
  %v1765 = vpack.c.bf16 %v1423, %v1414
  %v1766 = vpack.c.bf16 %v1424, %v1415
  %v1767 = vpack.c.bf16 %v1434, %v1425
  %v1768 = vpack.c.bf16 %v1435, %v1426
  %v1769 = vpack.c.bf16 %v1436, %v1427
  %v1770 = vpack.c.bf16 %v1437, %v1428
  %v1771 = vpack.c.bf16 %v1438, %v1429
  %v1772 = vpack.c.bf16 %v1439, %v1430
  %v1773 = vpack.c.bf16 %v1440, %v1431
  %v1774 = vpack.c.bf16 %v1441, %v1432
  %v1775 = vpack.c.bf16 %v1442, %v1433
  %v1776 = vpack.c.bf16 %v1452, %v1443
  %v1777 = vpack.c.bf16 %v1453, %v1444
  %v1778 = vpack.c.bf16 %v1454, %v1445
  %v1779 = vpack.c.bf16 %v1455, %v1446
  %v1780 = vpack.c.bf16 %v1456, %v1447
  %v1781 = vpack.c.bf16 %v1457, %v1448
  %v1782 = vpack.c.bf16 %v1458, %v1449
  %v1783 = vpack.c.bf16 %v1459, %v1450
  %v1784 = vpack.c.bf16 %v1460, %v1451
  %v1785 = vpack.c.bf16 %v1470, %v1461
  %v1786 = vpack.c.bf16 %v1471, %v1462
  %v1787 = vpack.c.bf16 %v1472, %v1463
  %v1788 = vpack.c.bf16 %v1473, %v1464
  %v1789 = vpack.c.bf16 %v1474, %v1465
  %v1790 = vpack.c.bf16 %v1475, %v1466
  %v1791 = vpack.c.bf16 %v1476, %v1467
  %v1792 = vpack.c.bf16 %v1477, %v1468
  %v1793 = vpack.c.bf16 %v1478, %v1469
  %v1794 = vpack.c.bf16 %v1488, %v1479
  %v1795 = vpack.c.bf16 %v1489, %v1480
  %v1796 = vpack.c.bf16 %v1490, %v1481
  %v1797 = vpack.c.bf16 %v1491, %v1482
  %v1798 = vpack.c.bf16 %v1492, %v1483
  %v1799 = vpack.c.bf16 %v1493, %v1484
  %v1800 = vpack.c.bf16 %v1494, %v1485
  %v1801 = vpack.c.bf16 %v1495, %v1486
  %v1802 = vpack.c.bf16 %v1496, %v1487
  %v1803 = vpack.c.bf16 %v1506, %v1497
  %v1804 = vpack.c.bf16 %v1507, %v1498
  %v1805 = vpack.c.bf16 %v1508, %v1499
  %v1806 = vpack.c.bf16 %v1509, %v1500
  %v1807 = vpack.c.bf16 %v1510, %v1501
  %v1808 = vpack.c.bf16 %v1511, %v1502
  %v1809 = vpack.c.bf16 %v1512, %v1503
  %v1810 = vpack.c.bf16 %v1513, %v1504
  %v1811 = vpack.c.bf16 %v1514, %v1505
  %v1812 = vpack.c.bf16 %v1524, %v1515
  %v1813 = vpack.c.bf16 %v1525, %v1516
  %v1814 = vpack.c.bf16 %v1526, %v1517
  %v1815 = vpack.c.bf16 %v1527, %v1518
  %v1816 = vpack.c.bf16 %v1528, %v1519
  %v1817 = vpack.c.bf16 %v1529, %v1520
  %v1818 = vpack.c.bf16 %v1530, %v1521
  %v1819 = vpack.c.bf16 %v1531, %v1522
  %v1820 = vpack.c.bf16 %v1532, %v1523
  %1821 = vmatprep.subr.bf16.mxu0 %v1534
  %1822 = vmatpush1.bf16.msra.mxu0 %v1533
  %1823 = vmatprep.subr.bf16.mxu0 %v1543
  %1824 = vmatpush1.bf16.msra.mxu0 %v1542
  %1825 = vmatprep.subr.bf16.mxu0 %v1552
  %1826 = vmatpush1.bf16.msra.mxu0 %v1551
  %1827 = vmatprep.subr.bf16.mxu0 %v1561
  %1828 = vmatpush1.bf16.msra.mxu0 %v1560
  %1829 = vmatprep.subr.bf16.mxu0 %v1570
  %1830 = vmatpush1.bf16.msra.mxu0 %v1569
  %1831 = vmatprep.subr.bf16.mxu0 %v1579
  %1832 = vmatpush1.bf16.msra.mxu0 %v1578
  %1833 = vmatprep.subr.bf16.mxu0 %v1588
  %1834 = vmatpush1.bf16.msra.mxu0 %v1587
  %1835 = vmatprep.subr.bf16.mxu0 %v1597
  %1836 = vmatpush1.bf16.msra.mxu0 %v1596
  %1837 = vmatprep.subr.bf16.mxu0 %v1606
  %1838 = vmatpush1.bf16.msra.mxu0 %v1605
  %1839 = vmatprep.subr.bf16.mxu0 %v1615
  %1840 = vmatpush1.bf16.msra.mxu0 %v1614
  %1841 = vmatprep.subr.bf16.mxu0 %v1624
  %1842 = vmatpush1.bf16.msra.mxu0 %v1623
  %1843 = vmatprep.subr.bf16.mxu0 %v1633
  %1844 = vmatpush1.bf16.msra.mxu0 %v1632
  %1845 = vmatprep.subr.bf16.mxu0 %v1642
  %1846 = vmatpush1.bf16.msra.mxu0 %v1641
  %1847 = vmatprep.subr.bf16.mxu0 %v1651
  %1848 = vmatpush1.bf16.msra.mxu0 %v1650
  %1849 = vmatprep.subr.bf16.mxu0 %v1660
  %1850 = vmatpush1.bf16.msra.mxu0 %v1659
  %1851 = vmatprep.subr.bf16.mxu0 %v1669
  %1852 = vmatpush1.bf16.msra.mxu0 %v1668
  %1853 = vmatprep.mubr.bf16.mxu0 %v275
  %1854 = vmatmul.mubr.bf16.gmra.mrb[0].mxu0 %v274
  %v1855 = vpop.f32.mrb[0].mxu0
  %v1856 = vadd.f32 0.0, %v1855
  %v1857 = vpop.f32.mrb[0].mxu0
  %v1858 = vadd.f32 0.0, %v1857
  %v1859 = vpop.f32.mrb[0].mxu0
  %v1860 = vpop.f32.mrb[0].mxu0
  %1861 = vdwg.mxu0
  %1862 = vmatprep.subr.bf16.mxu0 %v1678
  %1863 = vmatpush1.bf16.msra.mxu0 %v1677
  %1864 = vmatprep.subr.bf16.mxu0 %v1687
  %1865 = vmatpush1.bf16.msra.mxu0 %v1686
  %1866 = vmatprep.subr.bf16.mxu0 %v1696
  %1867 = vmatpush1.bf16.msra.mxu0 %v1695
  %1868 = vmatprep.subr.bf16.mxu0 %v1705
  %1869 = vmatpush1.bf16.msra.mxu0 %v1704
  %1870 = vmatprep.subr.bf16.mxu0 %v1714
  %1871 = vmatpush1.bf16.msra.mxu0 %v1713
  %1872 = vmatprep.subr.bf16.mxu0 %v1723
  %1873 = vmatpush1.bf16.msra.mxu0 %v1722
  %1874 = vmatprep.subr.bf16.mxu0 %v1732
  %1875 = vmatpush1.bf16.msra.mxu0 %v1731
  %1876 = vmatprep.subr.bf16.mxu0 %v1741
  %1877 = vmatpush1.bf16.msra.mxu0 %v1740
  %1878 = vmatprep.subr.bf16.mxu0 %v1750
  %1879 = vmatpush1.bf16.msra.mxu0 %v1749
  %1880 = vmatprep.subr.bf16.mxu0 %v1759
  %1881 = vmatpush1.bf16.msra.mxu0 %v1758
  %1882 = vmatprep.subr.bf16.mxu0 %v1768
  %1883 = vmatpush1.bf16.msra.mxu0 %v1767
  %1884 = vmatprep.subr.bf16.mxu0 %v1777
  %1885 = vmatpush1.bf16.msra.mxu0 %v1776
  %1886 = vmatprep.subr.bf16.mxu0 %v1786
  %1887 = vmatpush1.bf16.msra.mxu0 %v1785
  %1888 = vmatprep.subr.bf16.mxu0 %v1795
  %1889 = vmatpush1.bf16.msra.mxu0 %v1794
  %1890 = vmatprep.subr.bf16.mxu0 %v1804
  %1891 = vmatpush1.bf16.msra.mxu0 %v1803
  %1892 = vmatprep.subr.bf16.mxu0 %v1813
  %1893 = vmatpush1.bf16.msra.mxu0 %v1812
  %1894 = vmatprep.mubr.bf16.mxu0 %v277
  %1895 = vmatmul.mubr.bf16.gmra.mrb[0].mxu0 %v276
  %v1896 = vpop.f32.mrb[0].mxu0
  %v1897 = vadd.f32 %v1856, %v1896
  %v1898 = vpop.f32.mrb[0].mxu0
  %v1899 = vadd.f32 %v1858, %v1898
  %v1900 = vpop.f32.mrb[0].mxu0
  %v1901 = vpop.f32.mrb[0].mxu0
  %1902 = vdwg.mxu0
  %1903 = vmatprep.subr.bf16.mxu0 %v1536
  %1904 = vmatpush1.bf16.msra.mxu0 %v1535
  %1905 = vmatprep.subr.bf16.mxu0 %v1545
  %1906 = vmatpush1.bf16.msra.mxu0 %v1544
  %1907 = vmatprep.subr.bf16.mxu0 %v1554
  %1908 = vmatpush1.bf16.msra.mxu0 %v1553
  %1909 = vmatprep.subr.bf16.mxu0 %v1563
  %1910 = vmatpush1.bf16.msra.mxu0 %v1562
  %1911 = vmatprep.subr.bf16.mxu0 %v1572
  %1912 = vmatpush1.bf16.msra.mxu0 %v1571
  %1913 = vmatprep.subr.bf16.mxu0 %v1581
  %1914 = vmatpush1.bf16.msra.mxu0 %v1580
  %1915 = vmatprep.subr.bf16.mxu0 %v1590
  %1916 = vmatpush1.bf16.msra.mxu0 %v1589
  %1917 = vmatprep.subr.bf16.mxu0 %v1599
  %1918 = vmatpush1.bf16.msra.mxu0 %v1598
  %1919 = vmatprep.subr.bf16.mxu0 %v1608
  %1920 = vmatpush1.bf16.msra.mxu0 %v1607
  %1921 = vmatprep.subr.bf16.mxu0 %v1617
  %1922 = vmatpush1.bf16.msra.mxu0 %v1616
  %1923 = vmatprep.subr.bf16.mxu0 %v1626
  %1924 = vmatpush1.bf16.msra.mxu0 %v1625
  %1925 = vmatprep.subr.bf16.mxu0 %v1635
  %1926 = vmatpush1.bf16.msra.mxu0 %v1634
  %1927 = vmatprep.subr.bf16.mxu0 %v1644
  %1928 = vmatpush1.bf16.msra.mxu0 %v1643
  %1929 = vmatprep.subr.bf16.mxu0 %v1653
  %1930 = vmatpush1.bf16.msra.mxu0 %v1652
  %1931 = vmatprep.subr.bf16.mxu0 %v1662
  %1932 = vmatpush1.bf16.msra.mxu0 %v1661
  %1933 = vmatprep.subr.bf16.mxu0 %v1671
  %1934 = vmatpush1.bf16.msra.mxu0 %v1670
  %1935 = vmatprep.mubr.bf16.mxu0 %v275
  %1936 = vmatmul.mubr.bf16.gmra.mrb[0].mxu0 %v274
  %v1937 = vpop.f32.mrb[0].mxu0
  %v1938 = vadd.f32 0.0, %v1937
  %v1939 = vpop.f32.mrb[0].mxu0
  %v1940 = vadd.f32 0.0, %v1939
  %v1941 = vpop.f32.mrb[0].mxu0
  %v1942 = vpop.f32.mrb[0].mxu0
  %1943 = vdwg.mxu0
  %1944 = vmatprep.subr.bf16.mxu0 %v1680
  %1945 = vmatpush1.bf16.msra.mxu0 %v1679
  %1946 = vmatprep.subr.bf16.mxu0 %v1689
  %1947 = vmatpush1.bf16.msra.mxu0 %v1688
  %1948 = vmatprep.subr.bf16.mxu0 %v1698
  %1949 = vmatpush1.bf16.msra.mxu0 %v1697
  %1950 = vmatprep.subr.bf16.mxu0 %v1707
  %1951 = vmatpush1.bf16.msra.mxu0 %v1706
  %1952 = vmatprep.subr.bf16.mxu0 %v1716
  %1953 = vmatpush1.bf16.msra.mxu0 %v1715
  %1954 = vmatprep.subr.bf16.mxu0 %v1725
  %1955 = vmatpush1.bf16.msra.mxu0 %v1724
  %1956 = vmatprep.subr.bf16.mxu0 %v1734
  %1957 = vmatpush1.bf16.msra.mxu0 %v1733
  %1958 = vmatprep.subr.bf16.mxu0 %v1743
  %1959 = vmatpush1.bf16.msra.mxu0 %v1742
  %1960 = vmatprep.subr.bf16.mxu0 %v1752
  %1961 = vmatpush1.bf16.msra.mxu0 %v1751
  %1962 = vmatprep.subr.bf16.mxu0 %v1761
  %1963 = vmatpush1.bf16.msra.mxu0 %v1760
  %1964 = vmatprep.subr.bf16.mxu0 %v1770
  %1965 = vmatpush1.bf16.msra.mxu0 %v1769
  %1966 = vmatprep.subr.bf16.mxu0 %v1779
  %1967 = vmatpush1.bf16.msra.mxu0 %v1778
  %1968 = vmatprep.subr.bf16.mxu0 %v1788
  %1969 = vmatpush1.bf16.msra.mxu0 %v1787
  %1970 = vmatprep.subr.bf16.mxu0 %v1797
  %1971 = vmatpush1.bf16.msra.mxu0 %v1796
  %1972 = vmatprep.subr.bf16.mxu0 %v1806
  %1973 = vmatpush1.bf16.msra.mxu0 %v1805
  %1974 = vmatprep.subr.bf16.mxu0 %v1815
  %1975 = vmatpush1.bf16.msra.mxu0 %v1814
  %1976 = vmatprep.mubr.bf16.mxu0 %v277
  %1977 = vmatmul.mubr.bf16.gmra.mrb[0].mxu0 %v276
  %v1978 = vpop.f32.mrb[0].mxu0
  %v1979 = vadd.f32 %v1938, %v1978
  %v1980 = vpop.f32.mrb[0].mxu0
  %v1981 = vadd.f32 %v1940, %v1980
  %v1982 = vpop.f32.mrb[0].mxu0
  %v1983 = vpop.f32.mrb[0].mxu0
  %1984 = vdwg.mxu0
  %1985 = vmatprep.subr.bf16.mxu0 %v1538
  %1986 = vmatpush1.bf16.msra.mxu0 %v1537
  %1987 = vmatprep.subr.bf16.mxu0 %v1547
  %1988 = vmatpush1.bf16.msra.mxu0 %v1546
  %1989 = vmatprep.subr.bf16.mxu0 %v1556
  %1990 = vmatpush1.bf16.msra.mxu0 %v1555
  %1991 = vmatprep.subr.bf16.mxu0 %v1565
  %1992 = vmatpush1.bf16.msra.mxu0 %v1564
  %1993 = vmatprep.subr.bf16.mxu0 %v1574
  %1994 = vmatpush1.bf16.msra.mxu0 %v1573
  %1995 = vmatprep.subr.bf16.mxu0 %v1583
  %1996 = vmatpush1.bf16.msra.mxu0 %v1582
  %1997 = vmatprep.subr.bf16.mxu0 %v1592
  %1998 = vmatpush1.bf16.msra.mxu0 %v1591
  %1999 = vmatprep.subr.bf16.mxu0 %v1601
  %2000 = vmatpush1.bf16.msra.mxu0 %v1600
  %2001 = vmatprep.subr.bf16.mxu0 %v1610
  %2002 = vmatpush1.bf16.msra.mxu0 %v1609
  %2003 = vmatprep.subr.bf16.mxu0 %v1619
  %2004 = vmatpush1.bf16.msra.mxu0 %v1618
  %2005 = vmatprep.subr.bf16.mxu0 %v1628
  %2006 = vmatpush1.bf16.msra.mxu0 %v1627
  %2007 = vmatprep.subr.bf16.mxu0 %v1637
  %2008 = vmatpush1.bf16.msra.mxu0 %v1636
  %2009 = vmatprep.subr.bf16.mxu0 %v1646
  %2010 = vmatpush1.bf16.msra.mxu0 %v1645
  %2011 = vmatprep.subr.bf16.mxu0 %v1655
  %2012 = vmatpush1.bf16.msra.mxu0 %v1654
  %2013 = vmatprep.subr.bf16.mxu0 %v1664
  %2014 = vmatpush1.bf16.msra.mxu0 %v1663
  %2015 = vmatprep.subr.bf16.mxu0 %v1673
  %2016 = vmatpush1.bf16.msra.mxu0 %v1672
  %2017 = vmatprep.mubr.bf16.mxu0 %v275
  %2018 = vmatmul.mubr.bf16.gmra.mrb[0].mxu0 %v274
  %v2019 = vpop.f32.mrb[0].mxu0
  %v2020 = vadd.f32 0.0, %v2019
  %v2021 = vpop.f32.mrb[0].mxu0
  %v2022 = vadd.f32 0.0, %v2021
  %v2023 = vpop.f32.mrb[0].mxu0
  %v2024 = vpop.f32.mrb[0].mxu0
  %2025 = vdwg.mxu0
  %2026 = vmatprep.subr.bf16.mxu0 %v1682
  %2027 = vmatpush1.bf16.msra.mxu0 %v1681
  %2028 = vmatprep.subr.bf16.mxu0 %v1691
  %2029 = vmatpush1.bf16.msra.mxu0 %v1690
  %2030 = vmatprep.subr.bf16.mxu0 %v1700
  %2031 = vmatpush1.bf16.msra.mxu0 %v1699
  %2032 = vmatprep.subr.bf16.mxu0 %v1709
  %2033 = vmatpush1.bf16.msra.mxu0 %v1708
  %2034 = vmatprep.subr.bf16.mxu0 %v1718
  %2035 = vmatpush1.bf16.msra.mxu0 %v1717
  %2036 = vmatprep.subr.bf16.mxu0 %v1727
  %2037 = vmatpush1.bf16.msra.mxu0 %v1726
  %2038 = vmatprep.subr.bf16.mxu0 %v1736
  %2039 = vmatpush1.bf16.msra.mxu0 %v1735
  %2040 = vmatprep.subr.bf16.mxu0 %v1745
  %2041 = vmatpush1.bf16.msra.mxu0 %v1744
  %2042 = vmatprep.subr.bf16.mxu0 %v1754
  %2043 = vmatpush1.bf16.msra.mxu0 %v1753
  %2044 = vmatprep.subr.bf16.mxu0 %v1763
  %2045 = vmatpush1.bf16.msra.mxu0 %v1762
  %2046 = vmatprep.subr.bf16.mxu0 %v1772
  %2047 = vmatpush1.bf16.msra.mxu0 %v1771
  %2048 = vmatprep.subr.bf16.mxu0 %v1781
  %2049 = vmatpush1.bf16.msra.mxu0 %v1780
  %2050 = vmatprep.subr.bf16.mxu0 %v1790
  %2051 = vmatpush1.bf16.msra.mxu0 %v1789
  %2052 = vmatprep.subr.bf16.mxu0 %v1799
  %2053 = vmatpush1.bf16.msra.mxu0 %v1798
  %2054 = vmatprep.subr.bf16.mxu0 %v1808
  %2055 = vmatpush1.bf16.msra.mxu0 %v1807
  %2056 = vmatprep.subr.bf16.mxu0 %v1817
  %2057 = vmatpush1.bf16.msra.mxu0 %v1816
  %2058 = vmatprep.mubr.bf16.mxu0 %v277
  %2059 = vmatmul.mubr.bf16.gmra.mrb[0].mxu0 %v276
  %v2060 = vpop.f32.mrb[0].mxu0
  %v2061 = vadd.f32 %v2020, %v2060
  %v2062 = vpop.f32.mrb[0].mxu0
  %v2063 = vadd.f32 %v2022, %v2062
  %v2064 = vpop.f32.mrb[0].mxu0
  %v2065 = vpop.f32.mrb[0].mxu0
  %2066 = vdwg.mxu0
  %2067 = vmatprep.subr.bf16.mxu0 %v1540
  %2068 = vmatpush1.bf16.msra.mxu0 %v1539
  %2069 = vmatprep.subr.bf16.mxu0 %v1549
  %2070 = vmatpush1.bf16.msra.mxu0 %v1548
  %2071 = vmatprep.subr.bf16.mxu0 %v1558
  %2072 = vmatpush1.bf16.msra.mxu0 %v1557
  %2073 = vmatprep.subr.bf16.mxu0 %v1567
  %2074 = vmatpush1.bf16.msra.mxu0 %v1566
  %2075 = vmatprep.subr.bf16.mxu0 %v1576
  %2076 = vmatpush1.bf16.msra.mxu0 %v1575
  %2077 = vmatprep.subr.bf16.mxu0 %v1585
  %2078 = vmatpush1.bf16.msra.mxu0 %v1584
  %2079 = vmatprep.subr.bf16.mxu0 %v1594
  %2080 = vmatpush1.bf16.msra.mxu0 %v1593
  %2081 = vmatprep.subr.bf16.mxu0 %v1603
  %2082 = vmatpush1.bf16.msra.mxu0 %v1602
  %2083 = vmatprep.subr.bf16.mxu0 %v1612
  %2084 = vmatpush1.bf16.msra.mxu0 %v1611
  %2085 = vmatprep.subr.bf16.mxu0 %v1621
  %2086 = vmatpush1.bf16.msra.mxu0 %v1620
  %2087 = vmatprep.subr.bf16.mxu0 %v1630
  %2088 = vmatpush1.bf16.msra.mxu0 %v1629
  %2089 = vmatprep.subr.bf16.mxu0 %v1639
  %2090 = vmatpush1.bf16.msra.mxu0 %v1638
  %2091 = vmatprep.subr.bf16.mxu0 %v1648
  %2092 = vmatpush1.bf16.msra.mxu0 %v1647
  %2093 = vmatprep.subr.bf16.mxu0 %v1657
  %2094 = vmatpush1.bf16.msra.mxu0 %v1656
  %2095 = vmatprep.subr.bf16.mxu0 %v1666
  %2096 = vmatpush1.bf16.msra.mxu0 %v1665
  %2097 = vmatprep.subr.bf16.mxu0 %v1675
  %2098 = vmatpush1.bf16.msra.mxu0 %v1674
  %2099 = vmatprep.mubr.bf16.mxu0 %v275
  %2100 = vmatmul.mubr.bf16.gmra.mrb[0].mxu0 %v274
  %v2101 = vpop.f32.mrb[0].mxu0
  %v2102 = vadd.f32 0.0, %v2101
  %v2103 = vpop.f32.mrb[0].mxu0
  %v2104 = vadd.f32 0.0, %v2103
  %v2105 = vpop.f32.mrb[0].mxu0
  %v2106 = vpop.f32.mrb[0].mxu0
  %2107 = vdwg.mxu0
  %2108 = vmatprep.subr.bf16.mxu0 %v1684
  %2109 = vmatpush1.bf16.msra.mxu0 %v1683
  %2110 = vmatprep.subr.bf16.mxu0 %v1693
  %2111 = vmatpush1.bf16.msra.mxu0 %v1692
  %2112 = vmatprep.subr.bf16.mxu0 %v1702
  %2113 = vmatpush1.bf16.msra.mxu0 %v1701
  %2114 = vmatprep.subr.bf16.mxu0 %v1711
  %2115 = vmatpush1.bf16.msra.mxu0 %v1710
  %2116 = vmatprep.subr.bf16.mxu0 %v1720
  %2117 = vmatpush1.bf16.msra.mxu0 %v1719
  %2118 = vmatprep.subr.bf16.mxu0 %v1729
  %2119 = vmatpush1.bf16.msra.mxu0 %v1728
  %2120 = vmatprep.subr.bf16.mxu0 %v1738
  %2121 = vmatpush1.bf16.msra.mxu0 %v1737
  %2122 = vmatprep.subr.bf16.mxu0 %v1747
  %2123 = vmatpush1.bf16.msra.mxu0 %v1746
  %2124 = vmatprep.subr.bf16.mxu0 %v1756
  %2125 = vmatpush1.bf16.msra.mxu0 %v1755
  %2126 = vmatprep.subr.bf16.mxu0 %v1765
  %2127 = vmatpush1.bf16.msra.mxu0 %v1764
  %2128 = vmatprep.subr.bf16.mxu0 %v1774
  %2129 = vmatpush1.bf16.msra.mxu0 %v1773
  %2130 = vmatprep.subr.bf16.mxu0 %v1783
  %2131 = vmatpush1.bf16.msra.mxu0 %v1782
  %2132 = vmatprep.subr.bf16.mxu0 %v1792
  %2133 = vmatpush1.bf16.msra.mxu0 %v1791
  %2134 = vmatprep.subr.bf16.mxu0 %v1801
  %2135 = vmatpush1.bf16.msra.mxu0 %v1800
  %2136 = vmatprep.subr.bf16.mxu0 %v1810
  %2137 = vmatpush1.bf16.msra.mxu0 %v1809
  %2138 = vmatprep.subr.bf16.mxu0 %v1819
  %2139 = vmatpush1.bf16.msra.mxu0 %v1818
  %2140 = vmatprep.mubr.bf16.mxu0 %v277
  %2141 = vmatmul.mubr.bf16.gmra.mrb[0].mxu0 %v276
  %v2142 = vpop.f32.mrb[0].mxu0
  %v2143 = vadd.f32 %v2102, %v2142
  %v2144 = vpop.f32.mrb[0].mxu0
  %v2145 = vadd.f32 %v2104, %v2144
  %v2146 = vpop.f32.mrb[0].mxu0
  %v2147 = vpop.f32.mrb[0].mxu0
  %2148 = vdwg.mxu0
  %2149 = vmatprep.subr.bf16.mxu0 0
  %2150 = vmatpush1.bf16.msra.mxu0 %v1541
  %2151 = vmatprep.subr.bf16.mxu0 0
  %2152 = vmatpush1.bf16.msra.mxu0 %v1550
  %2153 = vmatprep.subr.bf16.mxu0 0
  %2154 = vmatpush1.bf16.msra.mxu0 %v1559
  %2155 = vmatprep.subr.bf16.mxu0 0
  %2156 = vmatpush1.bf16.msra.mxu0 %v1568
  %2157 = vmatprep.subr.bf16.mxu0 0
  %2158 = vmatpush1.bf16.msra.mxu0 %v1577
  %2159 = vmatprep.subr.bf16.mxu0 0
  %2160 = vmatpush1.bf16.msra.mxu0 %v1586
  %2161 = vmatprep.subr.bf16.mxu0 0
  %2162 = vmatpush1.bf16.msra.mxu0 %v1595
  %2163 = vmatprep.subr.bf16.mxu0 0
  %2164 = vmatpush1.bf16.msra.mxu0 %v1604
  %2165 = vmatprep.subr.bf16.mxu0 0
  %2166 = vmatpush1.bf16.msra.mxu0 %v1613
  %2167 = vmatprep.subr.bf16.mxu0 0
  %2168 = vmatpush1.bf16.msra.mxu0 %v1622
  %2169 = vmatprep.subr.bf16.mxu0 0
  %2170 = vmatpush1.bf16.msra.mxu0 %v1631
  %2171 = vmatprep.subr.bf16.mxu0 0
  %2172 = vmatpush1.bf16.msra.mxu0 %v1640
  %2173 = vmatprep.subr.bf16.mxu0 0
  %2174 = vmatpush1.bf16.msra.mxu0 %v1649
  %2175 = vmatprep.subr.bf16.mxu0 0
  %2176 = vmatpush1.bf16.msra.mxu0 %v1658
  %2177 = vmatprep.subr.bf16.mxu0 0
  %2178 = vmatpush1.bf16.msra.mxu0 %v1667
  %2179 = vmatprep.subr.bf16.mxu0 0
  %2180 = vmatpush1.bf16.msra.mxu0 %v1676
  %2181 = vmatprep.mubr.bf16.mxu0 %v275
  %2182 = vmatmul.mubr.bf16.gmra.mrb[0].mxu0 %v274
  %v2183 = vpop.f32.mrb[0].mxu0
  %v2184 = vadd.f32 0.0, %v2183
  %v2185 = vpop.f32.mrb[0].mxu0
  %v2186 = vpop.f32.mrb[0].mxu0
  %v2187 = vpop.f32.mrb[0].mxu0
  %2188 = vdwg.mxu0
  %2189 = vmatprep.subr.bf16.mxu0 0
  %2190 = vmatpush1.bf16.msra.mxu0 %v1685
  %2191 = vmatprep.subr.bf16.mxu0 0
  %2192 = vmatpush1.bf16.msra.mxu0 %v1694
  %2193 = vmatprep.subr.bf16.mxu0 0
  %2194 = vmatpush1.bf16.msra.mxu0 %v1703
  %2195 = vmatprep.subr.bf16.mxu0 0
  %2196 = vmatpush1.bf16.msra.mxu0 %v1712
  %2197 = vmatprep.subr.bf16.mxu0 0
  %2198 = vmatpush1.bf16.msra.mxu0 %v1721
  %2199 = vmatprep.subr.bf16.mxu0 0
  %2200 = vmatpush1.bf16.msra.mxu0 %v1730
  %2201 = vmatprep.subr.bf16.mxu0 0
  %2202 = vmatpush1.bf16.msra.mxu0 %v1739
  %2203 = vmatprep.subr.bf16.mxu0 0
  %2204 = vmatpush1.bf16.msra.mxu0 %v1748
  %2205 = vmatprep.subr.bf16.mxu0 0
  %2206 = vmatpush1.bf16.msra.mxu0 %v1757
  %2207 = vmatprep.subr.bf16.mxu0 0
  %2208 = vmatpush1.bf16.msra.mxu0 %v1766
  %2209 = vmatprep.subr.bf16.mxu0 0
  %2210 = vmatpush1.bf16.msra.mxu0 %v1775
  %2211 = vmatprep.subr.bf16.mxu0 0
  %2212 = vmatpush1.bf16.msra.mxu0 %v1784
  %2213 = vmatprep.subr.bf16.mxu0 0
  %2214 = vmatpush1.bf16.msra.mxu0 %v1793
  %2215 = vmatprep.subr.bf16.mxu0 0
  %2216 = vmatpush1.bf16.msra.mxu0 %v1802
  %2217 = vmatprep.subr.bf16.mxu0 0
  %2218 = vmatpush1.bf16.msra.mxu0 %v1811
  %2219 = vmatprep.subr.bf16.mxu0 0
  %2220 = vmatpush1.bf16.msra.mxu0 %v1820
  %2221 = vmatprep.mubr.bf16.mxu0 %v277
  %2222 = vmatmul.mubr.bf16.gmra.mrb[0].mxu0 %v276
  %v2223 = vpop.f32.mrb[0].mxu0
  %v2224 = vadd.f32 %v2184, %v2223
  %v2225 = vpop.f32.mrb[0].mxu0
  %v2226 = vpop.f32.mrb[0].mxu0
  %v2227 = vpop.f32.mrb[0].mxu0
  %2228 = vdwg.mxu0
  %2229 = vst [vmem:[#allocation2] sm:$0xf] %v1897
  %2230 = vst [vmem:[#allocation2 + $0x4] sm:$0xf] %v1899
  %2231 = vst [vmem:[#allocation2 + $0x8] sm:$0xf] %v1979
  %2232 = vst [vmem:[#allocation2 + $0xc] sm:$0xf] %v1981
  %2233 = vst [vmem:[#allocation2 + $0x10] sm:$0xf] %v2061
  %2234 = vst [vmem:[#allocation2 + $0x14] sm:$0xf] %v2063
  %2235 = vst [vmem:[#allocation2 + $0x18] sm:$0xf] %v2143
  %2236 = vst [vmem:[#allocation2 + $0x1c] sm:$0xf] %v2145
  %2237 = vst [vmem:[#allocation2 + $0x20] sm:$0xf] %v2224
  %v2238 = vld [vmem:[%s5] sm:$0xf]
  %v2239 = vld [vmem:[#allocation2] sm:$0xff]
  %v2240 = vld [vmem:[#allocation2 + $0x8] sm:$0xff]
  %v2241 = vld [vmem:[#allocation2 + $0x10] sm:$0xff]
  %v2242 = vld [vmem:[#allocation2 + $0x18] sm:$0xff]
  %v2243 = vld [vmem:[#allocation2 + $0x20] sm:$0xf]
  %v2244 = vpack.c.bf16 %v2240, %v2239
  %v2245 = vpack.c.bf16 %v2242, %v2241
  %v2246 = vpack.c.bf16 %v2243, %v2243
  %v2248 = vsel %vm106, %v2238, 0
  %v2251 = vsel %vm110, %v2246, 0
  %2253 = vmatprep.subr.bf16.mxu0 0
  %2254 = vmatpush1.bf16.msra.mxu0 %v2244
  %2255 = vmatprep.subr.bf16.mxu0 0
  %2256 = vmatpush1.bf16.msra.mxu0 %v2245
  %2257 = vmatprep.subr.bf16.mxu0 0
  %2258 = vmatpush1.bf16.msra.mxu0 %v2251
  %2259 = vmatprep.subr.bf16.mxu0 0
  %2260 = vmatpush1.bf16.msra.mxu0 0
  %2261 = vmatprep.subr.bf16.mxu0 0
  %2262 = vmatpush1.bf16.msra.mxu0 0
  %2263 = vmatprep.subr.bf16.mxu0 0
  %2264 = vmatpush1.bf16.msra.mxu0 0
  %2265 = vmatprep.subr.bf16.mxu0 0
  %2266 = vmatpush1.bf16.msra.mxu0 0
  %2267 = vmatprep.subr.bf16.mxu0 0
  %2268 = vmatpush1.bf16.msra.mxu0 0
  %2269 = vmatprep.subr.bf16.mxu0 0
  %2270 = vmatpush1.bf16.msra.mxu0 0
  %2271 = vmatprep.subr.bf16.mxu0 0
  %2272 = vmatpush1.bf16.msra.mxu0 0
  %2273 = vmatprep.subr.bf16.mxu0 0
  %2274 = vmatpush1.bf16.msra.mxu0 0
  %2275 = vmatprep.subr.bf16.mxu0 0
  %2276 = vmatpush1.bf16.msra.mxu0 0
  %2277 = vmatprep.subr.bf16.mxu0 0
  %2278 = vmatpush1.bf16.msra.mxu0 0
  %2279 = vmatprep.subr.bf16.mxu0 0
  %2280 = vmatpush1.bf16.msra.mxu0 0
  %2281 = vmatprep.subr.bf16.mxu0 0
  %2282 = vmatpush1.bf16.msra.mxu0 0
  %2283 = vmatprep.subr.bf16.mxu0 0
  %2284 = vmatpush1.bf16.msra.mxu0 0
  %2285 = vmatprep.mubr.bf16.mxu0 0
  %2286 = vmatmul.mubr.bf16.gmra.mrb[0].mxu0 %v2248
  %v2287 = vpop.f32.mrb[0].mxu0
  %v2288 = vadd.f32 0.0, %v2287
  %v2289 = vpop.f32.mrb[0].mxu0
  %v2290 = vpop.f32.mrb[0].mxu0
  %v2291 = vpop.f32.mrb[0].mxu0
  %2292 = vdwg.mxu0
  %v2293 = vld [vmem:[%s6] sm:$0xff]
  %v2294 = vld [vmem:[%s7] sm:$0xff]
  %2295 = vadd.xlane.f32.xlu0 %v2288
  %v2296 = vpop.xlane.xlu0 %2295
  %v2297 = vmul.f32 %v2296, 0.0078125
  %v2298 = vmul.f32 %v2288, %v2288
  %2299 = vadd.xlane.f32.xlu0 %v2298
  %v2300 = vpop.xlane.xlu0 %2299
  %v2301 = vmul.f32 %v2300, 0.0078125
  %v2302 = vmul.f32 %v2297, %v2297
  %v2303 = vsub.f32 %v2301, %v2302
  %v2304 = vmax.f32 %v2303, 0.0
  %v2305 = vadd.f32 %v2304, 1e-05
  %v2306 = vrsqrt.pop %v2305
  %v2307 = vsub.f32 %v2288, %v2297
  %v2308 = vmul.f32 %v2293, %v2306
  %2310 = vset.pattern.permute.xlu0 0
  %2311 = vperm.xlu0 %2310, %v2308
  %v2312 = vpop.permute.xlu0 %2311
  %v2314 = vmul.f32 %v2307, %v2312
  %2316 = vset.pattern.permute.xlu0 0
  %2317 = vperm.xlu0 %2316, %v2294
  %v2318 = vpop.permute.xlu0 %2317
  %v2320 = vadd.f32 %v2314, %v2318
  %v2321 = vmax.f32 %v2320, 0.0
  %2322 = vst [vmem:[%s13] sm:$0xff] %v2321
  %v2323 = vpack.c.bf16 %v2321, %v2321
  %v2324 = vld [vmem:[%s8] sm:$0x7]
  %v2325 = vlaneseq
  %v2326 = vshrl.u32 %v2325, 7
  %v2327 = vsub.s32 0, %v2326
  %v2328 = vrot.slane %v2324, %v2327
  %v2329 = vlaneseq
  %v2330 = vshrl.u32 %v2329, 7
  %v2331 = vsub.s32 1, %v2330
  %v2332 = vrot.slane %v2324, %v2331
  %v2333 = vlaneseq
  %v2334 = vshrl.u32 %v2333, 7
  %v2335 = vsub.s32 2, %v2334
  %v2336 = vrot.slane %v2324, %v2335
  %vm2337 = vcmp.eq.s32.totalorder %v279, %v2328
  %vm2338 = vcmp.eq.s32.totalorder %v279, %v2332
  %vm2339 = vcmp.eq.s32.totalorder %v279, %v2336
  %vm2340 = vcmp.eq.s32.totalorder %v280, %v2328
  %vm2341 = vcmp.eq.s32.totalorder %v280, %v2332
  %vm2342 = vcmp.eq.s32.totalorder %v280, %v2336
  %vm2343 = vcmp.eq.s32.totalorder %v281, %v2328
  %vm2344 = vcmp.eq.s32.totalorder %v281, %v2332
  %vm2345 = vcmp.eq.s32.totalorder %v281, %v2336
  %vm2346 = vcmp.eq.s32.totalorder %v282, %v2328
  %vm2347 = vcmp.eq.s32.totalorder %v282, %v2332
  %vm2348 = vcmp.eq.s32.totalorder %v282, %v2336
  %vm2349 = vcmp.eq.s32.totalorder %v283, %v2328
  %vm2350 = vcmp.eq.s32.totalorder %v283, %v2332
  %vm2351 = vcmp.eq.s32.totalorder %v283, %v2336
  %vm2352 = vcmp.eq.s32.totalorder %v284, %v2328
  %vm2353 = vcmp.eq.s32.totalorder %v284, %v2332
  %vm2354 = vcmp.eq.s32.totalorder %v284, %v2336
  %vm2355 = vcmp.eq.s32.totalorder %v285, %v2328
  %vm2356 = vcmp.eq.s32.totalorder %v285, %v2332
  %vm2357 = vcmp.eq.s32.totalorder %v285, %v2336
  %vm2358 = vcmp.eq.s32.totalorder %v286, %v2328
  %vm2359 = vcmp.eq.s32.totalorder %v286, %v2332
  %vm2360 = vcmp.eq.s32.totalorder %v286, %v2336
  %vm2361 = vcmp.eq.s32.totalorder %v287, %v2328
  %vm2362 = vcmp.eq.s32.totalorder %v287, %v2332
  %vm2363 = vcmp.eq.s32.totalorder %v287, %v2336
  %vm2364 = vcmp.eq.s32.totalorder %v288, %v2328
  %vm2365 = vcmp.eq.s32.totalorder %v288, %v2332
  %vm2366 = vcmp.eq.s32.totalorder %v288, %v2336
  %vm2367 = vcmp.eq.s32.totalorder %v289, %v2328
  %vm2368 = vcmp.eq.s32.totalorder %v289, %v2332
  %vm2369 = vcmp.eq.s32.totalorder %v289, %v2336
  %vm2370 = vcmp.eq.s32.totalorder %v290, %v2328
  %vm2371 = vcmp.eq.s32.totalorder %v290, %v2332
  %vm2372 = vcmp.eq.s32.totalorder %v290, %v2336
  %vm2373 = vcmp.eq.s32.totalorder %v291, %v2328
  %vm2374 = vcmp.eq.s32.totalorder %v291, %v2332
  %vm2375 = vcmp.eq.s32.totalorder %v291, %v2336
  %vm2376 = vcmp.eq.s32.totalorder %v292, %v2328
  %vm2377 = vcmp.eq.s32.totalorder %v292, %v2332
  %vm2378 = vcmp.eq.s32.totalorder %v292, %v2336
  %vm2379 = vcmp.eq.s32.totalorder %v293, %v2328
  %vm2380 = vcmp.eq.s32.totalorder %v293, %v2332
  %vm2381 = vcmp.eq.s32.totalorder %v293, %v2336
  %vm2382 = vcmp.eq.s32.totalorder %v294, %v2328
  %vm2383 = vcmp.eq.s32.totalorder %v294, %v2332
  %vm2384 = vcmp.eq.s32.totalorder %v294, %v2336
  %v2385 = vsel %vm2337, 1.0, 0.0
  %v2386 = vsel %vm2338, 1.0, 0.0
  %v2387 = vsel %vm2339, 1.0, 0.0
  %v2388 = vsel %vm2340, 1.0, 0.0
  %v2389 = vsel %vm2341, 1.0, 0.0
  %v2390 = vsel %vm2342, 1.0, 0.0
  %v2391 = vsel %vm2343, 1.0, 0.0
  %v2392 = vsel %vm2344, 1.0, 0.0
  %v2393 = vsel %vm2345, 1.0, 0.0
  %v2394 = vsel %vm2346, 1.0, 0.0
  %v2395 = vsel %vm2347, 1.0, 0.0
  %v2396 = vsel %vm2348, 1.0, 0.0
  %v2397 = vsel %vm2349, 1.0, 0.0
  %v2398 = vsel %vm2350, 1.0, 0.0
  %v2399 = vsel %vm2351, 1.0, 0.0
  %v2400 = vsel %vm2352, 1.0, 0.0
  %v2401 = vsel %vm2353, 1.0, 0.0
  %v2402 = vsel %vm2354, 1.0, 0.0
  %v2403 = vsel %vm2355, 1.0, 0.0
  %v2404 = vsel %vm2356, 1.0, 0.0
  %v2405 = vsel %vm2357, 1.0, 0.0
  %v2406 = vsel %vm2358, 1.0, 0.0
  %v2407 = vsel %vm2359, 1.0, 0.0
  %v2408 = vsel %vm2360, 1.0, 0.0
  %v2409 = vsel %vm2361, 1.0, 0.0
  %v2410 = vsel %vm2362, 1.0, 0.0
  %v2411 = vsel %vm2363, 1.0, 0.0
  %v2412 = vsel %vm2364, 1.0, 0.0
  %v2413 = vsel %vm2365, 1.0, 0.0
  %v2414 = vsel %vm2366, 1.0, 0.0
  %v2415 = vsel %vm2367, 1.0, 0.0
  %v2416 = vsel %vm2368, 1.0, 0.0
  %v2417 = vsel %vm2369, 1.0, 0.0
  %v2418 = vsel %vm2370, 1.0, 0.0
  %v2419 = vsel %vm2371, 1.0, 0.0
  %v2420 = vsel %vm2372, 1.0, 0.0
  %v2421 = vsel %vm2373, 1.0, 0.0
  %v2422 = vsel %vm2374, 1.0, 0.0
  %v2423 = vsel %vm2375, 1.0, 0.0
  %v2424 = vsel %vm2376, 1.0, 0.0
  %v2425 = vsel %vm2377, 1.0, 0.0
  %v2426 = vsel %vm2378, 1.0, 0.0
  %v2427 = vsel %vm2379, 1.0, 0.0
  %v2428 = vsel %vm2380, 1.0, 0.0
  %v2429 = vsel %vm2381, 1.0, 0.0
  %v2430 = vsel %vm2382, 1.0, 0.0
  %v2431 = vsel %vm2383, 1.0, 0.0
  %v2432 = vsel %vm2384, 1.0, 0.0
  %v2433 = vpack.c.bf16 %v2388, %v2385
  %v2434 = vpack.c.bf16 %v2389, %v2386
  %v2435 = vpack.c.bf16 %v2390, %v2387
  %v2436 = vpack.c.bf16 %v2394, %v2391
  %v2437 = vpack.c.bf16 %v2395, %v2392
  %v2438 = vpack.c.bf16 %v2396, %v2393
  %v2439 = vpack.c.bf16 %v2400, %v2397
  %v2440 = vpack.c.bf16 %v2401, %v2398
  %v2441 = vpack.c.bf16 %v2402, %v2399
  %v2442 = vpack.c.bf16 %v2406, %v2403
  %v2443 = vpack.c.bf16 %v2407, %v2404
  %v2444 = vpack.c.bf16 %v2408, %v2405
  %v2445 = vpack.c.bf16 %v2412, %v2409
  %v2446 = vpack.c.bf16 %v2413, %v2410
  %v2447 = vpack.c.bf16 %v2414, %v2411
  %v2448 = vpack.c.bf16 %v2418, %v2415
  %v2449 = vpack.c.bf16 %v2419, %v2416
  %v2450 = vpack.c.bf16 %v2420, %v2417
  %v2451 = vpack.c.bf16 %v2424, %v2421
  %v2452 = vpack.c.bf16 %v2425, %v2422
  %v2453 = vpack.c.bf16 %v2426, %v2423
  %v2454 = vpack.c.bf16 %v2430, %v2427
  %v2455 = vpack.c.bf16 %v2431, %v2428
  %v2456 = vpack.c.bf16 %v2432, %v2429
  %2457 = vmatprep.subr.bf16.mxu0 %v2434
  %2458 = vmatpush1.bf16.msra.mxu0 %v2433
  %2459 = vmatprep.subr.bf16.mxu0 %v2437
  %2460 = vmatpush1.bf16.msra.mxu0 %v2436
  %2461 = vmatprep.subr.bf16.mxu0 %v2440
  %2462 = vmatpush1.bf16.msra.mxu0 %v2439
  %2463 = vmatprep.subr.bf16.mxu0 %v2443
  %2464 = vmatpush1.bf16.msra.mxu0 %v2442
  %2465 = vmatprep.subr.bf16.mxu0 %v2446
  %2466 = vmatpush1.bf16.msra.mxu0 %v2445
  %2467 = vmatprep.subr.bf16.mxu0 %v2449
  %2468 = vmatpush1.bf16.msra.mxu0 %v2448
  %2469 = vmatprep.subr.bf16.mxu0 %v2452
  %2470 = vmatpush1.bf16.msra.mxu0 %v2451
  %2471 = vmatprep.subr.bf16.mxu0 %v2455
  %2472 = vmatpush1.bf16.msra.mxu0 %v2454
  %2473 = vmatprep.subr.bf16.mxu0 0
  %2474 = vmatpush1.bf16.msra.mxu0 0
  %2475 = vmatprep.subr.bf16.mxu0 0
  %2476 = vmatpush1.bf16.msra.mxu0 0
  %2477 = vmatprep.subr.bf16.mxu0 0
  %2478 = vmatpush1.bf16.msra.mxu0 0
  %2479 = vmatprep.subr.bf16.mxu0 0
  %2480 = vmatpush1.bf16.msra.mxu0 0
  %2481 = vmatprep.subr.bf16.mxu0 0
  %2482 = vmatpush1.bf16.msra.mxu0 0
  %2483 = vmatprep.subr.bf16.mxu0 0
  %2484 = vmatpush1.bf16.msra.mxu0 0
  %2485 = vmatprep.subr.bf16.mxu0 0
  %2486 = vmatpush1.bf16.msra.mxu0 0
  %2487 = vmatprep.subr.bf16.mxu0 0
  %2488 = vmatpush1.bf16.msra.mxu0 0
  %2489 = vmatprep.mubr.bf16.mxu0 0
  %2490 = vmatmul.mubr.bf16.gmra.mrb[0].mxu0 %v2323
  %v2491 = vpop.f32.mrb[0].mxu0
  %v2492 = vadd.f32 0.0, %v2491
  %v2493 = vpop.f32.mrb[0].mxu0
  %v2494 = vadd.f32 0.0, %v2493
  %v2495 = vpop.f32.mrb[0].mxu0
  %v2496 = vpop.f32.mrb[0].mxu0
  %2497 = vdwg.mxu0
  %2498 = vmatprep.subr.bf16.mxu0 0
  %2499 = vmatpush1.bf16.msra.mxu0 %v2435
  %2500 = vmatprep.subr.bf16.mxu0 0
  %2501 = vmatpush1.bf16.msra.mxu0 %v2438
  %2502 = vmatprep.subr.bf16.mxu0 0
  %2503 = vmatpush1.bf16.msra.mxu0 %v2441
  %2504 = vmatprep.subr.bf16.mxu0 0
  %2505 = vmatpush1.bf16.msra.mxu0 %v2444
  %2506 = vmatprep.subr.bf16.mxu0 0
  %2507 = vmatpush1.bf16.msra.mxu0 %v2447
  %2508 = vmatprep.subr.bf16.mxu0 0
  %2509 = vmatpush1.bf16.msra.mxu0 %v2450
  %2510 = vmatprep.subr.bf16.mxu0 0
  %2511 = vmatpush1.bf16.msra.mxu0 %v2453
  %2512 = vmatprep.subr.bf16.mxu0 0
  %2513 = vmatpush1.bf16.msra.mxu0 %v2456
  %2514 = vmatprep.subr.bf16.mxu0 0
  %2515 = vmatpush1.bf16.msra.mxu0 0
  %2516 = vmatprep.subr.bf16.mxu0 0
  %2517 = vmatpush1.bf16.msra.mxu0 0
  %2518 = vmatprep.subr.bf16.mxu0 0
  %2519 = vmatpush1.bf16.msra.mxu0 0
  %2520 = vmatprep.subr.bf16.mxu0 0
  %2521 = vmatpush1.bf16.msra.mxu0 0
  %2522 = vmatprep.subr.bf16.mxu0 0
  %2523 = vmatpush1.bf16.msra.mxu0 0
  %2524 = vmatprep.subr.bf16.mxu0 0
  %2525 = vmatpush1.bf16.msra.mxu0 0
  %2526 = vmatprep.subr.bf16.mxu0 0
  %2527 = vmatpush1.bf16.msra.mxu0 0
  %2528 = vmatprep.subr.bf16.mxu0 0
  %2529 = vmatpush1.bf16.msra.mxu0 0
  %2530 = vmatprep.mubr.bf16.mxu0 0
  %2531 = vmatmul.mubr.bf16.gmra.mrb[0].mxu0 %v2323
  %v2532 = vpop.f32.mrb[0].mxu0
  %v2533 = vadd.f32 0.0, %v2532
  %v2534 = vpop.f32.mrb[0].mxu0
  %v2535 = vpop.f32.mrb[0].mxu0
  %v2536 = vpop.f32.mrb[0].mxu0
  %2537 = vdwg.mxu0
  %vm2538 = vcmask 261120
  %2539 = vst.msk [vmem:[#allocation3] sm:$0xff] %vm2538, %v2492
  %2541 = vrot.lane.b32.xlu0 %v2492, 96
  %v2542 = vpop.permute.xlu0 %2541
  %2544 = vst.msk [vmem:[#allocation3 + $0x8] sm:$0xff] %vm2538, %v2542
  %2545 = vrot.lane.b32.xlu0 %v2492, 64
  %v2546 = vpop.permute.xlu0 %2545
  %2548 = vst.msk [vmem:[#allocation3 + $0x10] sm:$0xff] %vm2538, %v2546
  %2549 = vrot.lane.b32.xlu0 %v2492, 32
  %v2550 = vpop.permute.xlu0 %2549
  %2552 = vst.msk [vmem:[#allocation3 + $0x18] sm:$0xff] %vm2538, %v2550
  %2553 = vst.msk [vmem:[#allocation3 + $0x20] sm:$0xff] %vm2538, %v2494
  %2555 = vrot.lane.b32.xlu0 %v2494, 96
  %v2556 = vpop.permute.xlu0 %2555
  %2558 = vst.msk [vmem:[#allocation3 + $0x28] sm:$0xff] %vm2538, %v2556
  %2559 = vrot.lane.b32.xlu0 %v2494, 64
  %v2560 = vpop.permute.xlu0 %2559
  %2562 = vst.msk [vmem:[#allocation3 + $0x30] sm:$0xff] %vm2538, %v2560
  %2563 = vrot.lane.b32.xlu0 %v2494, 32
  %v2564 = vpop.permute.xlu0 %2563
  %2566 = vst.msk [vmem:[#allocation3 + $0x38] sm:$0xff] %vm2538, %v2564
  %2567 = vst.msk [vmem:[#allocation3 + $0x40] sm:$0xff] %vm2538, %v2533
  %v2568 = vld [vmem:[%s9] sm:$0xf]
  %v2569 = vld [vmem:[%s9 + $0x4] sm:$0xf]
  %v2570 = vld [vmem:[#allocation3] sm:$0xff]
  %v2571 = vld [vmem:[#allocation3 + $0x8] sm:$0xff]
  %v2572 = vld [vmem:[#allocation3 + $0x10] sm:$0xff]
  %v2573 = vld [vmem:[#allocation3 + $0x18] sm:$0xff]
  %v2574 = vld [vmem:[#allocation3 + $0x20] sm:$0xff]
  %v2575 = vld [vmem:[#allocation3 + $0x28] sm:$0xff]
  %v2576 = vld [vmem:[#allocation3 + $0x30] sm:$0xff]
  %v2577 = vld [vmem:[#allocation3 + $0x38] sm:$0xff]
  %v2578 = vld [vmem:[#allocation3 + $0x40] sm:$0xff]
  %v2579 = vpack.c.bf16 %v2571, %v2570
  %v2580 = vpack.c.bf16 %v2573, %v2572
  %v2581 = vpack.c.bf16 %v2575, %v2574
  %v2582 = vpack.c.bf16 %v2577, %v2576
  %v2583 = vpack.c.bf16 %v2578, %v2578
  %v2586 = vunpack.c.l.b16 %v2568
  %v2587 = vunpack.c.l.b16 %v2569
  %v2588 = vpack.c.b16 %v2587, %v2586
  %vm2589 = vcmask 588800
  %v2591 = vsel %vm2589, %v2588, 0
  %v2594 = vsel %vm207, %v2583, 0
  %2596 = vmatprep.subr.bf16.mxu0 0
  %2597 = vmatpush1.bf16.msra.mxu0 %v2579
  %2598 = vmatprep.subr.bf16.mxu0 0
  %2599 = vmatpush1.bf16.msra.mxu0 %v2580
  %2600 = vmatprep.subr.bf16.mxu0 0
  %2601 = vmatpush1.bf16.msra.mxu0 %v2581
  %2602 = vmatprep.subr.bf16.mxu0 0
  %2603 = vmatpush1.bf16.msra.mxu0 %v2582
  %2604 = vmatprep.subr.bf16.mxu0 0
  %2605 = vmatpush1.bf16.msra.mxu0 %v2594
  %2606 = vmatprep.subr.bf16.mxu0 0
  %2607 = vmatpush1.bf16.msra.mxu0 0
  %2608 = vmatprep.subr.bf16.mxu0 0
  %2609 = vmatpush1.bf16.msra.mxu0 0
  %2610 = vmatprep.subr.bf16.mxu0 0
  %2611 = vmatpush1.bf16.msra.mxu0 0
  %2612 = vmatprep.subr.bf16.mxu0 0
  %2613 = vmatpush1.bf16.msra.mxu0 0
  %2614 = vmatprep.subr.bf16.mxu0 0
  %2615 = vmatpush1.bf16.msra.mxu0 0
  %2616 = vmatprep.subr.bf16.mxu0 0
  %2617 = vmatpush1.bf16.msra.mxu0 0
  %2618 = vmatprep.subr.bf16.mxu0 0
  %2619 = vmatpush1.bf16.msra.mxu0 0
  %2620 = vmatprep.subr.bf16.mxu0 0
  %2621 = vmatpush1.bf16.msra.mxu0 0
  %2622 = vmatprep.subr.bf16.mxu0 0
  %2623 = vmatpush1.bf16.msra.mxu0 0
  %2624 = vmatprep.subr.bf16.mxu0 0
  %2625 = vmatpush1.bf16.msra.mxu0 0
  %2626 = vmatprep.subr.bf16.mxu0 0
  %2627 = vmatpush1.bf16.msra.mxu0 0
  %2628 = vmatprep.mubr.bf16.mxu0 0
  %2629 = vmatmul.mubr.bf16.gmra.mrb[0].mxu0 %v2591
  %v2630 = vpop.f32.mrb[0].mxu0
  %v2631 = vadd.f32 0.0, %v2630
  %v2632 = vpop.f32.mrb[0].mxu0
  %v2633 = vpop.f32.mrb[0].mxu0
  %v2634 = vadd.f32 0.0, %v2633
  %v2635 = vpop.f32.mrb[0].mxu0
  %2636 = vdwg.mxu0
  %v2637 = vld [vmem:[%s10] sm:$0xff]
  %v2638 = vld [vmem:[%s10 + $0x8] sm:$0xff]
  %v2639 = vld [vmem:[%s11] sm:$0xff]
  %v2640 = vld [vmem:[%s11 + $0x8] sm:$0xff]
  %v2641 = vsel %vm2538, %v2631, 0.0
  %2642 = vadd.xlane.f32.xlu0 %v2641
  %v2643 = vpop.xlane.xlu0 %2642
  %v2644 = vsel %vm2538, %v2634, 0.0
  %2645 = vadd.xlane.f32.xlu0 %v2644
  %v2646 = vpop.xlane.xlu0 %2645
  %v2647 = vmul.f32 %v2643, 0.03125
  %v2648 = vmul.f32 %v2646, 0.03125
  %v2649 = vmul.f32 %v2631, %v2631
  %v2650 = vmul.f32 %v2634, %v2634
  %v2651 = vsel %vm2538, %v2649, 0.0
  %2652 = vadd.xlane.f32.xlu0 %v2651
  %v2653 = vpop.xlane.xlu0 %2652
  %v2654 = vsel %vm2538, %v2650, 0.0
  %2655 = vadd.xlane.f32.xlu0 %v2654
  %v2656 = vpop.xlane.xlu0 %2655
  %v2657 = vmul.f32 %v2653, 0.03125
  %v2658 = vmul.f32 %v2656, 0.03125
  %v2659 = vmul.f32 %v2647, %v2647
  %v2660 = vmul.f32 %v2648, %v2648
  %v2661 = vsub.f32 %v2657, %v2659
  %v2662 = vsub.f32 %v2658, %v2660
  %v2663 = vmax.f32 %v2661, 0.0
  %v2664 = vmax.f32 %v2662, 0.0
  %v2665 = vadd.f32 %v2663, 1e-05
  %v2666 = vadd.f32 %v2664, 1e-05
  %v2667 = vrsqrt.pop %v2665
  %v2668 = vrsqrt.pop %v2666
  %v2669 = vsub.f32 %v2631, %v2647
  %v2670 = vsub.f32 %v2634, %v2648
  %v2671 = vmul.f32 %v2637, %v2667
  %v2672 = vmul.f32 %v2638, %v2668
  %2674 = vset.pattern.permute.xlu0 0
  %2675 = vperm.xlu0 %2674, %v2671
  %v2676 = vpop.permute.xlu0 %2675
  %2679 = vset.pattern.permute.xlu0 0
  %2680 = vperm.xlu0 %2679, %v2672
  %v2681 = vpop.permute.xlu0 %2680
  %v2683 = vmul.f32 %v2669, %v2676
  %v2684 = vmul.f32 %v2670, %v2681
  %2686 = vset.pattern.permute.xlu0 0
  %2687 = vperm.xlu0 %2686, %v2639
  %v2688 = vpop.permute.xlu0 %2687
  %2691 = vset.pattern.permute.xlu0 0
  %2692 = vperm.xlu0 %2691, %v2640
  %v2693 = vpop.permute.xlu0 %2692
  %v2695 = vadd.f32 %v2683, %v2688
  %v2696 = vadd.f32 %v2684, %v2693
  %v2697 = vmax.f32 %v2695, 0.0
  %v2698 = vmax.f32 %v2696, 0.0
  %2699 = vst.msk [vmem:[%s14] sm:$0xff] %vm2538, %v2697
  %2700 = vst.msk [vmem:[%s14 + $0x8] sm:$0xff] %vm2538, %v2698
  // Predicated region
  $region50: #{msdn_first_layer_forward.1} parent=0 // pred_check
    _
  $region51: #{msdn_first_layer_forward.1} parent=0 // pred_check_branch
    %2702 = sbr.rel (0) target = $region53
  $region52: #{msdn_first_layer_forward.1} parent=0 // pred_region
    _
  $region53: #{msdn_first_layer_forward.1} parent=0 // pred_fallthru
    _
  // Predicated region
  $region54: #{msdn_first_layer_forward.1} parent=0 // pred_check
    _
  $region55: #{msdn_first_layer_forward.1} parent=0 // pred_check_branch
    %2704 = sbr.rel (0) target = $region57
  $region56: #{msdn_first_layer_forward.1} parent=0 // pred_region
    _
  $region57: #{msdn_first_layer_forward.1} parent=0 // pred_fallthru
    _
  // Predicated region
  $region58: #{msdn_first_layer_forward.1} parent=0 // pred_check
    _
  $region59: #{msdn_first_layer_forward.1} parent=0 // pred_check_branch
    %2706 = sbr.rel (0) target = $region61
  $region60: #{msdn_first_layer_forward.1} parent=0 // pred_region
    _
  $region61: #{msdn_first_layer_forward.1} parent=0 // pred_fallthru
    _
  // Predicated region
  $region62: #{msdn_first_layer_forward.1} parent=0 // pred_check
    _
  $region63: #{msdn_first_layer_forward.1} parent=0 // pred_check_branch
    %2708 = sbr.rel (0) target = $region65
  $region64: #{msdn_first_layer_forward.1} parent=0 // pred_region
    _
  $region65: #{msdn_first_layer_forward.1} parent=0 // pred_fallthru
    _
  // Predicated region
  $region66: #{msdn_first_layer_forward.1} parent=0 // pred_check
    _
  $region67: #{msdn_first_layer_forward.1} parent=0 // pred_check_branch
    %2710 = sbr.rel (0) target = $region69
  $region68: #{msdn_first_layer_forward.1} parent=0 // pred_region
    _
  $region69: #{msdn_first_layer_forward.1} parent=0 // pred_fallthru
    _
  // Predicated region
  $region70: #{msdn_first_layer_forward.1} parent=0 // pred_check
    _
  $region71: #{msdn_first_layer_forward.1} parent=0 // pred_check_branch
    %2712 = sbr.rel (0) target = $region73
  $region72: #{msdn_first_layer_forward.1} parent=0 // pred_region
    _
  $region73: #{msdn_first_layer_forward.1} parent=0 // pred_fallthru
    _

</llo_original>
